<compile_context>
chip_gen: v7x
topology: tpu7x:2x2x1
jax: 0.10.0
libtpu: 0.0.40
codegen_flags: <defaults>
</compile_context>

<pallas_src>
import functools
import math

import jax
import jax.numpy as jnp
from jax import lax
from jax.experimental import pallas as pl
from jax.experimental.pallas import tpu as pltpu


def _adaptive_windows(in_size, out_size):
    """Same [start, end) windows as nn.AdaptiveMaxPool2d."""
    return [((j * in_size) // out_size, -((-(j + 1) * in_size) // out_size))
            for j in range(out_size)]


def _textcnn_kernel(x_ref, w1_ref, b1_ref, w2_ref, b2_ref, o_ref, *,
                    C, k1, k2, pool, OH1, OW1, H1p, W1p, OH2, OW2, dim):
    # x_ref : (1, C, H, W)  VMEM   one batch sample
    # w1_ref: (C, C*k1*k1)  SMEM   BN-folded conv1 weight (scalar reads)
    # b1_ref: (C,)          SMEM   BN-folded conv1 bias
    # w2_ref: (C, C*k2*k2)  SMEM   BN-folded conv2 weight
    # b2_ref: (C,)          SMEM   BN-folded conv2 bias
    # o_ref : (1, 1, dim)   VMEM   output row for this sample

    # ---- net1: conv(k1) + folded BN (bias in acc init) --------------------
    # Inverted loop order: one shifted slice live at a time, C accumulators.
    acc1 = [jnp.full((OH1, OW1), b1_ref[co], jnp.float32) for co in range(C)]
    for ci in range(C):
        for di in range(k1):
            for dj in range(k1):
                sl = x_ref[0, ci, di:di + OH1, dj:dj + OW1]       # (OH1, OW1)
                base = (ci * k1 + di) * k1 + dj
                for co in range(C):
                    acc1[co] = acc1[co] + w1_ref[co, base] * sl

    # ---- ReLU + MaxPool2d(pool): entirely in vregs (pairwise maxima) ------
    pooled = []                                                   # C x (H1p, W1p)
    for co in range(C):
        h = jnp.maximum(acc1[co], 0.0)                            # (OH1, OW1)
        rows = []
        for i in range(H1p):                                      # pool H (sublanes)
            r = h[i * pool:i * pool + 1, :]
            for q in range(1, pool):
                r = jnp.maximum(r, h[i * pool + q:i * pool + q + 1, :])
            rows.append(r)
        hp = jnp.concatenate(rows, axis=0)                        # (H1p, OW1)
        cols = []
        for j in range(W1p):                                      # pool W (lanes)
            c = hp[:, j * pool:j * pool + 1]
            for q in range(1, pool):
                c = jnp.maximum(c, hp[:, j * pool + q:j * pool + q + 1])
            cols.append(c)
        pooled.append(jnp.concatenate(cols, axis=1))              # (H1p, W1p)

    # ---- net2: conv(k2) + folded BN (bias in acc init) ---------------------
    acc2 = [jnp.full((OH2, OW2), b2_ref[co], jnp.float32) for co in range(C)]
    for ci in range(C):
        for di in range(k2):
            for dj in range(k2):
                sl = pooled[ci][di:di + OH2, dj:dj + OW2]         # (OH2, OW2)
                base = (ci * k2 + di) * k2 + dj
                for co in range(C):
                    acc2[co] = acc2[co] + w2_ref[co, base] * sl

    # ReLU, AdaptiveMaxPool2d H -> 1 (pairwise row maxima) and channel max
    # (self.pool); both maxes commute with the adaptive-W windows below.
    best = None
    for co in range(C):
        h = jnp.maximum(acc2[co], 0.0)                            # (OH2, OW2)
        hm = h[0:1, :]
        for i in range(1, OH2):
            hm = jnp.maximum(hm, h[i:i + 1, :])                   # (1, OW2)
        best = hm if best is None else jnp.maximum(best, hm)

    # AdaptiveMaxPool2d W -> dim: assemble in registers, write ONE store.
    outs = []
    for (s, e) in _adaptive_windows(OW2, dim):
        v = best[:, s:s + 1]
        for c in range(s + 1, e):
            v = jnp.maximum(v, best[:, c:c + 1])
        outs.append(v)
    o_ref[...] = jnp.concatenate(outs, axis=1).reshape(1, 1, dim)


def textcnn_forward(x, params, *, kernel_size, pool_size, dim, bn_eps=1e-5):
    (w1, b1, g1, bt1, m1, v1, w2, b2, g2, bt2, m2, v2) = params
    x = x.astype(jnp.float32)
    B, C, H, W = x.shape
    k1, k2 = kernel_size
    p = pool_size

    # Fold BatchNorm (inference, running stats) into the conv weights/biases.
    s1 = g1 / jnp.sqrt(v1 + bn_eps)
    s2 = g2 / jnp.sqrt(v2 + bn_eps)
    w1f = (w1 * s1[:, None, None, None]).reshape(C, C * k1 * k1).astype(jnp.float32)
    b1f = ((b1 - m1) * s1 + bt1).astype(jnp.float32)              # (C,)
    w2f = (w2 * s2[:, None, None, None]).reshape(C, C * k2 * k2).astype(jnp.float32)
    b2f = ((b2 - m2) * s2 + bt2).astype(jnp.float32)              # (C,)

    OH1, OW1 = H - k1 + 1, W - k1 + 1
    H1p, W1p = OH1 // p, OW1 // p
    OH2, OW2 = H1p - k2 + 1, W1p - k2 + 1
    assert min(OH1, OW1, H1p, W1p, OH2, OW2) >= 1, "input too small"

    kernel = functools.partial(
        _textcnn_kernel, C=C, k1=k1, k2=k2, pool=p,
        OH1=OH1, OW1=OW1, H1p=H1p, W1p=W1p, OH2=OH2, OW2=OW2, dim=dim)

    out = pl.pallas_call(
        kernel,
        out_shape=jax.ShapeDtypeStruct((B, 1, dim), jnp.float32),
        grid_spec=pltpu.PrefetchScalarGridSpec(
            num_scalar_prefetch=0,
            grid=(B,),
            in_specs=[
                # one sample per grid step (block last dims == full dims)
                pl.BlockSpec((1, C, H, W), lambda b: (b, 0, 0, 0)),
                # SMEM-resident folded weights / biases, read as scalars
                pl.BlockSpec(memory_space=pltpu.MemorySpace.SMEM),
                pl.BlockSpec(memory_space=pltpu.MemorySpace.SMEM),
                pl.BlockSpec(memory_space=pltpu.MemorySpace.SMEM),
                pl.BlockSpec(memory_space=pltpu.MemorySpace.SMEM),
            ],
            out_specs=pl.BlockSpec((1, 1, dim), lambda b: (b, 0, 0)),
        ),
        compiler_params=pltpu.CompilerParams(
            # grid = B (>= 2) so the two v7x TensorCores both get work;
            # on v5e/v6e "parallel" vs "arbitrary" is a measured no-op.
            dimension_semantics=("parallel",),
        ),
    )(x, w1f, b1f, w2f, b2f)
    return out.reshape(B, dim)


def _reference(x, params, kernel_size, pool_size, dim, bn_eps=1e-5):
    """Pure-JAX reference with the same op order as the PyTorch module."""
    (w1, b1, g1, bt1, m1, v1, w2, b2, g2, bt2, m2, v2) = params

    def conv_bn_relu(y, w, b, g, bt, m, v):
        y = lax.conv_general_dilated(
            y, w, window_strides=(1, 1), padding="VALID",
            dimension_numbers=("NCHW", "OIHW", "NCHW"),
            precision=lax.Precision.HIGHEST)
        y = y + b[None, :, None, None]
        y = (y - m[None, :, None, None]) \
            * (g / jnp.sqrt(v + bn_eps))[None, :, None, None] \
            + bt[None, :, None, None]
        return jnp.maximum(y, 0.0)

    y = conv_bn_relu(x, w1, b1, g1, bt1, m1, v1)
    p = pool_size
    y = lax.reduce_window(y, -jnp.inf, lax.max,
                          (1, 1, p, p), (1, 1, p, p), "VALID")
    y = conv_bn_relu(y, w2, b2, g2, bt2, m2, v2)

    y = jnp.max(y, axis=2, keepdims=True)            # AdaptiveMaxPool2d H -> 1
    W2 = y.shape[-1]
    cols = []
    for s, e in _adaptive_windows(W2, dim):          # AdaptiveMaxPool2d W -> dim
        cols.append(jnp.max(y[..., s:e], axis=-1, keepdims=True))
    y = jnp.concatenate(cols, axis=-1)               # (B, C, 1, dim)
    y = jnp.squeeze(y, axis=2)                       # (B, C, dim)
    # self.pool (method='max') on a 3-D tensor == max over the channel axis;
    # the W axis is already `dim`, so the adaptive part is the identity.
    return jnp.max(y, axis=1)                        # (B, dim)


if __name__ == "__main__":
    B, C, H, W = 2, 4, 16, 16
    kernel_size = (3, 3)
    pool_size = 2
    dim = 4

    key = jax.random.PRNGKey(0)
    ks = jax.random.split(key, 13)

    def conv_init(kw, kb, k):
        bound = 1.0 / math.sqrt(C * k * k)
        w = jax.random.uniform(kw, (C, C, k, k), jnp.float32, -bound, bound)
        b = jax.random.uniform(kb, (C,), jnp.float32, -bound, bound)
        return w, b

    w1, b1 = conv_init(ks[0], ks[1], kernel_size[0])
    w2, b2 = conv_init(ks[2], ks[3], kernel_size[1])
    g1 = jax.random.uniform(ks[4], (C,), jnp.float32, 0.5, 1.5)
    bt1 = jax.random.uniform(ks[5], (C,), jnp.float32, -0.5, 0.5)
    m1 = jax.random.uniform(ks[6], (C,), jnp.float32, -0.5, 0.5)
    v1 = jax.random.uniform(ks[7], (C,), jnp.float32, 0.5, 1.5)
    g2 = jax.random.uniform(ks[8], (C,), jnp.float32, 0.5, 1.5)
    bt2 = jax.random.uniform(ks[9], (C,), jnp.float32, -0.5, 0.5)
    m2 = jax.random.uniform(ks[10], (C,), jnp.float32, -0.5, 0.5)
    v2 = jax.random.uniform(ks[11], (C,), jnp.float32, 0.5, 1.5)
    x = jax.random.normal(ks[12], (B, C, H, W), jnp.float32)

    params = (w1, b1, g1, bt1, m1, v1, w2, b2, g2, bt2, m2, v2)

    out = textcnn_forward(x, params, kernel_size=kernel_size,
                          pool_size=pool_size, dim=dim)
    out = jax.block_until_ready(out)

    ref = _reference(x, params, kernel_size, pool_size, dim)
    assert out.shape == (B, dim), out.shape
    assert jnp.allclose(out, ref, atol=1e-4, rtol=1e-4), (out, ref)

    print("KERNEL_OK")
</pallas_src>

<mosaic_0001>
module attributes {stable_mosaic.version = 11 : i64} {
  func.func @_textcnn_kernel(%arg0: i32, %arg1: memref<1x4x16x16xf32, #tpu.memory_space<vmem>>, %arg2: memref<4x36xf32, #tpu.memory_space<smem>>, %arg3: memref<4xf32, #tpu.memory_space<smem>>, %arg4: memref<4x36xf32, #tpu.memory_space<smem>>, %arg5: memref<4xf32, #tpu.memory_space<smem>>, %arg6: memref<1x1x4xf32, #tpu.memory_space<vmem>>) attributes {dimension_semantics = [#tpu.dimension_semantics<parallel>], iteration_bounds = array<i64: 2>, scalar_prefetch = 0 : i64, scratch_operands = 0 : i64, tpu.core_type = #tpu.core_type<tc>, window_params = [{transform_indices = @transform_0, window_bounds = array<i64: 1, 4, 16, 16>}, {transform_indices = @transform_1, window_bounds = array<i64: 4, 36>}, {transform_indices = @transform_2, window_bounds = array<i64: 4>}, {transform_indices = @transform_3, window_bounds = array<i64: 4, 36>}, {transform_indices = @transform_4, window_bounds = array<i64: 4>}, {transform_indices = @transform_5, window_bounds = array<i64: 1, 1, 4>}]} {
    %c0 = arith.constant 0 : index
    %0 = memref.load %arg3[%c0] : memref<4xf32, #tpu.memory_space<smem>>
    %1 = vector.broadcast %0 : f32 to vector<14x14xf32>
    %c1 = arith.constant 1 : index
    %2 = memref.load %arg3[%c1] : memref<4xf32, #tpu.memory_space<smem>>
    %3 = vector.broadcast %2 : f32 to vector<14x14xf32>
    %c2 = arith.constant 2 : index
    %4 = memref.load %arg3[%c2] : memref<4xf32, #tpu.memory_space<smem>>
    %5 = vector.broadcast %4 : f32 to vector<14x14xf32>
    %c3 = arith.constant 3 : index
    %6 = memref.load %arg3[%c3] : memref<4xf32, #tpu.memory_space<smem>>
    %7 = vector.broadcast %6 : f32 to vector<14x14xf32>
    %c0_0 = arith.constant 0 : index
    %c0_1 = arith.constant 0 : index
    %c0_2 = arith.constant 0 : index
    %c0_3 = arith.constant 0 : index
    %8 = vector.load %arg1[%c0_0, %c0_1, %c0_2, %c0_3] : memref<1x4x16x16xf32, #tpu.memory_space<vmem>>, vector<1x1x14x14xf32>
    %9 = vector.shape_cast %8 : vector<1x1x14x14xf32> to vector<14x14xf32>
    %c0_4 = arith.constant 0 : index
    %c0_5 = arith.constant 0 : index
    %10 = memref.load %arg2[%c0_4, %c0_5] : memref<4x36xf32, #tpu.memory_space<smem>>
    %11 = vector.broadcast %10 : f32 to vector<14x14xf32>
    %12 = arith.mulf %11, %9 : vector<14x14xf32>
    %13 = arith.addf %1, %12 : vector<14x14xf32>
    %c1_6 = arith.constant 1 : index
    %c0_7 = arith.constant 0 : index
    %14 = memref.load %arg2[%c1_6, %c0_7] : memref<4x36xf32, #tpu.memory_space<smem>>
    %15 = vector.broadcast %14 : f32 to vector<14x14xf32>
    %16 = arith.mulf %15, %9 : vector<14x14xf32>
    %17 = arith.addf %3, %16 : vector<14x14xf32>
    %c2_8 = arith.constant 2 : index
    %c0_9 = arith.constant 0 : index
    %18 = memref.load %arg2[%c2_8, %c0_9] : memref<4x36xf32, #tpu.memory_space<smem>>
    %19 = vector.broadcast %18 : f32 to vector<14x14xf32>
    %20 = arith.mulf %19, %9 : vector<14x14xf32>
    %21 = arith.addf %5, %20 : vector<14x14xf32>
    %c3_10 = arith.constant 3 : index
    %c0_11 = arith.constant 0 : index
    %22 = memref.load %arg2[%c3_10, %c0_11] : memref<4x36xf32, #tpu.memory_space<smem>>
    %23 = vector.broadcast %22 : f32 to vector<14x14xf32>
    %24 = arith.mulf %23, %9 : vector<14x14xf32>
    %25 = arith.addf %7, %24 : vector<14x14xf32>
    %c0_12 = arith.constant 0 : index
    %c0_13 = arith.constant 0 : index
    %c0_14 = arith.constant 0 : index
    %c1_15 = arith.constant 1 : index
    %26 = vector.load %arg1[%c0_12, %c0_13, %c0_14, %c1_15] : memref<1x4x16x16xf32, #tpu.memory_space<vmem>>, vector<1x1x14x14xf32>
    %27 = vector.shape_cast %26 : vector<1x1x14x14xf32> to vector<14x14xf32>
    %c0_16 = arith.constant 0 : index
    %c1_17 = arith.constant 1 : index
    %28 = memref.load %arg2[%c0_16, %c1_17] : memref<4x36xf32, #tpu.memory_space<smem>>
    %29 = vector.broadcast %28 : f32 to vector<14x14xf32>
    %30 = arith.mulf %29, %27 : vector<14x14xf32>
    %31 = arith.addf %13, %30 : vector<14x14xf32>
    %c1_18 = arith.constant 1 : index
    %c1_19 = arith.constant 1 : index
    %32 = memref.load %arg2[%c1_18, %c1_19] : memref<4x36xf32, #tpu.memory_space<smem>>
    %33 = vector.broadcast %32 : f32 to vector<14x14xf32>
    %34 = arith.mulf %33, %27 : vector<14x14xf32>
    %35 = arith.addf %17, %34 : vector<14x14xf32>
    %c2_20 = arith.constant 2 : index
    %c1_21 = arith.constant 1 : index
    %36 = memref.load %arg2[%c2_20, %c1_21] : memref<4x36xf32, #tpu.memory_space<smem>>
    %37 = vector.broadcast %36 : f32 to vector<14x14xf32>
    %38 = arith.mulf %37, %27 : vector<14x14xf32>
    %39 = arith.addf %21, %38 : vector<14x14xf32>
    %c3_22 = arith.constant 3 : index
    %c1_23 = arith.constant 1 : index
    %40 = memref.load %arg2[%c3_22, %c1_23] : memref<4x36xf32, #tpu.memory_space<smem>>
    %41 = vector.broadcast %40 : f32 to vector<14x14xf32>
    %42 = arith.mulf %41, %27 : vector<14x14xf32>
    %43 = arith.addf %25, %42 : vector<14x14xf32>
    %c0_24 = arith.constant 0 : index
    %c0_25 = arith.constant 0 : index
    %c0_26 = arith.constant 0 : index
    %c2_27 = arith.constant 2 : index
    %44 = vector.load %arg1[%c0_24, %c0_25, %c0_26, %c2_27] : memref<1x4x16x16xf32, #tpu.memory_space<vmem>>, vector<1x1x14x14xf32>
    %45 = vector.shape_cast %44 : vector<1x1x14x14xf32> to vector<14x14xf32>
    %c0_28 = arith.constant 0 : index
    %c2_29 = arith.constant 2 : index
    %46 = memref.load %arg2[%c0_28, %c2_29] : memref<4x36xf32, #tpu.memory_space<smem>>
    %47 = vector.broadcast %46 : f32 to vector<14x14xf32>
    %48 = arith.mulf %47, %45 : vector<14x14xf32>
    %49 = arith.addf %31, %48 : vector<14x14xf32>
    %c1_30 = arith.constant 1 : index
    %c2_31 = arith.constant 2 : index
    %50 = memref.load %arg2[%c1_30, %c2_31] : memref<4x36xf32, #tpu.memory_space<smem>>
    %51 = vector.broadcast %50 : f32 to vector<14x14xf32>
    %52 = arith.mulf %51, %45 : vector<14x14xf32>
    %53 = arith.addf %35, %52 : vector<14x14xf32>
    %c2_32 = arith.constant 2 : index
    %c2_33 = arith.constant 2 : index
    %54 = memref.load %arg2[%c2_32, %c2_33] : memref<4x36xf32, #tpu.memory_space<smem>>
    %55 = vector.broadcast %54 : f32 to vector<14x14xf32>
    %56 = arith.mulf %55, %45 : vector<14x14xf32>
    %57 = arith.addf %39, %56 : vector<14x14xf32>
    %c3_34 = arith.constant 3 : index
    %c2_35 = arith.constant 2 : index
    %58 = memref.load %arg2[%c3_34, %c2_35] : memref<4x36xf32, #tpu.memory_space<smem>>
    %59 = vector.broadcast %58 : f32 to vector<14x14xf32>
    %60 = arith.mulf %59, %45 : vector<14x14xf32>
    %61 = arith.addf %43, %60 : vector<14x14xf32>
    %c0_36 = arith.constant 0 : index
    %c0_37 = arith.constant 0 : index
    %c1_38 = arith.constant 1 : index
    %c0_39 = arith.constant 0 : index
    %62 = vector.load %arg1[%c0_36, %c0_37, %c1_38, %c0_39] : memref<1x4x16x16xf32, #tpu.memory_space<vmem>>, vector<1x1x14x14xf32>
    %63 = vector.shape_cast %62 : vector<1x1x14x14xf32> to vector<14x14xf32>
    %c0_40 = arith.constant 0 : index
    %c3_41 = arith.constant 3 : index
    %64 = memref.load %arg2[%c0_40, %c3_41] : memref<4x36xf32, #tpu.memory_space<smem>>
    %65 = vector.broadcast %64 : f32 to vector<14x14xf32>
    %66 = arith.mulf %65, %63 : vector<14x14xf32>
    %67 = arith.addf %49, %66 : vector<14x14xf32>
    %c1_42 = arith.constant 1 : index
    %c3_43 = arith.constant 3 : index
    %68 = memref.load %arg2[%c1_42, %c3_43] : memref<4x36xf32, #tpu.memory_space<smem>>
    %69 = vector.broadcast %68 : f32 to vector<14x14xf32>
    %70 = arith.mulf %69, %63 : vector<14x14xf32>
    %71 = arith.addf %53, %70 : vector<14x14xf32>
    %c2_44 = arith.constant 2 : index
    %c3_45 = arith.constant 3 : index
    %72 = memref.load %arg2[%c2_44, %c3_45] : memref<4x36xf32, #tpu.memory_space<smem>>
    %73 = vector.broadcast %72 : f32 to vector<14x14xf32>
    %74 = arith.mulf %73, %63 : vector<14x14xf32>
    %75 = arith.addf %57, %74 : vector<14x14xf32>
    %c3_46 = arith.constant 3 : index
    %c3_47 = arith.constant 3 : index
    %76 = memref.load %arg2[%c3_46, %c3_47] : memref<4x36xf32, #tpu.memory_space<smem>>
    %77 = vector.broadcast %76 : f32 to vector<14x14xf32>
    %78 = arith.mulf %77, %63 : vector<14x14xf32>
    %79 = arith.addf %61, %78 : vector<14x14xf32>
    %c0_48 = arith.constant 0 : index
    %c0_49 = arith.constant 0 : index
    %c1_50 = arith.constant 1 : index
    %c1_51 = arith.constant 1 : index
    %80 = vector.load %arg1[%c0_48, %c0_49, %c1_50, %c1_51] : memref<1x4x16x16xf32, #tpu.memory_space<vmem>>, vector<1x1x14x14xf32>
    %81 = vector.shape_cast %80 : vector<1x1x14x14xf32> to vector<14x14xf32>
    %c0_52 = arith.constant 0 : index
    %c4 = arith.constant 4 : index
    %82 = memref.load %arg2[%c0_52, %c4] : memref<4x36xf32, #tpu.memory_space<smem>>
    %83 = vector.broadcast %82 : f32 to vector<14x14xf32>
    %84 = arith.mulf %83, %81 : vector<14x14xf32>
    %85 = arith.addf %67, %84 : vector<14x14xf32>
    %c1_53 = arith.constant 1 : index
    %c4_54 = arith.constant 4 : index
    %86 = memref.load %arg2[%c1_53, %c4_54] : memref<4x36xf32, #tpu.memory_space<smem>>
    %87 = vector.broadcast %86 : f32 to vector<14x14xf32>
    %88 = arith.mulf %87, %81 : vector<14x14xf32>
    %89 = arith.addf %71, %88 : vector<14x14xf32>
    %c2_55 = arith.constant 2 : index
    %c4_56 = arith.constant 4 : index
    %90 = memref.load %arg2[%c2_55, %c4_56] : memref<4x36xf32, #tpu.memory_space<smem>>
    %91 = vector.broadcast %90 : f32 to vector<14x14xf32>
    %92 = arith.mulf %91, %81 : vector<14x14xf32>
    %93 = arith.addf %75, %92 : vector<14x14xf32>
    %c3_57 = arith.constant 3 : index
    %c4_58 = arith.constant 4 : index
    %94 = memref.load %arg2[%c3_57, %c4_58] : memref<4x36xf32, #tpu.memory_space<smem>>
    %95 = vector.broadcast %94 : f32 to vector<14x14xf32>
    %96 = arith.mulf %95, %81 : vector<14x14xf32>
    %97 = arith.addf %79, %96 : vector<14x14xf32>
    %c0_59 = arith.constant 0 : index
    %c0_60 = arith.constant 0 : index
    %c1_61 = arith.constant 1 : index
    %c2_62 = arith.constant 2 : index
    %98 = vector.load %arg1[%c0_59, %c0_60, %c1_61, %c2_62] : memref<1x4x16x16xf32, #tpu.memory_space<vmem>>, vector<1x1x14x14xf32>
    %99 = vector.shape_cast %98 : vector<1x1x14x14xf32> to vector<14x14xf32>
    %c0_63 = arith.constant 0 : index
    %c5 = arith.constant 5 : index
    %100 = memref.load %arg2[%c0_63, %c5] : memref<4x36xf32, #tpu.memory_space<smem>>
    %101 = vector.broadcast %100 : f32 to vector<14x14xf32>
    %102 = arith.mulf %101, %99 : vector<14x14xf32>
    %103 = arith.addf %85, %102 : vector<14x14xf32>
    %c1_64 = arith.constant 1 : index
    %c5_65 = arith.constant 5 : index
    %104 = memref.load %arg2[%c1_64, %c5_65] : memref<4x36xf32, #tpu.memory_space<smem>>
    %105 = vector.broadcast %104 : f32 to vector<14x14xf32>
    %106 = arith.mulf %105, %99 : vector<14x14xf32>
    %107 = arith.addf %89, %106 : vector<14x14xf32>
    %c2_66 = arith.constant 2 : index
    %c5_67 = arith.constant 5 : index
    %108 = memref.load %arg2[%c2_66, %c5_67] : memref<4x36xf32, #tpu.memory_space<smem>>
    %109 = vector.broadcast %108 : f32 to vector<14x14xf32>
    %110 = arith.mulf %109, %99 : vector<14x14xf32>
    %111 = arith.addf %93, %110 : vector<14x14xf32>
    %c3_68 = arith.constant 3 : index
    %c5_69 = arith.constant 5 : index
    %112 = memref.load %arg2[%c3_68, %c5_69] : memref<4x36xf32, #tpu.memory_space<smem>>
    %113 = vector.broadcast %112 : f32 to vector<14x14xf32>
    %114 = arith.mulf %113, %99 : vector<14x14xf32>
    %115 = arith.addf %97, %114 : vector<14x14xf32>
    %c0_70 = arith.constant 0 : index
    %c0_71 = arith.constant 0 : index
    %c2_72 = arith.constant 2 : index
    %c0_73 = arith.constant 0 : index
    %116 = vector.load %arg1[%c0_70, %c0_71, %c2_72, %c0_73] : memref<1x4x16x16xf32, #tpu.memory_space<vmem>>, vector<1x1x14x14xf32>
    %117 = vector.shape_cast %116 : vector<1x1x14x14xf32> to vector<14x14xf32>
    %c0_74 = arith.constant 0 : index
    %c6 = arith.constant 6 : index
    %118 = memref.load %arg2[%c0_74, %c6] : memref<4x36xf32, #tpu.memory_space<smem>>
    %119 = vector.broadcast %118 : f32 to vector<14x14xf32>
    %120 = arith.mulf %119, %117 : vector<14x14xf32>
    %121 = arith.addf %103, %120 : vector<14x14xf32>
    %c1_75 = arith.constant 1 : index
    %c6_76 = arith.constant 6 : index
    %122 = memref.load %arg2[%c1_75, %c6_76] : memref<4x36xf32, #tpu.memory_space<smem>>
    %123 = vector.broadcast %122 : f32 to vector<14x14xf32>
    %124 = arith.mulf %123, %117 : vector<14x14xf32>
    %125 = arith.addf %107, %124 : vector<14x14xf32>
    %c2_77 = arith.constant 2 : index
    %c6_78 = arith.constant 6 : index
    %126 = memref.load %arg2[%c2_77, %c6_78] : memref<4x36xf32, #tpu.memory_space<smem>>
    %127 = vector.broadcast %126 : f32 to vector<14x14xf32>
    %128 = arith.mulf %127, %117 : vector<14x14xf32>
    %129 = arith.addf %111, %128 : vector<14x14xf32>
    %c3_79 = arith.constant 3 : index
    %c6_80 = arith.constant 6 : index
    %130 = memref.load %arg2[%c3_79, %c6_80] : memref<4x36xf32, #tpu.memory_space<smem>>
    %131 = vector.broadcast %130 : f32 to vector<14x14xf32>
    %132 = arith.mulf %131, %117 : vector<14x14xf32>
    %133 = arith.addf %115, %132 : vector<14x14xf32>
    %c0_81 = arith.constant 0 : index
    %c0_82 = arith.constant 0 : index
    %c2_83 = arith.constant 2 : index
    %c1_84 = arith.constant 1 : index
    %134 = vector.load %arg1[%c0_81, %c0_82, %c2_83, %c1_84] : memref<1x4x16x16xf32, #tpu.memory_space<vmem>>, vector<1x1x14x14xf32>
    %135 = vector.shape_cast %134 : vector<1x1x14x14xf32> to vector<14x14xf32>
    %c0_85 = arith.constant 0 : index
    %c7 = arith.constant 7 : index
    %136 = memref.load %arg2[%c0_85, %c7] : memref<4x36xf32, #tpu.memory_space<smem>>
    %137 = vector.broadcast %136 : f32 to vector<14x14xf32>
    %138 = arith.mulf %137, %135 : vector<14x14xf32>
    %139 = arith.addf %121, %138 : vector<14x14xf32>
    %c1_86 = arith.constant 1 : index
    %c7_87 = arith.constant 7 : index
    %140 = memref.load %arg2[%c1_86, %c7_87] : memref<4x36xf32, #tpu.memory_space<smem>>
    %141 = vector.broadcast %140 : f32 to vector<14x14xf32>
    %142 = arith.mulf %141, %135 : vector<14x14xf32>
    %143 = arith.addf %125, %142 : vector<14x14xf32>
    %c2_88 = arith.constant 2 : index
    %c7_89 = arith.constant 7 : index
    %144 = memref.load %arg2[%c2_88, %c7_89] : memref<4x36xf32, #tpu.memory_space<smem>>
    %145 = vector.broadcast %144 : f32 to vector<14x14xf32>
    %146 = arith.mulf %145, %135 : vector<14x14xf32>
    %147 = arith.addf %129, %146 : vector<14x14xf32>
    %c3_90 = arith.constant 3 : index
    %c7_91 = arith.constant 7 : index
    %148 = memref.load %arg2[%c3_90, %c7_91] : memref<4x36xf32, #tpu.memory_space<smem>>
    %149 = vector.broadcast %148 : f32 to vector<14x14xf32>
    %150 = arith.mulf %149, %135 : vector<14x14xf32>
    %151 = arith.addf %133, %150 : vector<14x14xf32>
    %c0_92 = arith.constant 0 : index
    %c0_93 = arith.constant 0 : index
    %c2_94 = arith.constant 2 : index
    %c2_95 = arith.constant 2 : index
    %152 = vector.load %arg1[%c0_92, %c0_93, %c2_94, %c2_95] : memref<1x4x16x16xf32, #tpu.memory_space<vmem>>, vector<1x1x14x14xf32>
    %153 = vector.shape_cast %152 : vector<1x1x14x14xf32> to vector<14x14xf32>
    %c0_96 = arith.constant 0 : index
    %c8 = arith.constant 8 : index
    %154 = memref.load %arg2[%c0_96, %c8] : memref<4x36xf32, #tpu.memory_space<smem>>
    %155 = vector.broadcast %154 : f32 to vector<14x14xf32>
    %156 = arith.mulf %155, %153 : vector<14x14xf32>
    %157 = arith.addf %139, %156 : vector<14x14xf32>
    %c1_97 = arith.constant 1 : index
    %c8_98 = arith.constant 8 : index
    %158 = memref.load %arg2[%c1_97, %c8_98] : memref<4x36xf32, #tpu.memory_space<smem>>
    %159 = vector.broadcast %158 : f32 to vector<14x14xf32>
    %160 = arith.mulf %159, %153 : vector<14x14xf32>
    %161 = arith.addf %143, %160 : vector<14x14xf32>
    %c2_99 = arith.constant 2 : index
    %c8_100 = arith.constant 8 : index
    %162 = memref.load %arg2[%c2_99, %c8_100] : memref<4x36xf32, #tpu.memory_space<smem>>
    %163 = vector.broadcast %162 : f32 to vector<14x14xf32>
    %164 = arith.mulf %163, %153 : vector<14x14xf32>
    %165 = arith.addf %147, %164 : vector<14x14xf32>
    %c3_101 = arith.constant 3 : index
    %c8_102 = arith.constant 8 : index
    %166 = memref.load %arg2[%c3_101, %c8_102] : memref<4x36xf32, #tpu.memory_space<smem>>
    %167 = vector.broadcast %166 : f32 to vector<14x14xf32>
    %168 = arith.mulf %167, %153 : vector<14x14xf32>
    %169 = arith.addf %151, %168 : vector<14x14xf32>
    %c0_103 = arith.constant 0 : index
    %c1_104 = arith.constant 1 : index
    %c0_105 = arith.constant 0 : index
    %c0_106 = arith.constant 0 : index
    %170 = vector.load %arg1[%c0_103, %c1_104, %c0_105, %c0_106] : memref<1x4x16x16xf32, #tpu.memory_space<vmem>>, vector<1x1x14x14xf32>
    %171 = vector.shape_cast %170 : vector<1x1x14x14xf32> to vector<14x14xf32>
    %c0_107 = arith.constant 0 : index
    %c9 = arith.constant 9 : index
    %172 = memref.load %arg2[%c0_107, %c9] : memref<4x36xf32, #tpu.memory_space<smem>>
    %173 = vector.broadcast %172 : f32 to vector<14x14xf32>
    %174 = arith.mulf %173, %171 : vector<14x14xf32>
    %175 = arith.addf %157, %174 : vector<14x14xf32>
    %c1_108 = arith.constant 1 : index
    %c9_109 = arith.constant 9 : index
    %176 = memref.load %arg2[%c1_108, %c9_109] : memref<4x36xf32, #tpu.memory_space<smem>>
    %177 = vector.broadcast %176 : f32 to vector<14x14xf32>
    %178 = arith.mulf %177, %171 : vector<14x14xf32>
    %179 = arith.addf %161, %178 : vector<14x14xf32>
    %c2_110 = arith.constant 2 : index
    %c9_111 = arith.constant 9 : index
    %180 = memref.load %arg2[%c2_110, %c9_111] : memref<4x36xf32, #tpu.memory_space<smem>>
    %181 = vector.broadcast %180 : f32 to vector<14x14xf32>
    %182 = arith.mulf %181, %171 : vector<14x14xf32>
    %183 = arith.addf %165, %182 : vector<14x14xf32>
    %c3_112 = arith.constant 3 : index
    %c9_113 = arith.constant 9 : index
    %184 = memref.load %arg2[%c3_112, %c9_113] : memref<4x36xf32, #tpu.memory_space<smem>>
    %185 = vector.broadcast %184 : f32 to vector<14x14xf32>
    %186 = arith.mulf %185, %171 : vector<14x14xf32>
    %187 = arith.addf %169, %186 : vector<14x14xf32>
    %c0_114 = arith.constant 0 : index
    %c1_115 = arith.constant 1 : index
    %c0_116 = arith.constant 0 : index
    %c1_117 = arith.constant 1 : index
    %188 = vector.load %arg1[%c0_114, %c1_115, %c0_116, %c1_117] : memref<1x4x16x16xf32, #tpu.memory_space<vmem>>, vector<1x1x14x14xf32>
    %189 = vector.shape_cast %188 : vector<1x1x14x14xf32> to vector<14x14xf32>
    %c0_118 = arith.constant 0 : index
    %c10 = arith.constant 10 : index
    %190 = memref.load %arg2[%c0_118, %c10] : memref<4x36xf32, #tpu.memory_space<smem>>
    %191 = vector.broadcast %190 : f32 to vector<14x14xf32>
    %192 = arith.mulf %191, %189 : vector<14x14xf32>
    %193 = arith.addf %175, %192 : vector<14x14xf32>
    %c1_119 = arith.constant 1 : index
    %c10_120 = arith.constant 10 : index
    %194 = memref.load %arg2[%c1_119, %c10_120] : memref<4x36xf32, #tpu.memory_space<smem>>
    %195 = vector.broadcast %194 : f32 to vector<14x14xf32>
    %196 = arith.mulf %195, %189 : vector<14x14xf32>
    %197 = arith.addf %179, %196 : vector<14x14xf32>
    %c2_121 = arith.constant 2 : index
    %c10_122 = arith.constant 10 : index
    %198 = memref.load %arg2[%c2_121, %c10_122] : memref<4x36xf32, #tpu.memory_space<smem>>
    %199 = vector.broadcast %198 : f32 to vector<14x14xf32>
    %200 = arith.mulf %199, %189 : vector<14x14xf32>
    %201 = arith.addf %183, %200 : vector<14x14xf32>
    %c3_123 = arith.constant 3 : index
    %c10_124 = arith.constant 10 : index
    %202 = memref.load %arg2[%c3_123, %c10_124] : memref<4x36xf32, #tpu.memory_space<smem>>
    %203 = vector.broadcast %202 : f32 to vector<14x14xf32>
    %204 = arith.mulf %203, %189 : vector<14x14xf32>
    %205 = arith.addf %187, %204 : vector<14x14xf32>
    %c0_125 = arith.constant 0 : index
    %c1_126 = arith.constant 1 : index
    %c0_127 = arith.constant 0 : index
    %c2_128 = arith.constant 2 : index
    %206 = vector.load %arg1[%c0_125, %c1_126, %c0_127, %c2_128] : memref<1x4x16x16xf32, #tpu.memory_space<vmem>>, vector<1x1x14x14xf32>
    %207 = vector.shape_cast %206 : vector<1x1x14x14xf32> to vector<14x14xf32>
    %c0_129 = arith.constant 0 : index
    %c11 = arith.constant 11 : index
    %208 = memref.load %arg2[%c0_129, %c11] : memref<4x36xf32, #tpu.memory_space<smem>>
    %209 = vector.broadcast %208 : f32 to vector<14x14xf32>
    %210 = arith.mulf %209, %207 : vector<14x14xf32>
    %211 = arith.addf %193, %210 : vector<14x14xf32>
    %c1_130 = arith.constant 1 : index
    %c11_131 = arith.constant 11 : index
    %212 = memref.load %arg2[%c1_130, %c11_131] : memref<4x36xf32, #tpu.memory_space<smem>>
    %213 = vector.broadcast %212 : f32 to vector<14x14xf32>
    %214 = arith.mulf %213, %207 : vector<14x14xf32>
    %215 = arith.addf %197, %214 : vector<14x14xf32>
    %c2_132 = arith.constant 2 : index
    %c11_133 = arith.constant 11 : index
    %216 = memref.load %arg2[%c2_132, %c11_133] : memref<4x36xf32, #tpu.memory_space<smem>>
    %217 = vector.broadcast %216 : f32 to vector<14x14xf32>
    %218 = arith.mulf %217, %207 : vector<14x14xf32>
    %219 = arith.addf %201, %218 : vector<14x14xf32>
    %c3_134 = arith.constant 3 : index
    %c11_135 = arith.constant 11 : index
    %220 = memref.load %arg2[%c3_134, %c11_135] : memref<4x36xf32, #tpu.memory_space<smem>>
    %221 = vector.broadcast %220 : f32 to vector<14x14xf32>
    %222 = arith.mulf %221, %207 : vector<14x14xf32>
    %223 = arith.addf %205, %222 : vector<14x14xf32>
    %c0_136 = arith.constant 0 : index
    %c1_137 = arith.constant 1 : index
    %c1_138 = arith.constant 1 : index
    %c0_139 = arith.constant 0 : index
    %224 = vector.load %arg1[%c0_136, %c1_137, %c1_138, %c0_139] : memref<1x4x16x16xf32, #tpu.memory_space<vmem>>, vector<1x1x14x14xf32>
    %225 = vector.shape_cast %224 : vector<1x1x14x14xf32> to vector<14x14xf32>
    %c0_140 = arith.constant 0 : index
    %c12 = arith.constant 12 : index
    %226 = memref.load %arg2[%c0_140, %c12] : memref<4x36xf32, #tpu.memory_space<smem>>
    %227 = vector.broadcast %226 : f32 to vector<14x14xf32>
    %228 = arith.mulf %227, %225 : vector<14x14xf32>
    %229 = arith.addf %211, %228 : vector<14x14xf32>
    %c1_141 = arith.constant 1 : index
    %c12_142 = arith.constant 12 : index
    %230 = memref.load %arg2[%c1_141, %c12_142] : memref<4x36xf32, #tpu.memory_space<smem>>
    %231 = vector.broadcast %230 : f32 to vector<14x14xf32>
    %232 = arith.mulf %231, %225 : vector<14x14xf32>
    %233 = arith.addf %215, %232 : vector<14x14xf32>
    %c2_143 = arith.constant 2 : index
    %c12_144 = arith.constant 12 : index
    %234 = memref.load %arg2[%c2_143, %c12_144] : memref<4x36xf32, #tpu.memory_space<smem>>
    %235 = vector.broadcast %234 : f32 to vector<14x14xf32>
    %236 = arith.mulf %235, %225 : vector<14x14xf32>
    %237 = arith.addf %219, %236 : vector<14x14xf32>
    %c3_145 = arith.constant 3 : index
    %c12_146 = arith.constant 12 : index
    %238 = memref.load %arg2[%c3_145, %c12_146] : memref<4x36xf32, #tpu.memory_space<smem>>
    %239 = vector.broadcast %238 : f32 to vector<14x14xf32>
    %240 = arith.mulf %239, %225 : vector<14x14xf32>
    %241 = arith.addf %223, %240 : vector<14x14xf32>
    %c0_147 = arith.constant 0 : index
    %c1_148 = arith.constant 1 : index
    %c1_149 = arith.constant 1 : index
    %c1_150 = arith.constant 1 : index
    %242 = vector.load %arg1[%c0_147, %c1_148, %c1_149, %c1_150] : memref<1x4x16x16xf32, #tpu.memory_space<vmem>>, vector<1x1x14x14xf32>
    %243 = vector.shape_cast %242 : vector<1x1x14x14xf32> to vector<14x14xf32>
    %c0_151 = arith.constant 0 : index
    %c13 = arith.constant 13 : index
    %244 = memref.load %arg2[%c0_151, %c13] : memref<4x36xf32, #tpu.memory_space<smem>>
    %245 = vector.broadcast %244 : f32 to vector<14x14xf32>
    %246 = arith.mulf %245, %243 : vector<14x14xf32>
    %247 = arith.addf %229, %246 : vector<14x14xf32>
    %c1_152 = arith.constant 1 : index
    %c13_153 = arith.constant 13 : index
    %248 = memref.load %arg2[%c1_152, %c13_153] : memref<4x36xf32, #tpu.memory_space<smem>>
    %249 = vector.broadcast %248 : f32 to vector<14x14xf32>
    %250 = arith.mulf %249, %243 : vector<14x14xf32>
    %251 = arith.addf %233, %250 : vector<14x14xf32>
    %c2_154 = arith.constant 2 : index
    %c13_155 = arith.constant 13 : index
    %252 = memref.load %arg2[%c2_154, %c13_155] : memref<4x36xf32, #tpu.memory_space<smem>>
    %253 = vector.broadcast %252 : f32 to vector<14x14xf32>
    %254 = arith.mulf %253, %243 : vector<14x14xf32>
    %255 = arith.addf %237, %254 : vector<14x14xf32>
    %c3_156 = arith.constant 3 : index
    %c13_157 = arith.constant 13 : index
    %256 = memref.load %arg2[%c3_156, %c13_157] : memref<4x36xf32, #tpu.memory_space<smem>>
    %257 = vector.broadcast %256 : f32 to vector<14x14xf32>
    %258 = arith.mulf %257, %243 : vector<14x14xf32>
    %259 = arith.addf %241, %258 : vector<14x14xf32>
    %c0_158 = arith.constant 0 : index
    %c1_159 = arith.constant 1 : index
    %c1_160 = arith.constant 1 : index
    %c2_161 = arith.constant 2 : index
    %260 = vector.load %arg1[%c0_158, %c1_159, %c1_160, %c2_161] : memref<1x4x16x16xf32, #tpu.memory_space<vmem>>, vector<1x1x14x14xf32>
    %261 = vector.shape_cast %260 : vector<1x1x14x14xf32> to vector<14x14xf32>
    %c0_162 = arith.constant 0 : index
    %c14 = arith.constant 14 : index
    %262 = memref.load %arg2[%c0_162, %c14] : memref<4x36xf32, #tpu.memory_space<smem>>
    %263 = vector.broadcast %262 : f32 to vector<14x14xf32>
    %264 = arith.mulf %263, %261 : vector<14x14xf32>
    %265 = arith.addf %247, %264 : vector<14x14xf32>
    %c1_163 = arith.constant 1 : index
    %c14_164 = arith.constant 14 : index
    %266 = memref.load %arg2[%c1_163, %c14_164] : memref<4x36xf32, #tpu.memory_space<smem>>
    %267 = vector.broadcast %266 : f32 to vector<14x14xf32>
    %268 = arith.mulf %267, %261 : vector<14x14xf32>
    %269 = arith.addf %251, %268 : vector<14x14xf32>
    %c2_165 = arith.constant 2 : index
    %c14_166 = arith.constant 14 : index
    %270 = memref.load %arg2[%c2_165, %c14_166] : memref<4x36xf32, #tpu.memory_space<smem>>
    %271 = vector.broadcast %270 : f32 to vector<14x14xf32>
    %272 = arith.mulf %271, %261 : vector<14x14xf32>
    %273 = arith.addf %255, %272 : vector<14x14xf32>
    %c3_167 = arith.constant 3 : index
    %c14_168 = arith.constant 14 : index
    %274 = memref.load %arg2[%c3_167, %c14_168] : memref<4x36xf32, #tpu.memory_space<smem>>
    %275 = vector.broadcast %274 : f32 to vector<14x14xf32>
    %276 = arith.mulf %275, %261 : vector<14x14xf32>
    %277 = arith.addf %259, %276 : vector<14x14xf32>
    %c0_169 = arith.constant 0 : index
    %c1_170 = arith.constant 1 : index
    %c2_171 = arith.constant 2 : index
    %c0_172 = arith.constant 0 : index
    %278 = vector.load %arg1[%c0_169, %c1_170, %c2_171, %c0_172] : memref<1x4x16x16xf32, #tpu.memory_space<vmem>>, vector<1x1x14x14xf32>
    %279 = vector.shape_cast %278 : vector<1x1x14x14xf32> to vector<14x14xf32>
    %c0_173 = arith.constant 0 : index
    %c15 = arith.constant 15 : index
    %280 = memref.load %arg2[%c0_173, %c15] : memref<4x36xf32, #tpu.memory_space<smem>>
    %281 = vector.broadcast %280 : f32 to vector<14x14xf32>
    %282 = arith.mulf %281, %279 : vector<14x14xf32>
    %283 = arith.addf %265, %282 : vector<14x14xf32>
    %c1_174 = arith.constant 1 : index
    %c15_175 = arith.constant 15 : index
    %284 = memref.load %arg2[%c1_174, %c15_175] : memref<4x36xf32, #tpu.memory_space<smem>>
    %285 = vector.broadcast %284 : f32 to vector<14x14xf32>
    %286 = arith.mulf %285, %279 : vector<14x14xf32>
    %287 = arith.addf %269, %286 : vector<14x14xf32>
    %c2_176 = arith.constant 2 : index
    %c15_177 = arith.constant 15 : index
    %288 = memref.load %arg2[%c2_176, %c15_177] : memref<4x36xf32, #tpu.memory_space<smem>>
    %289 = vector.broadcast %288 : f32 to vector<14x14xf32>
    %290 = arith.mulf %289, %279 : vector<14x14xf32>
    %291 = arith.addf %273, %290 : vector<14x14xf32>
    %c3_178 = arith.constant 3 : index
    %c15_179 = arith.constant 15 : index
    %292 = memref.load %arg2[%c3_178, %c15_179] : memref<4x36xf32, #tpu.memory_space<smem>>
    %293 = vector.broadcast %292 : f32 to vector<14x14xf32>
    %294 = arith.mulf %293, %279 : vector<14x14xf32>
    %295 = arith.addf %277, %294 : vector<14x14xf32>
    %c0_180 = arith.constant 0 : index
    %c1_181 = arith.constant 1 : index
    %c2_182 = arith.constant 2 : index
    %c1_183 = arith.constant 1 : index
    %296 = vector.load %arg1[%c0_180, %c1_181, %c2_182, %c1_183] : memref<1x4x16x16xf32, #tpu.memory_space<vmem>>, vector<1x1x14x14xf32>
    %297 = vector.shape_cast %296 : vector<1x1x14x14xf32> to vector<14x14xf32>
    %c0_184 = arith.constant 0 : index
    %c16 = arith.constant 16 : index
    %298 = memref.load %arg2[%c0_184, %c16] : memref<4x36xf32, #tpu.memory_space<smem>>
    %299 = vector.broadcast %298 : f32 to vector<14x14xf32>
    %300 = arith.mulf %299, %297 : vector<14x14xf32>
    %301 = arith.addf %283, %300 : vector<14x14xf32>
    %c1_185 = arith.constant 1 : index
    %c16_186 = arith.constant 16 : index
    %302 = memref.load %arg2[%c1_185, %c16_186] : memref<4x36xf32, #tpu.memory_space<smem>>
    %303 = vector.broadcast %302 : f32 to vector<14x14xf32>
    %304 = arith.mulf %303, %297 : vector<14x14xf32>
    %305 = arith.addf %287, %304 : vector<14x14xf32>
    %c2_187 = arith.constant 2 : index
    %c16_188 = arith.constant 16 : index
    %306 = memref.load %arg2[%c2_187, %c16_188] : memref<4x36xf32, #tpu.memory_space<smem>>
    %307 = vector.broadcast %306 : f32 to vector<14x14xf32>
    %308 = arith.mulf %307, %297 : vector<14x14xf32>
    %309 = arith.addf %291, %308 : vector<14x14xf32>
    %c3_189 = arith.constant 3 : index
    %c16_190 = arith.constant 16 : index
    %310 = memref.load %arg2[%c3_189, %c16_190] : memref<4x36xf32, #tpu.memory_space<smem>>
    %311 = vector.broadcast %310 : f32 to vector<14x14xf32>
    %312 = arith.mulf %311, %297 : vector<14x14xf32>
    %313 = arith.addf %295, %312 : vector<14x14xf32>
    %c0_191 = arith.constant 0 : index
    %c1_192 = arith.constant 1 : index
    %c2_193 = arith.constant 2 : index
    %c2_194 = arith.constant 2 : index
    %314 = vector.load %arg1[%c0_191, %c1_192, %c2_193, %c2_194] : memref<1x4x16x16xf32, #tpu.memory_space<vmem>>, vector<1x1x14x14xf32>
    %315 = vector.shape_cast %314 : vector<1x1x14x14xf32> to vector<14x14xf32>
    %c0_195 = arith.constant 0 : index
    %c17 = arith.constant 17 : index
    %316 = memref.load %arg2[%c0_195, %c17] : memref<4x36xf32, #tpu.memory_space<smem>>
    %317 = vector.broadcast %316 : f32 to vector<14x14xf32>
    %318 = arith.mulf %317, %315 : vector<14x14xf32>
    %319 = arith.addf %301, %318 : vector<14x14xf32>
    %c1_196 = arith.constant 1 : index
    %c17_197 = arith.constant 17 : index
    %320 = memref.load %arg2[%c1_196, %c17_197] : memref<4x36xf32, #tpu.memory_space<smem>>
    %321 = vector.broadcast %320 : f32 to vector<14x14xf32>
    %322 = arith.mulf %321, %315 : vector<14x14xf32>
    %323 = arith.addf %305, %322 : vector<14x14xf32>
    %c2_198 = arith.constant 2 : index
    %c17_199 = arith.constant 17 : index
    %324 = memref.load %arg2[%c2_198, %c17_199] : memref<4x36xf32, #tpu.memory_space<smem>>
    %325 = vector.broadcast %324 : f32 to vector<14x14xf32>
    %326 = arith.mulf %325, %315 : vector<14x14xf32>
    %327 = arith.addf %309, %326 : vector<14x14xf32>
    %c3_200 = arith.constant 3 : index
    %c17_201 = arith.constant 17 : index
    %328 = memref.load %arg2[%c3_200, %c17_201] : memref<4x36xf32, #tpu.memory_space<smem>>
    %329 = vector.broadcast %328 : f32 to vector<14x14xf32>
    %330 = arith.mulf %329, %315 : vector<14x14xf32>
    %331 = arith.addf %313, %330 : vector<14x14xf32>
    %c0_202 = arith.constant 0 : index
    %c2_203 = arith.constant 2 : index
    %c0_204 = arith.constant 0 : index
    %c0_205 = arith.constant 0 : index
    %332 = vector.load %arg1[%c0_202, %c2_203, %c0_204, %c0_205] : memref<1x4x16x16xf32, #tpu.memory_space<vmem>>, vector<1x1x14x14xf32>
    %333 = vector.shape_cast %332 : vector<1x1x14x14xf32> to vector<14x14xf32>
    %c0_206 = arith.constant 0 : index
    %c18 = arith.constant 18 : index
    %334 = memref.load %arg2[%c0_206, %c18] : memref<4x36xf32, #tpu.memory_space<smem>>
    %335 = vector.broadcast %334 : f32 to vector<14x14xf32>
    %336 = arith.mulf %335, %333 : vector<14x14xf32>
    %337 = arith.addf %319, %336 : vector<14x14xf32>
    %c1_207 = arith.constant 1 : index
    %c18_208 = arith.constant 18 : index
    %338 = memref.load %arg2[%c1_207, %c18_208] : memref<4x36xf32, #tpu.memory_space<smem>>
    %339 = vector.broadcast %338 : f32 to vector<14x14xf32>
    %340 = arith.mulf %339, %333 : vector<14x14xf32>
    %341 = arith.addf %323, %340 : vector<14x14xf32>
    %c2_209 = arith.constant 2 : index
    %c18_210 = arith.constant 18 : index
    %342 = memref.load %arg2[%c2_209, %c18_210] : memref<4x36xf32, #tpu.memory_space<smem>>
    %343 = vector.broadcast %342 : f32 to vector<14x14xf32>
    %344 = arith.mulf %343, %333 : vector<14x14xf32>
    %345 = arith.addf %327, %344 : vector<14x14xf32>
    %c3_211 = arith.constant 3 : index
    %c18_212 = arith.constant 18 : index
    %346 = memref.load %arg2[%c3_211, %c18_212] : memref<4x36xf32, #tpu.memory_space<smem>>
    %347 = vector.broadcast %346 : f32 to vector<14x14xf32>
    %348 = arith.mulf %347, %333 : vector<14x14xf32>
    %349 = arith.addf %331, %348 : vector<14x14xf32>
    %c0_213 = arith.constant 0 : index
    %c2_214 = arith.constant 2 : index
    %c0_215 = arith.constant 0 : index
    %c1_216 = arith.constant 1 : index
    %350 = vector.load %arg1[%c0_213, %c2_214, %c0_215, %c1_216] : memref<1x4x16x16xf32, #tpu.memory_space<vmem>>, vector<1x1x14x14xf32>
    %351 = vector.shape_cast %350 : vector<1x1x14x14xf32> to vector<14x14xf32>
    %c0_217 = arith.constant 0 : index
    %c19 = arith.constant 19 : index
    %352 = memref.load %arg2[%c0_217, %c19] : memref<4x36xf32, #tpu.memory_space<smem>>
    %353 = vector.broadcast %352 : f32 to vector<14x14xf32>
    %354 = arith.mulf %353, %351 : vector<14x14xf32>
    %355 = arith.addf %337, %354 : vector<14x14xf32>
    %c1_218 = arith.constant 1 : index
    %c19_219 = arith.constant 19 : index
    %356 = memref.load %arg2[%c1_218, %c19_219] : memref<4x36xf32, #tpu.memory_space<smem>>
    %357 = vector.broadcast %356 : f32 to vector<14x14xf32>
    %358 = arith.mulf %357, %351 : vector<14x14xf32>
    %359 = arith.addf %341, %358 : vector<14x14xf32>
    %c2_220 = arith.constant 2 : index
    %c19_221 = arith.constant 19 : index
    %360 = memref.load %arg2[%c2_220, %c19_221] : memref<4x36xf32, #tpu.memory_space<smem>>
    %361 = vector.broadcast %360 : f32 to vector<14x14xf32>
    %362 = arith.mulf %361, %351 : vector<14x14xf32>
    %363 = arith.addf %345, %362 : vector<14x14xf32>
    %c3_222 = arith.constant 3 : index
    %c19_223 = arith.constant 19 : index
    %364 = memref.load %arg2[%c3_222, %c19_223] : memref<4x36xf32, #tpu.memory_space<smem>>
    %365 = vector.broadcast %364 : f32 to vector<14x14xf32>
    %366 = arith.mulf %365, %351 : vector<14x14xf32>
    %367 = arith.addf %349, %366 : vector<14x14xf32>
    %c0_224 = arith.constant 0 : index
    %c2_225 = arith.constant 2 : index
    %c0_226 = arith.constant 0 : index
    %c2_227 = arith.constant 2 : index
    %368 = vector.load %arg1[%c0_224, %c2_225, %c0_226, %c2_227] : memref<1x4x16x16xf32, #tpu.memory_space<vmem>>, vector<1x1x14x14xf32>
    %369 = vector.shape_cast %368 : vector<1x1x14x14xf32> to vector<14x14xf32>
    %c0_228 = arith.constant 0 : index
    %c20 = arith.constant 20 : index
    %370 = memref.load %arg2[%c0_228, %c20] : memref<4x36xf32, #tpu.memory_space<smem>>
    %371 = vector.broadcast %370 : f32 to vector<14x14xf32>
    %372 = arith.mulf %371, %369 : vector<14x14xf32>
    %373 = arith.addf %355, %372 : vector<14x14xf32>
    %c1_229 = arith.constant 1 : index
    %c20_230 = arith.constant 20 : index
    %374 = memref.load %arg2[%c1_229, %c20_230] : memref<4x36xf32, #tpu.memory_space<smem>>
    %375 = vector.broadcast %374 : f32 to vector<14x14xf32>
    %376 = arith.mulf %375, %369 : vector<14x14xf32>
    %377 = arith.addf %359, %376 : vector<14x14xf32>
    %c2_231 = arith.constant 2 : index
    %c20_232 = arith.constant 20 : index
    %378 = memref.load %arg2[%c2_231, %c20_232] : memref<4x36xf32, #tpu.memory_space<smem>>
    %379 = vector.broadcast %378 : f32 to vector<14x14xf32>
    %380 = arith.mulf %379, %369 : vector<14x14xf32>
    %381 = arith.addf %363, %380 : vector<14x14xf32>
    %c3_233 = arith.constant 3 : index
    %c20_234 = arith.constant 20 : index
    %382 = memref.load %arg2[%c3_233, %c20_234] : memref<4x36xf32, #tpu.memory_space<smem>>
    %383 = vector.broadcast %382 : f32 to vector<14x14xf32>
    %384 = arith.mulf %383, %369 : vector<14x14xf32>
    %385 = arith.addf %367, %384 : vector<14x14xf32>
    %c0_235 = arith.constant 0 : index
    %c2_236 = arith.constant 2 : index
    %c1_237 = arith.constant 1 : index
    %c0_238 = arith.constant 0 : index
    %386 = vector.load %arg1[%c0_235, %c2_236, %c1_237, %c0_238] : memref<1x4x16x16xf32, #tpu.memory_space<vmem>>, vector<1x1x14x14xf32>
    %387 = vector.shape_cast %386 : vector<1x1x14x14xf32> to vector<14x14xf32>
    %c0_239 = arith.constant 0 : index
    %c21 = arith.constant 21 : index
    %388 = memref.load %arg2[%c0_239, %c21] : memref<4x36xf32, #tpu.memory_space<smem>>
    %389 = vector.broadcast %388 : f32 to vector<14x14xf32>
    %390 = arith.mulf %389, %387 : vector<14x14xf32>
    %391 = arith.addf %373, %390 : vector<14x14xf32>
    %c1_240 = arith.constant 1 : index
    %c21_241 = arith.constant 21 : index
    %392 = memref.load %arg2[%c1_240, %c21_241] : memref<4x36xf32, #tpu.memory_space<smem>>
    %393 = vector.broadcast %392 : f32 to vector<14x14xf32>
    %394 = arith.mulf %393, %387 : vector<14x14xf32>
    %395 = arith.addf %377, %394 : vector<14x14xf32>
    %c2_242 = arith.constant 2 : index
    %c21_243 = arith.constant 21 : index
    %396 = memref.load %arg2[%c2_242, %c21_243] : memref<4x36xf32, #tpu.memory_space<smem>>
    %397 = vector.broadcast %396 : f32 to vector<14x14xf32>
    %398 = arith.mulf %397, %387 : vector<14x14xf32>
    %399 = arith.addf %381, %398 : vector<14x14xf32>
    %c3_244 = arith.constant 3 : index
    %c21_245 = arith.constant 21 : index
    %400 = memref.load %arg2[%c3_244, %c21_245] : memref<4x36xf32, #tpu.memory_space<smem>>
    %401 = vector.broadcast %400 : f32 to vector<14x14xf32>
    %402 = arith.mulf %401, %387 : vector<14x14xf32>
    %403 = arith.addf %385, %402 : vector<14x14xf32>
    %c0_246 = arith.constant 0 : index
    %c2_247 = arith.constant 2 : index
    %c1_248 = arith.constant 1 : index
    %c1_249 = arith.constant 1 : index
    %404 = vector.load %arg1[%c0_246, %c2_247, %c1_248, %c1_249] : memref<1x4x16x16xf32, #tpu.memory_space<vmem>>, vector<1x1x14x14xf32>
    %405 = vector.shape_cast %404 : vector<1x1x14x14xf32> to vector<14x14xf32>
    %c0_250 = arith.constant 0 : index
    %c22 = arith.constant 22 : index
    %406 = memref.load %arg2[%c0_250, %c22] : memref<4x36xf32, #tpu.memory_space<smem>>
    %407 = vector.broadcast %406 : f32 to vector<14x14xf32>
    %408 = arith.mulf %407, %405 : vector<14x14xf32>
    %409 = arith.addf %391, %408 : vector<14x14xf32>
    %c1_251 = arith.constant 1 : index
    %c22_252 = arith.constant 22 : index
    %410 = memref.load %arg2[%c1_251, %c22_252] : memref<4x36xf32, #tpu.memory_space<smem>>
    %411 = vector.broadcast %410 : f32 to vector<14x14xf32>
    %412 = arith.mulf %411, %405 : vector<14x14xf32>
    %413 = arith.addf %395, %412 : vector<14x14xf32>
    %c2_253 = arith.constant 2 : index
    %c22_254 = arith.constant 22 : index
    %414 = memref.load %arg2[%c2_253, %c22_254] : memref<4x36xf32, #tpu.memory_space<smem>>
    %415 = vector.broadcast %414 : f32 to vector<14x14xf32>
    %416 = arith.mulf %415, %405 : vector<14x14xf32>
    %417 = arith.addf %399, %416 : vector<14x14xf32>
    %c3_255 = arith.constant 3 : index
    %c22_256 = arith.constant 22 : index
    %418 = memref.load %arg2[%c3_255, %c22_256] : memref<4x36xf32, #tpu.memory_space<smem>>
    %419 = vector.broadcast %418 : f32 to vector<14x14xf32>
    %420 = arith.mulf %419, %405 : vector<14x14xf32>
    %421 = arith.addf %403, %420 : vector<14x14xf32>
    %c0_257 = arith.constant 0 : index
    %c2_258 = arith.constant 2 : index
    %c1_259 = arith.constant 1 : index
    %c2_260 = arith.constant 2 : index
    %422 = vector.load %arg1[%c0_257, %c2_258, %c1_259, %c2_260] : memref<1x4x16x16xf32, #tpu.memory_space<vmem>>, vector<1x1x14x14xf32>
    %423 = vector.shape_cast %422 : vector<1x1x14x14xf32> to vector<14x14xf32>
    %c0_261 = arith.constant 0 : index
    %c23 = arith.constant 23 : index
    %424 = memref.load %arg2[%c0_261, %c23] : memref<4x36xf32, #tpu.memory_space<smem>>
    %425 = vector.broadcast %424 : f32 to vector<14x14xf32>
    %426 = arith.mulf %425, %423 : vector<14x14xf32>
    %427 = arith.addf %409, %426 : vector<14x14xf32>
    %c1_262 = arith.constant 1 : index
    %c23_263 = arith.constant 23 : index
    %428 = memref.load %arg2[%c1_262, %c23_263] : memref<4x36xf32, #tpu.memory_space<smem>>
    %429 = vector.broadcast %428 : f32 to vector<14x14xf32>
    %430 = arith.mulf %429, %423 : vector<14x14xf32>
    %431 = arith.addf %413, %430 : vector<14x14xf32>
    %c2_264 = arith.constant 2 : index
    %c23_265 = arith.constant 23 : index
    %432 = memref.load %arg2[%c2_264, %c23_265] : memref<4x36xf32, #tpu.memory_space<smem>>
    %433 = vector.broadcast %432 : f32 to vector<14x14xf32>
    %434 = arith.mulf %433, %423 : vector<14x14xf32>
    %435 = arith.addf %417, %434 : vector<14x14xf32>
    %c3_266 = arith.constant 3 : index
    %c23_267 = arith.constant 23 : index
    %436 = memref.load %arg2[%c3_266, %c23_267] : memref<4x36xf32, #tpu.memory_space<smem>>
    %437 = vector.broadcast %436 : f32 to vector<14x14xf32>
    %438 = arith.mulf %437, %423 : vector<14x14xf32>
    %439 = arith.addf %421, %438 : vector<14x14xf32>
    %c0_268 = arith.constant 0 : index
    %c2_269 = arith.constant 2 : index
    %c2_270 = arith.constant 2 : index
    %c0_271 = arith.constant 0 : index
    %440 = vector.load %arg1[%c0_268, %c2_269, %c2_270, %c0_271] : memref<1x4x16x16xf32, #tpu.memory_space<vmem>>, vector<1x1x14x14xf32>
    %441 = vector.shape_cast %440 : vector<1x1x14x14xf32> to vector<14x14xf32>
    %c0_272 = arith.constant 0 : index
    %c24 = arith.constant 24 : index
    %442 = memref.load %arg2[%c0_272, %c24] : memref<4x36xf32, #tpu.memory_space<smem>>
    %443 = vector.broadcast %442 : f32 to vector<14x14xf32>
    %444 = arith.mulf %443, %441 : vector<14x14xf32>
    %445 = arith.addf %427, %444 : vector<14x14xf32>
    %c1_273 = arith.constant 1 : index
    %c24_274 = arith.constant 24 : index
    %446 = memref.load %arg2[%c1_273, %c24_274] : memref<4x36xf32, #tpu.memory_space<smem>>
    %447 = vector.broadcast %446 : f32 to vector<14x14xf32>
    %448 = arith.mulf %447, %441 : vector<14x14xf32>
    %449 = arith.addf %431, %448 : vector<14x14xf32>
    %c2_275 = arith.constant 2 : index
    %c24_276 = arith.constant 24 : index
    %450 = memref.load %arg2[%c2_275, %c24_276] : memref<4x36xf32, #tpu.memory_space<smem>>
    %451 = vector.broadcast %450 : f32 to vector<14x14xf32>
    %452 = arith.mulf %451, %441 : vector<14x14xf32>
    %453 = arith.addf %435, %452 : vector<14x14xf32>
    %c3_277 = arith.constant 3 : index
    %c24_278 = arith.constant 24 : index
    %454 = memref.load %arg2[%c3_277, %c24_278] : memref<4x36xf32, #tpu.memory_space<smem>>
    %455 = vector.broadcast %454 : f32 to vector<14x14xf32>
    %456 = arith.mulf %455, %441 : vector<14x14xf32>
    %457 = arith.addf %439, %456 : vector<14x14xf32>
    %c0_279 = arith.constant 0 : index
    %c2_280 = arith.constant 2 : index
    %c2_281 = arith.constant 2 : index
    %c1_282 = arith.constant 1 : index
    %458 = vector.load %arg1[%c0_279, %c2_280, %c2_281, %c1_282] : memref<1x4x16x16xf32, #tpu.memory_space<vmem>>, vector<1x1x14x14xf32>
    %459 = vector.shape_cast %458 : vector<1x1x14x14xf32> to vector<14x14xf32>
    %c0_283 = arith.constant 0 : index
    %c25 = arith.constant 25 : index
    %460 = memref.load %arg2[%c0_283, %c25] : memref<4x36xf32, #tpu.memory_space<smem>>
    %461 = vector.broadcast %460 : f32 to vector<14x14xf32>
    %462 = arith.mulf %461, %459 : vector<14x14xf32>
    %463 = arith.addf %445, %462 : vector<14x14xf32>
    %c1_284 = arith.constant 1 : index
    %c25_285 = arith.constant 25 : index
    %464 = memref.load %arg2[%c1_284, %c25_285] : memref<4x36xf32, #tpu.memory_space<smem>>
    %465 = vector.broadcast %464 : f32 to vector<14x14xf32>
    %466 = arith.mulf %465, %459 : vector<14x14xf32>
    %467 = arith.addf %449, %466 : vector<14x14xf32>
    %c2_286 = arith.constant 2 : index
    %c25_287 = arith.constant 25 : index
    %468 = memref.load %arg2[%c2_286, %c25_287] : memref<4x36xf32, #tpu.memory_space<smem>>
    %469 = vector.broadcast %468 : f32 to vector<14x14xf32>
    %470 = arith.mulf %469, %459 : vector<14x14xf32>
    %471 = arith.addf %453, %470 : vector<14x14xf32>
    %c3_288 = arith.constant 3 : index
    %c25_289 = arith.constant 25 : index
    %472 = memref.load %arg2[%c3_288, %c25_289] : memref<4x36xf32, #tpu.memory_space<smem>>
    %473 = vector.broadcast %472 : f32 to vector<14x14xf32>
    %474 = arith.mulf %473, %459 : vector<14x14xf32>
    %475 = arith.addf %457, %474 : vector<14x14xf32>
    %c0_290 = arith.constant 0 : index
    %c2_291 = arith.constant 2 : index
    %c2_292 = arith.constant 2 : index
    %c2_293 = arith.constant 2 : index
    %476 = vector.load %arg1[%c0_290, %c2_291, %c2_292, %c2_293] : memref<1x4x16x16xf32, #tpu.memory_space<vmem>>, vector<1x1x14x14xf32>
    %477 = vector.shape_cast %476 : vector<1x1x14x14xf32> to vector<14x14xf32>
    %c0_294 = arith.constant 0 : index
    %c26 = arith.constant 26 : index
    %478 = memref.load %arg2[%c0_294, %c26] : memref<4x36xf32, #tpu.memory_space<smem>>
    %479 = vector.broadcast %478 : f32 to vector<14x14xf32>
    %480 = arith.mulf %479, %477 : vector<14x14xf32>
    %481 = arith.addf %463, %480 : vector<14x14xf32>
    %c1_295 = arith.constant 1 : index
    %c26_296 = arith.constant 26 : index
    %482 = memref.load %arg2[%c1_295, %c26_296] : memref<4x36xf32, #tpu.memory_space<smem>>
    %483 = vector.broadcast %482 : f32 to vector<14x14xf32>
    %484 = arith.mulf %483, %477 : vector<14x14xf32>
    %485 = arith.addf %467, %484 : vector<14x14xf32>
    %c2_297 = arith.constant 2 : index
    %c26_298 = arith.constant 26 : index
    %486 = memref.load %arg2[%c2_297, %c26_298] : memref<4x36xf32, #tpu.memory_space<smem>>
    %487 = vector.broadcast %486 : f32 to vector<14x14xf32>
    %488 = arith.mulf %487, %477 : vector<14x14xf32>
    %489 = arith.addf %471, %488 : vector<14x14xf32>
    %c3_299 = arith.constant 3 : index
    %c26_300 = arith.constant 26 : index
    %490 = memref.load %arg2[%c3_299, %c26_300] : memref<4x36xf32, #tpu.memory_space<smem>>
    %491 = vector.broadcast %490 : f32 to vector<14x14xf32>
    %492 = arith.mulf %491, %477 : vector<14x14xf32>
    %493 = arith.addf %475, %492 : vector<14x14xf32>
    %c0_301 = arith.constant 0 : index
    %c3_302 = arith.constant 3 : index
    %c0_303 = arith.constant 0 : index
    %c0_304 = arith.constant 0 : index
    %494 = vector.load %arg1[%c0_301, %c3_302, %c0_303, %c0_304] : memref<1x4x16x16xf32, #tpu.memory_space<vmem>>, vector<1x1x14x14xf32>
    %495 = vector.shape_cast %494 : vector<1x1x14x14xf32> to vector<14x14xf32>
    %c0_305 = arith.constant 0 : index
    %c27 = arith.constant 27 : index
    %496 = memref.load %arg2[%c0_305, %c27] : memref<4x36xf32, #tpu.memory_space<smem>>
    %497 = vector.broadcast %496 : f32 to vector<14x14xf32>
    %498 = arith.mulf %497, %495 : vector<14x14xf32>
    %499 = arith.addf %481, %498 : vector<14x14xf32>
    %c1_306 = arith.constant 1 : index
    %c27_307 = arith.constant 27 : index
    %500 = memref.load %arg2[%c1_306, %c27_307] : memref<4x36xf32, #tpu.memory_space<smem>>
    %501 = vector.broadcast %500 : f32 to vector<14x14xf32>
    %502 = arith.mulf %501, %495 : vector<14x14xf32>
    %503 = arith.addf %485, %502 : vector<14x14xf32>
    %c2_308 = arith.constant 2 : index
    %c27_309 = arith.constant 27 : index
    %504 = memref.load %arg2[%c2_308, %c27_309] : memref<4x36xf32, #tpu.memory_space<smem>>
    %505 = vector.broadcast %504 : f32 to vector<14x14xf32>
    %506 = arith.mulf %505, %495 : vector<14x14xf32>
    %507 = arith.addf %489, %506 : vector<14x14xf32>
    %c3_310 = arith.constant 3 : index
    %c27_311 = arith.constant 27 : index
    %508 = memref.load %arg2[%c3_310, %c27_311] : memref<4x36xf32, #tpu.memory_space<smem>>
    %509 = vector.broadcast %508 : f32 to vector<14x14xf32>
    %510 = arith.mulf %509, %495 : vector<14x14xf32>
    %511 = arith.addf %493, %510 : vector<14x14xf32>
    %c0_312 = arith.constant 0 : index
    %c3_313 = arith.constant 3 : index
    %c0_314 = arith.constant 0 : index
    %c1_315 = arith.constant 1 : index
    %512 = vector.load %arg1[%c0_312, %c3_313, %c0_314, %c1_315] : memref<1x4x16x16xf32, #tpu.memory_space<vmem>>, vector<1x1x14x14xf32>
    %513 = vector.shape_cast %512 : vector<1x1x14x14xf32> to vector<14x14xf32>
    %c0_316 = arith.constant 0 : index
    %c28 = arith.constant 28 : index
    %514 = memref.load %arg2[%c0_316, %c28] : memref<4x36xf32, #tpu.memory_space<smem>>
    %515 = vector.broadcast %514 : f32 to vector<14x14xf32>
    %516 = arith.mulf %515, %513 : vector<14x14xf32>
    %517 = arith.addf %499, %516 : vector<14x14xf32>
    %c1_317 = arith.constant 1 : index
    %c28_318 = arith.constant 28 : index
    %518 = memref.load %arg2[%c1_317, %c28_318] : memref<4x36xf32, #tpu.memory_space<smem>>
    %519 = vector.broadcast %518 : f32 to vector<14x14xf32>
    %520 = arith.mulf %519, %513 : vector<14x14xf32>
    %521 = arith.addf %503, %520 : vector<14x14xf32>
    %c2_319 = arith.constant 2 : index
    %c28_320 = arith.constant 28 : index
    %522 = memref.load %arg2[%c2_319, %c28_320] : memref<4x36xf32, #tpu.memory_space<smem>>
    %523 = vector.broadcast %522 : f32 to vector<14x14xf32>
    %524 = arith.mulf %523, %513 : vector<14x14xf32>
    %525 = arith.addf %507, %524 : vector<14x14xf32>
    %c3_321 = arith.constant 3 : index
    %c28_322 = arith.constant 28 : index
    %526 = memref.load %arg2[%c3_321, %c28_322] : memref<4x36xf32, #tpu.memory_space<smem>>
    %527 = vector.broadcast %526 : f32 to vector<14x14xf32>
    %528 = arith.mulf %527, %513 : vector<14x14xf32>
    %529 = arith.addf %511, %528 : vector<14x14xf32>
    %c0_323 = arith.constant 0 : index
    %c3_324 = arith.constant 3 : index
    %c0_325 = arith.constant 0 : index
    %c2_326 = arith.constant 2 : index
    %530 = vector.load %arg1[%c0_323, %c3_324, %c0_325, %c2_326] : memref<1x4x16x16xf32, #tpu.memory_space<vmem>>, vector<1x1x14x14xf32>
    %531 = vector.shape_cast %530 : vector<1x1x14x14xf32> to vector<14x14xf32>
    %c0_327 = arith.constant 0 : index
    %c29 = arith.constant 29 : index
    %532 = memref.load %arg2[%c0_327, %c29] : memref<4x36xf32, #tpu.memory_space<smem>>
    %533 = vector.broadcast %532 : f32 to vector<14x14xf32>
    %534 = arith.mulf %533, %531 : vector<14x14xf32>
    %535 = arith.addf %517, %534 : vector<14x14xf32>
    %c1_328 = arith.constant 1 : index
    %c29_329 = arith.constant 29 : index
    %536 = memref.load %arg2[%c1_328, %c29_329] : memref<4x36xf32, #tpu.memory_space<smem>>
    %537 = vector.broadcast %536 : f32 to vector<14x14xf32>
    %538 = arith.mulf %537, %531 : vector<14x14xf32>
    %539 = arith.addf %521, %538 : vector<14x14xf32>
    %c2_330 = arith.constant 2 : index
    %c29_331 = arith.constant 29 : index
    %540 = memref.load %arg2[%c2_330, %c29_331] : memref<4x36xf32, #tpu.memory_space<smem>>
    %541 = vector.broadcast %540 : f32 to vector<14x14xf32>
    %542 = arith.mulf %541, %531 : vector<14x14xf32>
    %543 = arith.addf %525, %542 : vector<14x14xf32>
    %c3_332 = arith.constant 3 : index
    %c29_333 = arith.constant 29 : index
    %544 = memref.load %arg2[%c3_332, %c29_333] : memref<4x36xf32, #tpu.memory_space<smem>>
    %545 = vector.broadcast %544 : f32 to vector<14x14xf32>
    %546 = arith.mulf %545, %531 : vector<14x14xf32>
    %547 = arith.addf %529, %546 : vector<14x14xf32>
    %c0_334 = arith.constant 0 : index
    %c3_335 = arith.constant 3 : index
    %c1_336 = arith.constant 1 : index
    %c0_337 = arith.constant 0 : index
    %548 = vector.load %arg1[%c0_334, %c3_335, %c1_336, %c0_337] : memref<1x4x16x16xf32, #tpu.memory_space<vmem>>, vector<1x1x14x14xf32>
    %549 = vector.shape_cast %548 : vector<1x1x14x14xf32> to vector<14x14xf32>
    %c0_338 = arith.constant 0 : index
    %c30 = arith.constant 30 : index
    %550 = memref.load %arg2[%c0_338, %c30] : memref<4x36xf32, #tpu.memory_space<smem>>
    %551 = vector.broadcast %550 : f32 to vector<14x14xf32>
    %552 = arith.mulf %551, %549 : vector<14x14xf32>
    %553 = arith.addf %535, %552 : vector<14x14xf32>
    %c1_339 = arith.constant 1 : index
    %c30_340 = arith.constant 30 : index
    %554 = memref.load %arg2[%c1_339, %c30_340] : memref<4x36xf32, #tpu.memory_space<smem>>
    %555 = vector.broadcast %554 : f32 to vector<14x14xf32>
    %556 = arith.mulf %555, %549 : vector<14x14xf32>
    %557 = arith.addf %539, %556 : vector<14x14xf32>
    %c2_341 = arith.constant 2 : index
    %c30_342 = arith.constant 30 : index
    %558 = memref.load %arg2[%c2_341, %c30_342] : memref<4x36xf32, #tpu.memory_space<smem>>
    %559 = vector.broadcast %558 : f32 to vector<14x14xf32>
    %560 = arith.mulf %559, %549 : vector<14x14xf32>
    %561 = arith.addf %543, %560 : vector<14x14xf32>
    %c3_343 = arith.constant 3 : index
    %c30_344 = arith.constant 30 : index
    %562 = memref.load %arg2[%c3_343, %c30_344] : memref<4x36xf32, #tpu.memory_space<smem>>
    %563 = vector.broadcast %562 : f32 to vector<14x14xf32>
    %564 = arith.mulf %563, %549 : vector<14x14xf32>
    %565 = arith.addf %547, %564 : vector<14x14xf32>
    %c0_345 = arith.constant 0 : index
    %c3_346 = arith.constant 3 : index
    %c1_347 = arith.constant 1 : index
    %c1_348 = arith.constant 1 : index
    %566 = vector.load %arg1[%c0_345, %c3_346, %c1_347, %c1_348] : memref<1x4x16x16xf32, #tpu.memory_space<vmem>>, vector<1x1x14x14xf32>
    %567 = vector.shape_cast %566 : vector<1x1x14x14xf32> to vector<14x14xf32>
    %c0_349 = arith.constant 0 : index
    %c31 = arith.constant 31 : index
    %568 = memref.load %arg2[%c0_349, %c31] : memref<4x36xf32, #tpu.memory_space<smem>>
    %569 = vector.broadcast %568 : f32 to vector<14x14xf32>
    %570 = arith.mulf %569, %567 : vector<14x14xf32>
    %571 = arith.addf %553, %570 : vector<14x14xf32>
    %c1_350 = arith.constant 1 : index
    %c31_351 = arith.constant 31 : index
    %572 = memref.load %arg2[%c1_350, %c31_351] : memref<4x36xf32, #tpu.memory_space<smem>>
    %573 = vector.broadcast %572 : f32 to vector<14x14xf32>
    %574 = arith.mulf %573, %567 : vector<14x14xf32>
    %575 = arith.addf %557, %574 : vector<14x14xf32>
    %c2_352 = arith.constant 2 : index
    %c31_353 = arith.constant 31 : index
    %576 = memref.load %arg2[%c2_352, %c31_353] : memref<4x36xf32, #tpu.memory_space<smem>>
    %577 = vector.broadcast %576 : f32 to vector<14x14xf32>
    %578 = arith.mulf %577, %567 : vector<14x14xf32>
    %579 = arith.addf %561, %578 : vector<14x14xf32>
    %c3_354 = arith.constant 3 : index
    %c31_355 = arith.constant 31 : index
    %580 = memref.load %arg2[%c3_354, %c31_355] : memref<4x36xf32, #tpu.memory_space<smem>>
    %581 = vector.broadcast %580 : f32 to vector<14x14xf32>
    %582 = arith.mulf %581, %567 : vector<14x14xf32>
    %583 = arith.addf %565, %582 : vector<14x14xf32>
    %c0_356 = arith.constant 0 : index
    %c3_357 = arith.constant 3 : index
    %c1_358 = arith.constant 1 : index
    %c2_359 = arith.constant 2 : index
    %584 = vector.load %arg1[%c0_356, %c3_357, %c1_358, %c2_359] : memref<1x4x16x16xf32, #tpu.memory_space<vmem>>, vector<1x1x14x14xf32>
    %585 = vector.shape_cast %584 : vector<1x1x14x14xf32> to vector<14x14xf32>
    %c0_360 = arith.constant 0 : index
    %c32 = arith.constant 32 : index
    %586 = memref.load %arg2[%c0_360, %c32] : memref<4x36xf32, #tpu.memory_space<smem>>
    %587 = vector.broadcast %586 : f32 to vector<14x14xf32>
    %588 = arith.mulf %587, %585 : vector<14x14xf32>
    %589 = arith.addf %571, %588 : vector<14x14xf32>
    %c1_361 = arith.constant 1 : index
    %c32_362 = arith.constant 32 : index
    %590 = memref.load %arg2[%c1_361, %c32_362] : memref<4x36xf32, #tpu.memory_space<smem>>
    %591 = vector.broadcast %590 : f32 to vector<14x14xf32>
    %592 = arith.mulf %591, %585 : vector<14x14xf32>
    %593 = arith.addf %575, %592 : vector<14x14xf32>
    %c2_363 = arith.constant 2 : index
    %c32_364 = arith.constant 32 : index
    %594 = memref.load %arg2[%c2_363, %c32_364] : memref<4x36xf32, #tpu.memory_space<smem>>
    %595 = vector.broadcast %594 : f32 to vector<14x14xf32>
    %596 = arith.mulf %595, %585 : vector<14x14xf32>
    %597 = arith.addf %579, %596 : vector<14x14xf32>
    %c3_365 = arith.constant 3 : index
    %c32_366 = arith.constant 32 : index
    %598 = memref.load %arg2[%c3_365, %c32_366] : memref<4x36xf32, #tpu.memory_space<smem>>
    %599 = vector.broadcast %598 : f32 to vector<14x14xf32>
    %600 = arith.mulf %599, %585 : vector<14x14xf32>
    %601 = arith.addf %583, %600 : vector<14x14xf32>
    %c0_367 = arith.constant 0 : index
    %c3_368 = arith.constant 3 : index
    %c2_369 = arith.constant 2 : index
    %c0_370 = arith.constant 0 : index
    %602 = vector.load %arg1[%c0_367, %c3_368, %c2_369, %c0_370] : memref<1x4x16x16xf32, #tpu.memory_space<vmem>>, vector<1x1x14x14xf32>
    %603 = vector.shape_cast %602 : vector<1x1x14x14xf32> to vector<14x14xf32>
    %c0_371 = arith.constant 0 : index
    %c33 = arith.constant 33 : index
    %604 = memref.load %arg2[%c0_371, %c33] : memref<4x36xf32, #tpu.memory_space<smem>>
    %605 = vector.broadcast %604 : f32 to vector<14x14xf32>
    %606 = arith.mulf %605, %603 : vector<14x14xf32>
    %607 = arith.addf %589, %606 : vector<14x14xf32>
    %c1_372 = arith.constant 1 : index
    %c33_373 = arith.constant 33 : index
    %608 = memref.load %arg2[%c1_372, %c33_373] : memref<4x36xf32, #tpu.memory_space<smem>>
    %609 = vector.broadcast %608 : f32 to vector<14x14xf32>
    %610 = arith.mulf %609, %603 : vector<14x14xf32>
    %611 = arith.addf %593, %610 : vector<14x14xf32>
    %c2_374 = arith.constant 2 : index
    %c33_375 = arith.constant 33 : index
    %612 = memref.load %arg2[%c2_374, %c33_375] : memref<4x36xf32, #tpu.memory_space<smem>>
    %613 = vector.broadcast %612 : f32 to vector<14x14xf32>
    %614 = arith.mulf %613, %603 : vector<14x14xf32>
    %615 = arith.addf %597, %614 : vector<14x14xf32>
    %c3_376 = arith.constant 3 : index
    %c33_377 = arith.constant 33 : index
    %616 = memref.load %arg2[%c3_376, %c33_377] : memref<4x36xf32, #tpu.memory_space<smem>>
    %617 = vector.broadcast %616 : f32 to vector<14x14xf32>
    %618 = arith.mulf %617, %603 : vector<14x14xf32>
    %619 = arith.addf %601, %618 : vector<14x14xf32>
    %c0_378 = arith.constant 0 : index
    %c3_379 = arith.constant 3 : index
    %c2_380 = arith.constant 2 : index
    %c1_381 = arith.constant 1 : index
    %620 = vector.load %arg1[%c0_378, %c3_379, %c2_380, %c1_381] : memref<1x4x16x16xf32, #tpu.memory_space<vmem>>, vector<1x1x14x14xf32>
    %621 = vector.shape_cast %620 : vector<1x1x14x14xf32> to vector<14x14xf32>
    %c0_382 = arith.constant 0 : index
    %c34 = arith.constant 34 : index
    %622 = memref.load %arg2[%c0_382, %c34] : memref<4x36xf32, #tpu.memory_space<smem>>
    %623 = vector.broadcast %622 : f32 to vector<14x14xf32>
    %624 = arith.mulf %623, %621 : vector<14x14xf32>
    %625 = arith.addf %607, %624 : vector<14x14xf32>
    %c1_383 = arith.constant 1 : index
    %c34_384 = arith.constant 34 : index
    %626 = memref.load %arg2[%c1_383, %c34_384] : memref<4x36xf32, #tpu.memory_space<smem>>
    %627 = vector.broadcast %626 : f32 to vector<14x14xf32>
    %628 = arith.mulf %627, %621 : vector<14x14xf32>
    %629 = arith.addf %611, %628 : vector<14x14xf32>
    %c2_385 = arith.constant 2 : index
    %c34_386 = arith.constant 34 : index
    %630 = memref.load %arg2[%c2_385, %c34_386] : memref<4x36xf32, #tpu.memory_space<smem>>
    %631 = vector.broadcast %630 : f32 to vector<14x14xf32>
    %632 = arith.mulf %631, %621 : vector<14x14xf32>
    %633 = arith.addf %615, %632 : vector<14x14xf32>
    %c3_387 = arith.constant 3 : index
    %c34_388 = arith.constant 34 : index
    %634 = memref.load %arg2[%c3_387, %c34_388] : memref<4x36xf32, #tpu.memory_space<smem>>
    %635 = vector.broadcast %634 : f32 to vector<14x14xf32>
    %636 = arith.mulf %635, %621 : vector<14x14xf32>
    %637 = arith.addf %619, %636 : vector<14x14xf32>
    %c0_389 = arith.constant 0 : index
    %c3_390 = arith.constant 3 : index
    %c2_391 = arith.constant 2 : index
    %c2_392 = arith.constant 2 : index
    %638 = vector.load %arg1[%c0_389, %c3_390, %c2_391, %c2_392] : memref<1x4x16x16xf32, #tpu.memory_space<vmem>>, vector<1x1x14x14xf32>
    %639 = vector.shape_cast %638 : vector<1x1x14x14xf32> to vector<14x14xf32>
    %c0_393 = arith.constant 0 : index
    %c35 = arith.constant 35 : index
    %640 = memref.load %arg2[%c0_393, %c35] : memref<4x36xf32, #tpu.memory_space<smem>>
    %641 = vector.broadcast %640 : f32 to vector<14x14xf32>
    %642 = arith.mulf %641, %639 : vector<14x14xf32>
    %643 = arith.addf %625, %642 : vector<14x14xf32>
    %c1_394 = arith.constant 1 : index
    %c35_395 = arith.constant 35 : index
    %644 = memref.load %arg2[%c1_394, %c35_395] : memref<4x36xf32, #tpu.memory_space<smem>>
    %645 = vector.broadcast %644 : f32 to vector<14x14xf32>
    %646 = arith.mulf %645, %639 : vector<14x14xf32>
    %647 = arith.addf %629, %646 : vector<14x14xf32>
    %c2_396 = arith.constant 2 : index
    %c35_397 = arith.constant 35 : index
    %648 = memref.load %arg2[%c2_396, %c35_397] : memref<4x36xf32, #tpu.memory_space<smem>>
    %649 = vector.broadcast %648 : f32 to vector<14x14xf32>
    %650 = arith.mulf %649, %639 : vector<14x14xf32>
    %651 = arith.addf %633, %650 : vector<14x14xf32>
    %c3_398 = arith.constant 3 : index
    %c35_399 = arith.constant 35 : index
    %652 = memref.load %arg2[%c3_398, %c35_399] : memref<4x36xf32, #tpu.memory_space<smem>>
    %653 = vector.broadcast %652 : f32 to vector<14x14xf32>
    %654 = arith.mulf %653, %639 : vector<14x14xf32>
    %655 = arith.addf %637, %654 : vector<14x14xf32>
    %cst = arith.constant 0.000000e+00 : f32
    %656 = vector.broadcast %cst : f32 to vector<14x14xf32>
    %657 = arith.maximumf %643, %656 : vector<14x14xf32>
    %658 = vector.extract_strided_slice %657 {offsets = [0, 0], sizes = [1, 14], strides = [1, 1]} : vector<14x14xf32> to vector<1x14xf32>
    %659 = vector.extract_strided_slice %657 {offsets = [1, 0], sizes = [1, 14], strides = [1, 1]} : vector<14x14xf32> to vector<1x14xf32>
    %660 = arith.maximumf %658, %659 : vector<1x14xf32>
    %661 = vector.extract_strided_slice %657 {offsets = [2, 0], sizes = [1, 14], strides = [1, 1]} : vector<14x14xf32> to vector<1x14xf32>
    %662 = vector.extract_strided_slice %657 {offsets = [3, 0], sizes = [1, 14], strides = [1, 1]} : vector<14x14xf32> to vector<1x14xf32>
    %663 = arith.maximumf %661, %662 : vector<1x14xf32>
    %664 = vector.extract_strided_slice %657 {offsets = [4, 0], sizes = [1, 14], strides = [1, 1]} : vector<14x14xf32> to vector<1x14xf32>
    %665 = vector.extract_strided_slice %657 {offsets = [5, 0], sizes = [1, 14], strides = [1, 1]} : vector<14x14xf32> to vector<1x14xf32>
    %666 = arith.maximumf %664, %665 : vector<1x14xf32>
    %667 = vector.extract_strided_slice %657 {offsets = [6, 0], sizes = [1, 14], strides = [1, 1]} : vector<14x14xf32> to vector<1x14xf32>
    %668 = vector.extract_strided_slice %657 {offsets = [7, 0], sizes = [1, 14], strides = [1, 1]} : vector<14x14xf32> to vector<1x14xf32>
    %669 = arith.maximumf %667, %668 : vector<1x14xf32>
    %670 = vector.extract_strided_slice %657 {offsets = [8, 0], sizes = [1, 14], strides = [1, 1]} : vector<14x14xf32> to vector<1x14xf32>
    %671 = vector.extract_strided_slice %657 {offsets = [9, 0], sizes = [1, 14], strides = [1, 1]} : vector<14x14xf32> to vector<1x14xf32>
    %672 = arith.maximumf %670, %671 : vector<1x14xf32>
    %673 = vector.extract_strided_slice %657 {offsets = [10, 0], sizes = [1, 14], strides = [1, 1]} : vector<14x14xf32> to vector<1x14xf32>
    %674 = vector.extract_strided_slice %657 {offsets = [11, 0], sizes = [1, 14], strides = [1, 1]} : vector<14x14xf32> to vector<1x14xf32>
    %675 = arith.maximumf %673, %674 : vector<1x14xf32>
    %676 = vector.extract_strided_slice %657 {offsets = [12, 0], sizes = [1, 14], strides = [1, 1]} : vector<14x14xf32> to vector<1x14xf32>
    %677 = vector.extract_strided_slice %657 {offsets = [13, 0], sizes = [1, 14], strides = [1, 1]} : vector<14x14xf32> to vector<1x14xf32>
    %678 = arith.maximumf %676, %677 : vector<1x14xf32>
    %679 = tpu.concatenate %660, %663, %666, %669, %672, %675, %678 in 0 : vector<1x14xf32>, vector<1x14xf32>, vector<1x14xf32>, vector<1x14xf32>, vector<1x14xf32>, vector<1x14xf32>, vector<1x14xf32> -> vector<7x14xf32>
    %680 = vector.extract_strided_slice %679 {offsets = [0, 0], sizes = [7, 1], strides = [1, 1]} : vector<7x14xf32> to vector<7x1xf32>
    %681 = vector.extract_strided_slice %679 {offsets = [0, 1], sizes = [7, 1], strides = [1, 1]} : vector<7x14xf32> to vector<7x1xf32>
    %682 = arith.maximumf %680, %681 : vector<7x1xf32>
    %683 = vector.extract_strided_slice %679 {offsets = [0, 2], sizes = [7, 1], strides = [1, 1]} : vector<7x14xf32> to vector<7x1xf32>
    %684 = vector.extract_strided_slice %679 {offsets = [0, 3], sizes = [7, 1], strides = [1, 1]} : vector<7x14xf32> to vector<7x1xf32>
    %685 = arith.maximumf %683, %684 : vector<7x1xf32>
    %686 = vector.extract_strided_slice %679 {offsets = [0, 4], sizes = [7, 1], strides = [1, 1]} : vector<7x14xf32> to vector<7x1xf32>
    %687 = vector.extract_strided_slice %679 {offsets = [0, 5], sizes = [7, 1], strides = [1, 1]} : vector<7x14xf32> to vector<7x1xf32>
    %688 = arith.maximumf %686, %687 : vector<7x1xf32>
    %689 = vector.extract_strided_slice %679 {offsets = [0, 6], sizes = [7, 1], strides = [1, 1]} : vector<7x14xf32> to vector<7x1xf32>
    %690 = vector.extract_strided_slice %679 {offsets = [0, 7], sizes = [7, 1], strides = [1, 1]} : vector<7x14xf32> to vector<7x1xf32>
    %691 = arith.maximumf %689, %690 : vector<7x1xf32>
    %692 = vector.extract_strided_slice %679 {offsets = [0, 8], sizes = [7, 1], strides = [1, 1]} : vector<7x14xf32> to vector<7x1xf32>
    %693 = vector.extract_strided_slice %679 {offsets = [0, 9], sizes = [7, 1], strides = [1, 1]} : vector<7x14xf32> to vector<7x1xf32>
    %694 = arith.maximumf %692, %693 : vector<7x1xf32>
    %695 = vector.extract_strided_slice %679 {offsets = [0, 10], sizes = [7, 1], strides = [1, 1]} : vector<7x14xf32> to vector<7x1xf32>
    %696 = vector.extract_strided_slice %679 {offsets = [0, 11], sizes = [7, 1], strides = [1, 1]} : vector<7x14xf32> to vector<7x1xf32>
    %697 = arith.maximumf %695, %696 : vector<7x1xf32>
    %698 = vector.extract_strided_slice %679 {offsets = [0, 12], sizes = [7, 1], strides = [1, 1]} : vector<7x14xf32> to vector<7x1xf32>
    %699 = vector.extract_strided_slice %679 {offsets = [0, 13], sizes = [7, 1], strides = [1, 1]} : vector<7x14xf32> to vector<7x1xf32>
    %700 = arith.maximumf %698, %699 : vector<7x1xf32>
    %701 = tpu.concatenate %682, %685, %688, %691, %694, %697, %700 in 1 : vector<7x1xf32>, vector<7x1xf32>, vector<7x1xf32>, vector<7x1xf32>, vector<7x1xf32>, vector<7x1xf32>, vector<7x1xf32> -> vector<7x7xf32>
    %cst_400 = arith.constant 0.000000e+00 : f32
    %702 = vector.broadcast %cst_400 : f32 to vector<14x14xf32>
    %703 = arith.maximumf %647, %702 : vector<14x14xf32>
    %704 = vector.extract_strided_slice %703 {offsets = [0, 0], sizes = [1, 14], strides = [1, 1]} : vector<14x14xf32> to vector<1x14xf32>
    %705 = vector.extract_strided_slice %703 {offsets = [1, 0], sizes = [1, 14], strides = [1, 1]} : vector<14x14xf32> to vector<1x14xf32>
    %706 = arith.maximumf %704, %705 : vector<1x14xf32>
    %707 = vector.extract_strided_slice %703 {offsets = [2, 0], sizes = [1, 14], strides = [1, 1]} : vector<14x14xf32> to vector<1x14xf32>
    %708 = vector.extract_strided_slice %703 {offsets = [3, 0], sizes = [1, 14], strides = [1, 1]} : vector<14x14xf32> to vector<1x14xf32>
    %709 = arith.maximumf %707, %708 : vector<1x14xf32>
    %710 = vector.extract_strided_slice %703 {offsets = [4, 0], sizes = [1, 14], strides = [1, 1]} : vector<14x14xf32> to vector<1x14xf32>
    %711 = vector.extract_strided_slice %703 {offsets = [5, 0], sizes = [1, 14], strides = [1, 1]} : vector<14x14xf32> to vector<1x14xf32>
    %712 = arith.maximumf %710, %711 : vector<1x14xf32>
    %713 = vector.extract_strided_slice %703 {offsets = [6, 0], sizes = [1, 14], strides = [1, 1]} : vector<14x14xf32> to vector<1x14xf32>
    %714 = vector.extract_strided_slice %703 {offsets = [7, 0], sizes = [1, 14], strides = [1, 1]} : vector<14x14xf32> to vector<1x14xf32>
    %715 = arith.maximumf %713, %714 : vector<1x14xf32>
    %716 = vector.extract_strided_slice %703 {offsets = [8, 0], sizes = [1, 14], strides = [1, 1]} : vector<14x14xf32> to vector<1x14xf32>
    %717 = vector.extract_strided_slice %703 {offsets = [9, 0], sizes = [1, 14], strides = [1, 1]} : vector<14x14xf32> to vector<1x14xf32>
    %718 = arith.maximumf %716, %717 : vector<1x14xf32>
    %719 = vector.extract_strided_slice %703 {offsets = [10, 0], sizes = [1, 14], strides = [1, 1]} : vector<14x14xf32> to vector<1x14xf32>
    %720 = vector.extract_strided_slice %703 {offsets = [11, 0], sizes = [1, 14], strides = [1, 1]} : vector<14x14xf32> to vector<1x14xf32>
    %721 = arith.maximumf %719, %720 : vector<1x14xf32>
    %722 = vector.extract_strided_slice %703 {offsets = [12, 0], sizes = [1, 14], strides = [1, 1]} : vector<14x14xf32> to vector<1x14xf32>
    %723 = vector.extract_strided_slice %703 {offsets = [13, 0], sizes = [1, 14], strides = [1, 1]} : vector<14x14xf32> to vector<1x14xf32>
    %724 = arith.maximumf %722, %723 : vector<1x14xf32>
    %725 = tpu.concatenate %706, %709, %712, %715, %718, %721, %724 in 0 : vector<1x14xf32>, vector<1x14xf32>, vector<1x14xf32>, vector<1x14xf32>, vector<1x14xf32>, vector<1x14xf32>, vector<1x14xf32> -> vector<7x14xf32>
    %726 = vector.extract_strided_slice %725 {offsets = [0, 0], sizes = [7, 1], strides = [1, 1]} : vector<7x14xf32> to vector<7x1xf32>
    %727 = vector.extract_strided_slice %725 {offsets = [0, 1], sizes = [7, 1], strides = [1, 1]} : vector<7x14xf32> to vector<7x1xf32>
    %728 = arith.maximumf %726, %727 : vector<7x1xf32>
    %729 = vector.extract_strided_slice %725 {offsets = [0, 2], sizes = [7, 1], strides = [1, 1]} : vector<7x14xf32> to vector<7x1xf32>
    %730 = vector.extract_strided_slice %725 {offsets = [0, 3], sizes = [7, 1], strides = [1, 1]} : vector<7x14xf32> to vector<7x1xf32>
    %731 = arith.maximumf %729, %730 : vector<7x1xf32>
    %732 = vector.extract_strided_slice %725 {offsets = [0, 4], sizes = [7, 1], strides = [1, 1]} : vector<7x14xf32> to vector<7x1xf32>
    %733 = vector.extract_strided_slice %725 {offsets = [0, 5], sizes = [7, 1], strides = [1, 1]} : vector<7x14xf32> to vector<7x1xf32>
    %734 = arith.maximumf %732, %733 : vector<7x1xf32>
    %735 = vector.extract_strided_slice %725 {offsets = [0, 6], sizes = [7, 1], strides = [1, 1]} : vector<7x14xf32> to vector<7x1xf32>
    %736 = vector.extract_strided_slice %725 {offsets = [0, 7], sizes = [7, 1], strides = [1, 1]} : vector<7x14xf32> to vector<7x1xf32>
    %737 = arith.maximumf %735, %736 : vector<7x1xf32>
    %738 = vector.extract_strided_slice %725 {offsets = [0, 8], sizes = [7, 1], strides = [1, 1]} : vector<7x14xf32> to vector<7x1xf32>
    %739 = vector.extract_strided_slice %725 {offsets = [0, 9], sizes = [7, 1], strides = [1, 1]} : vector<7x14xf32> to vector<7x1xf32>
    %740 = arith.maximumf %738, %739 : vector<7x1xf32>
    %741 = vector.extract_strided_slice %725 {offsets = [0, 10], sizes = [7, 1], strides = [1, 1]} : vector<7x14xf32> to vector<7x1xf32>
    %742 = vector.extract_strided_slice %725 {offsets = [0, 11], sizes = [7, 1], strides = [1, 1]} : vector<7x14xf32> to vector<7x1xf32>
    %743 = arith.maximumf %741, %742 : vector<7x1xf32>
    %744 = vector.extract_strided_slice %725 {offsets = [0, 12], sizes = [7, 1], strides = [1, 1]} : vector<7x14xf32> to vector<7x1xf32>
    %745 = vector.extract_strided_slice %725 {offsets = [0, 13], sizes = [7, 1], strides = [1, 1]} : vector<7x14xf32> to vector<7x1xf32>
    %746 = arith.maximumf %744, %745 : vector<7x1xf32>
    %747 = tpu.concatenate %728, %731, %734, %737, %740, %743, %746 in 1 : vector<7x1xf32>, vector<7x1xf32>, vector<7x1xf32>, vector<7x1xf32>, vector<7x1xf32>, vector<7x1xf32>, vector<7x1xf32> -> vector<7x7xf32>
    %cst_401 = arith.constant 0.000000e+00 : f32
    %748 = vector.broadcast %cst_401 : f32 to vector<14x14xf32>
    %749 = arith.maximumf %651, %748 : vector<14x14xf32>
    %750 = vector.extract_strided_slice %749 {offsets = [0, 0], sizes = [1, 14], strides = [1, 1]} : vector<14x14xf32> to vector<1x14xf32>
    %751 = vector.extract_strided_slice %749 {offsets = [1, 0], sizes = [1, 14], strides = [1, 1]} : vector<14x14xf32> to vector<1x14xf32>
    %752 = arith.maximumf %750, %751 : vector<1x14xf32>
    %753 = vector.extract_strided_slice %749 {offsets = [2, 0], sizes = [1, 14], strides = [1, 1]} : vector<14x14xf32> to vector<1x14xf32>
    %754 = vector.extract_strided_slice %749 {offsets = [3, 0], sizes = [1, 14], strides = [1, 1]} : vector<14x14xf32> to vector<1x14xf32>
    %755 = arith.maximumf %753, %754 : vector<1x14xf32>
    %756 = vector.extract_strided_slice %749 {offsets = [4, 0], sizes = [1, 14], strides = [1, 1]} : vector<14x14xf32> to vector<1x14xf32>
    %757 = vector.extract_strided_slice %749 {offsets = [5, 0], sizes = [1, 14], strides = [1, 1]} : vector<14x14xf32> to vector<1x14xf32>
    %758 = arith.maximumf %756, %757 : vector<1x14xf32>
    %759 = vector.extract_strided_slice %749 {offsets = [6, 0], sizes = [1, 14], strides = [1, 1]} : vector<14x14xf32> to vector<1x14xf32>
    %760 = vector.extract_strided_slice %749 {offsets = [7, 0], sizes = [1, 14], strides = [1, 1]} : vector<14x14xf32> to vector<1x14xf32>
    %761 = arith.maximumf %759, %760 : vector<1x14xf32>
    %762 = vector.extract_strided_slice %749 {offsets = [8, 0], sizes = [1, 14], strides = [1, 1]} : vector<14x14xf32> to vector<1x14xf32>
    %763 = vector.extract_strided_slice %749 {offsets = [9, 0], sizes = [1, 14], strides = [1, 1]} : vector<14x14xf32> to vector<1x14xf32>
    %764 = arith.maximumf %762, %763 : vector<1x14xf32>
    %765 = vector.extract_strided_slice %749 {offsets = [10, 0], sizes = [1, 14], strides = [1, 1]} : vector<14x14xf32> to vector<1x14xf32>
    %766 = vector.extract_strided_slice %749 {offsets = [11, 0], sizes = [1, 14], strides = [1, 1]} : vector<14x14xf32> to vector<1x14xf32>
    %767 = arith.maximumf %765, %766 : vector<1x14xf32>
    %768 = vector.extract_strided_slice %749 {offsets = [12, 0], sizes = [1, 14], strides = [1, 1]} : vector<14x14xf32> to vector<1x14xf32>
    %769 = vector.extract_strided_slice %749 {offsets = [13, 0], sizes = [1, 14], strides = [1, 1]} : vector<14x14xf32> to vector<1x14xf32>
    %770 = arith.maximumf %768, %769 : vector<1x14xf32>
    %771 = tpu.concatenate %752, %755, %758, %761, %764, %767, %770 in 0 : vector<1x14xf32>, vector<1x14xf32>, vector<1x14xf32>, vector<1x14xf32>, vector<1x14xf32>, vector<1x14xf32>, vector<1x14xf32> -> vector<7x14xf32>
    %772 = vector.extract_strided_slice %771 {offsets = [0, 0], sizes = [7, 1], strides = [1, 1]} : vector<7x14xf32> to vector<7x1xf32>
    %773 = vector.extract_strided_slice %771 {offsets = [0, 1], sizes = [7, 1], strides = [1, 1]} : vector<7x14xf32> to vector<7x1xf32>
    %774 = arith.maximumf %772, %773 : vector<7x1xf32>
    %775 = vector.extract_strided_slice %771 {offsets = [0, 2], sizes = [7, 1], strides = [1, 1]} : vector<7x14xf32> to vector<7x1xf32>
    %776 = vector.extract_strided_slice %771 {offsets = [0, 3], sizes = [7, 1], strides = [1, 1]} : vector<7x14xf32> to vector<7x1xf32>
    %777 = arith.maximumf %775, %776 : vector<7x1xf32>
    %778 = vector.extract_strided_slice %771 {offsets = [0, 4], sizes = [7, 1], strides = [1, 1]} : vector<7x14xf32> to vector<7x1xf32>
    %779 = vector.extract_strided_slice %771 {offsets = [0, 5], sizes = [7, 1], strides = [1, 1]} : vector<7x14xf32> to vector<7x1xf32>
    %780 = arith.maximumf %778, %779 : vector<7x1xf32>
    %781 = vector.extract_strided_slice %771 {offsets = [0, 6], sizes = [7, 1], strides = [1, 1]} : vector<7x14xf32> to vector<7x1xf32>
    %782 = vector.extract_strided_slice %771 {offsets = [0, 7], sizes = [7, 1], strides = [1, 1]} : vector<7x14xf32> to vector<7x1xf32>
    %783 = arith.maximumf %781, %782 : vector<7x1xf32>
    %784 = vector.extract_strided_slice %771 {offsets = [0, 8], sizes = [7, 1], strides = [1, 1]} : vector<7x14xf32> to vector<7x1xf32>
    %785 = vector.extract_strided_slice %771 {offsets = [0, 9], sizes = [7, 1], strides = [1, 1]} : vector<7x14xf32> to vector<7x1xf32>
    %786 = arith.maximumf %784, %785 : vector<7x1xf32>
    %787 = vector.extract_strided_slice %771 {offsets = [0, 10], sizes = [7, 1], strides = [1, 1]} : vector<7x14xf32> to vector<7x1xf32>
    %788 = vector.extract_strided_slice %771 {offsets = [0, 11], sizes = [7, 1], strides = [1, 1]} : vector<7x14xf32> to vector<7x1xf32>
    %789 = arith.maximumf %787, %788 : vector<7x1xf32>
    %790 = vector.extract_strided_slice %771 {offsets = [0, 12], sizes = [7, 1], strides = [1, 1]} : vector<7x14xf32> to vector<7x1xf32>
    %791 = vector.extract_strided_slice %771 {offsets = [0, 13], sizes = [7, 1], strides = [1, 1]} : vector<7x14xf32> to vector<7x1xf32>
    %792 = arith.maximumf %790, %791 : vector<7x1xf32>
    %793 = tpu.concatenate %774, %777, %780, %783, %786, %789, %792 in 1 : vector<7x1xf32>, vector<7x1xf32>, vector<7x1xf32>, vector<7x1xf32>, vector<7x1xf32>, vector<7x1xf32>, vector<7x1xf32> -> vector<7x7xf32>
    %cst_402 = arith.constant 0.000000e+00 : f32
    %794 = vector.broadcast %cst_402 : f32 to vector<14x14xf32>
    %795 = arith.maximumf %655, %794 : vector<14x14xf32>
    %796 = vector.extract_strided_slice %795 {offsets = [0, 0], sizes = [1, 14], strides = [1, 1]} : vector<14x14xf32> to vector<1x14xf32>
    %797 = vector.extract_strided_slice %795 {offsets = [1, 0], sizes = [1, 14], strides = [1, 1]} : vector<14x14xf32> to vector<1x14xf32>
    %798 = arith.maximumf %796, %797 : vector<1x14xf32>
    %799 = vector.extract_strided_slice %795 {offsets = [2, 0], sizes = [1, 14], strides = [1, 1]} : vector<14x14xf32> to vector<1x14xf32>
    %800 = vector.extract_strided_slice %795 {offsets = [3, 0], sizes = [1, 14], strides = [1, 1]} : vector<14x14xf32> to vector<1x14xf32>
    %801 = arith.maximumf %799, %800 : vector<1x14xf32>
    %802 = vector.extract_strided_slice %795 {offsets = [4, 0], sizes = [1, 14], strides = [1, 1]} : vector<14x14xf32> to vector<1x14xf32>
    %803 = vector.extract_strided_slice %795 {offsets = [5, 0], sizes = [1, 14], strides = [1, 1]} : vector<14x14xf32> to vector<1x14xf32>
    %804 = arith.maximumf %802, %803 : vector<1x14xf32>
    %805 = vector.extract_strided_slice %795 {offsets = [6, 0], sizes = [1, 14], strides = [1, 1]} : vector<14x14xf32> to vector<1x14xf32>
    %806 = vector.extract_strided_slice %795 {offsets = [7, 0], sizes = [1, 14], strides = [1, 1]} : vector<14x14xf32> to vector<1x14xf32>
    %807 = arith.maximumf %805, %806 : vector<1x14xf32>
    %808 = vector.extract_strided_slice %795 {offsets = [8, 0], sizes = [1, 14], strides = [1, 1]} : vector<14x14xf32> to vector<1x14xf32>
    %809 = vector.extract_strided_slice %795 {offsets = [9, 0], sizes = [1, 14], strides = [1, 1]} : vector<14x14xf32> to vector<1x14xf32>
    %810 = arith.maximumf %808, %809 : vector<1x14xf32>
    %811 = vector.extract_strided_slice %795 {offsets = [10, 0], sizes = [1, 14], strides = [1, 1]} : vector<14x14xf32> to vector<1x14xf32>
    %812 = vector.extract_strided_slice %795 {offsets = [11, 0], sizes = [1, 14], strides = [1, 1]} : vector<14x14xf32> to vector<1x14xf32>
    %813 = arith.maximumf %811, %812 : vector<1x14xf32>
    %814 = vector.extract_strided_slice %795 {offsets = [12, 0], sizes = [1, 14], strides = [1, 1]} : vector<14x14xf32> to vector<1x14xf32>
    %815 = vector.extract_strided_slice %795 {offsets = [13, 0], sizes = [1, 14], strides = [1, 1]} : vector<14x14xf32> to vector<1x14xf32>
    %816 = arith.maximumf %814, %815 : vector<1x14xf32>
    %817 = tpu.concatenate %798, %801, %804, %807, %810, %813, %816 in 0 : vector<1x14xf32>, vector<1x14xf32>, vector<1x14xf32>, vector<1x14xf32>, vector<1x14xf32>, vector<1x14xf32>, vector<1x14xf32> -> vector<7x14xf32>
    %818 = vector.extract_strided_slice %817 {offsets = [0, 0], sizes = [7, 1], strides = [1, 1]} : vector<7x14xf32> to vector<7x1xf32>
    %819 = vector.extract_strided_slice %817 {offsets = [0, 1], sizes = [7, 1], strides = [1, 1]} : vector<7x14xf32> to vector<7x1xf32>
    %820 = arith.maximumf %818, %819 : vector<7x1xf32>
    %821 = vector.extract_strided_slice %817 {offsets = [0, 2], sizes = [7, 1], strides = [1, 1]} : vector<7x14xf32> to vector<7x1xf32>
    %822 = vector.extract_strided_slice %817 {offsets = [0, 3], sizes = [7, 1], strides = [1, 1]} : vector<7x14xf32> to vector<7x1xf32>
    %823 = arith.maximumf %821, %822 : vector<7x1xf32>
    %824 = vector.extract_strided_slice %817 {offsets = [0, 4], sizes = [7, 1], strides = [1, 1]} : vector<7x14xf32> to vector<7x1xf32>
    %825 = vector.extract_strided_slice %817 {offsets = [0, 5], sizes = [7, 1], strides = [1, 1]} : vector<7x14xf32> to vector<7x1xf32>
    %826 = arith.maximumf %824, %825 : vector<7x1xf32>
    %827 = vector.extract_strided_slice %817 {offsets = [0, 6], sizes = [7, 1], strides = [1, 1]} : vector<7x14xf32> to vector<7x1xf32>
    %828 = vector.extract_strided_slice %817 {offsets = [0, 7], sizes = [7, 1], strides = [1, 1]} : vector<7x14xf32> to vector<7x1xf32>
    %829 = arith.maximumf %827, %828 : vector<7x1xf32>
    %830 = vector.extract_strided_slice %817 {offsets = [0, 8], sizes = [7, 1], strides = [1, 1]} : vector<7x14xf32> to vector<7x1xf32>
    %831 = vector.extract_strided_slice %817 {offsets = [0, 9], sizes = [7, 1], strides = [1, 1]} : vector<7x14xf32> to vector<7x1xf32>
    %832 = arith.maximumf %830, %831 : vector<7x1xf32>
    %833 = vector.extract_strided_slice %817 {offsets = [0, 10], sizes = [7, 1], strides = [1, 1]} : vector<7x14xf32> to vector<7x1xf32>
    %834 = vector.extract_strided_slice %817 {offsets = [0, 11], sizes = [7, 1], strides = [1, 1]} : vector<7x14xf32> to vector<7x1xf32>
    %835 = arith.maximumf %833, %834 : vector<7x1xf32>
    %836 = vector.extract_strided_slice %817 {offsets = [0, 12], sizes = [7, 1], strides = [1, 1]} : vector<7x14xf32> to vector<7x1xf32>
    %837 = vector.extract_strided_slice %817 {offsets = [0, 13], sizes = [7, 1], strides = [1, 1]} : vector<7x14xf32> to vector<7x1xf32>
    %838 = arith.maximumf %836, %837 : vector<7x1xf32>
    %839 = tpu.concatenate %820, %823, %826, %829, %832, %835, %838 in 1 : vector<7x1xf32>, vector<7x1xf32>, vector<7x1xf32>, vector<7x1xf32>, vector<7x1xf32>, vector<7x1xf32>, vector<7x1xf32> -> vector<7x7xf32>
    %c0_403 = arith.constant 0 : index
    %840 = memref.load %arg5[%c0_403] : memref<4xf32, #tpu.memory_space<smem>>
    %841 = vector.broadcast %840 : f32 to vector<5x5xf32>
    %c1_404 = arith.constant 1 : index
    %842 = memref.load %arg5[%c1_404] : memref<4xf32, #tpu.memory_space<smem>>
    %843 = vector.broadcast %842 : f32 to vector<5x5xf32>
    %c2_405 = arith.constant 2 : index
    %844 = memref.load %arg5[%c2_405] : memref<4xf32, #tpu.memory_space<smem>>
    %845 = vector.broadcast %844 : f32 to vector<5x5xf32>
    %c3_406 = arith.constant 3 : index
    %846 = memref.load %arg5[%c3_406] : memref<4xf32, #tpu.memory_space<smem>>
    %847 = vector.broadcast %846 : f32 to vector<5x5xf32>
    %848 = vector.extract_strided_slice %701 {offsets = [0, 0], sizes = [5, 5], strides = [1, 1]} : vector<7x7xf32> to vector<5x5xf32>
    %c0_407 = arith.constant 0 : index
    %c0_408 = arith.constant 0 : index
    %849 = memref.load %arg4[%c0_407, %c0_408] : memref<4x36xf32, #tpu.memory_space<smem>>
    %850 = vector.broadcast %849 : f32 to vector<5x5xf32>
    %851 = arith.mulf %850, %848 : vector<5x5xf32>
    %852 = arith.addf %841, %851 : vector<5x5xf32>
    %c1_409 = arith.constant 1 : index
    %c0_410 = arith.constant 0 : index
    %853 = memref.load %arg4[%c1_409, %c0_410] : memref<4x36xf32, #tpu.memory_space<smem>>
    %854 = vector.broadcast %853 : f32 to vector<5x5xf32>
    %855 = arith.mulf %854, %848 : vector<5x5xf32>
    %856 = arith.addf %843, %855 : vector<5x5xf32>
    %c2_411 = arith.constant 2 : index
    %c0_412 = arith.constant 0 : index
    %857 = memref.load %arg4[%c2_411, %c0_412] : memref<4x36xf32, #tpu.memory_space<smem>>
    %858 = vector.broadcast %857 : f32 to vector<5x5xf32>
    %859 = arith.mulf %858, %848 : vector<5x5xf32>
    %860 = arith.addf %845, %859 : vector<5x5xf32>
    %c3_413 = arith.constant 3 : index
    %c0_414 = arith.constant 0 : index
    %861 = memref.load %arg4[%c3_413, %c0_414] : memref<4x36xf32, #tpu.memory_space<smem>>
    %862 = vector.broadcast %861 : f32 to vector<5x5xf32>
    %863 = arith.mulf %862, %848 : vector<5x5xf32>
    %864 = arith.addf %847, %863 : vector<5x5xf32>
    %865 = vector.extract_strided_slice %701 {offsets = [0, 1], sizes = [5, 5], strides = [1, 1]} : vector<7x7xf32> to vector<5x5xf32>
    %c0_415 = arith.constant 0 : index
    %c1_416 = arith.constant 1 : index
    %866 = memref.load %arg4[%c0_415, %c1_416] : memref<4x36xf32, #tpu.memory_space<smem>>
    %867 = vector.broadcast %866 : f32 to vector<5x5xf32>
    %868 = arith.mulf %867, %865 : vector<5x5xf32>
    %869 = arith.addf %852, %868 : vector<5x5xf32>
    %c1_417 = arith.constant 1 : index
    %c1_418 = arith.constant 1 : index
    %870 = memref.load %arg4[%c1_417, %c1_418] : memref<4x36xf32, #tpu.memory_space<smem>>
    %871 = vector.broadcast %870 : f32 to vector<5x5xf32>
    %872 = arith.mulf %871, %865 : vector<5x5xf32>
    %873 = arith.addf %856, %872 : vector<5x5xf32>
    %c2_419 = arith.constant 2 : index
    %c1_420 = arith.constant 1 : index
    %874 = memref.load %arg4[%c2_419, %c1_420] : memref<4x36xf32, #tpu.memory_space<smem>>
    %875 = vector.broadcast %874 : f32 to vector<5x5xf32>
    %876 = arith.mulf %875, %865 : vector<5x5xf32>
    %877 = arith.addf %860, %876 : vector<5x5xf32>
    %c3_421 = arith.constant 3 : index
    %c1_422 = arith.constant 1 : index
    %878 = memref.load %arg4[%c3_421, %c1_422] : memref<4x36xf32, #tpu.memory_space<smem>>
    %879 = vector.broadcast %878 : f32 to vector<5x5xf32>
    %880 = arith.mulf %879, %865 : vector<5x5xf32>
    %881 = arith.addf %864, %880 : vector<5x5xf32>
    %882 = vector.extract_strided_slice %701 {offsets = [0, 2], sizes = [5, 5], strides = [1, 1]} : vector<7x7xf32> to vector<5x5xf32>
    %c0_423 = arith.constant 0 : index
    %c2_424 = arith.constant 2 : index
    %883 = memref.load %arg4[%c0_423, %c2_424] : memref<4x36xf32, #tpu.memory_space<smem>>
    %884 = vector.broadcast %883 : f32 to vector<5x5xf32>
    %885 = arith.mulf %884, %882 : vector<5x5xf32>
    %886 = arith.addf %869, %885 : vector<5x5xf32>
    %c1_425 = arith.constant 1 : index
    %c2_426 = arith.constant 2 : index
    %887 = memref.load %arg4[%c1_425, %c2_426] : memref<4x36xf32, #tpu.memory_space<smem>>
    %888 = vector.broadcast %887 : f32 to vector<5x5xf32>
    %889 = arith.mulf %888, %882 : vector<5x5xf32>
    %890 = arith.addf %873, %889 : vector<5x5xf32>
    %c2_427 = arith.constant 2 : index
    %c2_428 = arith.constant 2 : index
    %891 = memref.load %arg4[%c2_427, %c2_428] : memref<4x36xf32, #tpu.memory_space<smem>>
    %892 = vector.broadcast %891 : f32 to vector<5x5xf32>
    %893 = arith.mulf %892, %882 : vector<5x5xf32>
    %894 = arith.addf %877, %893 : vector<5x5xf32>
    %c3_429 = arith.constant 3 : index
    %c2_430 = arith.constant 2 : index
    %895 = memref.load %arg4[%c3_429, %c2_430] : memref<4x36xf32, #tpu.memory_space<smem>>
    %896 = vector.broadcast %895 : f32 to vector<5x5xf32>
    %897 = arith.mulf %896, %882 : vector<5x5xf32>
    %898 = arith.addf %881, %897 : vector<5x5xf32>
    %899 = vector.extract_strided_slice %701 {offsets = [1, 0], sizes = [5, 5], strides = [1, 1]} : vector<7x7xf32> to vector<5x5xf32>
    %c0_431 = arith.constant 0 : index
    %c3_432 = arith.constant 3 : index
    %900 = memref.load %arg4[%c0_431, %c3_432] : memref<4x36xf32, #tpu.memory_space<smem>>
    %901 = vector.broadcast %900 : f32 to vector<5x5xf32>
    %902 = arith.mulf %901, %899 : vector<5x5xf32>
    %903 = arith.addf %886, %902 : vector<5x5xf32>
    %c1_433 = arith.constant 1 : index
    %c3_434 = arith.constant 3 : index
    %904 = memref.load %arg4[%c1_433, %c3_434] : memref<4x36xf32, #tpu.memory_space<smem>>
    %905 = vector.broadcast %904 : f32 to vector<5x5xf32>
    %906 = arith.mulf %905, %899 : vector<5x5xf32>
    %907 = arith.addf %890, %906 : vector<5x5xf32>
    %c2_435 = arith.constant 2 : index
    %c3_436 = arith.constant 3 : index
    %908 = memref.load %arg4[%c2_435, %c3_436] : memref<4x36xf32, #tpu.memory_space<smem>>
    %909 = vector.broadcast %908 : f32 to vector<5x5xf32>
    %910 = arith.mulf %909, %899 : vector<5x5xf32>
    %911 = arith.addf %894, %910 : vector<5x5xf32>
    %c3_437 = arith.constant 3 : index
    %c3_438 = arith.constant 3 : index
    %912 = memref.load %arg4[%c3_437, %c3_438] : memref<4x36xf32, #tpu.memory_space<smem>>
    %913 = vector.broadcast %912 : f32 to vector<5x5xf32>
    %914 = arith.mulf %913, %899 : vector<5x5xf32>
    %915 = arith.addf %898, %914 : vector<5x5xf32>
    %916 = vector.extract_strided_slice %701 {offsets = [1, 1], sizes = [5, 5], strides = [1, 1]} : vector<7x7xf32> to vector<5x5xf32>
    %c0_439 = arith.constant 0 : index
    %c4_440 = arith.constant 4 : index
    %917 = memref.load %arg4[%c0_439, %c4_440] : memref<4x36xf32, #tpu.memory_space<smem>>
    %918 = vector.broadcast %917 : f32 to vector<5x5xf32>
    %919 = arith.mulf %918, %916 : vector<5x5xf32>
    %920 = arith.addf %903, %919 : vector<5x5xf32>
    %c1_441 = arith.constant 1 : index
    %c4_442 = arith.constant 4 : index
    %921 = memref.load %arg4[%c1_441, %c4_442] : memref<4x36xf32, #tpu.memory_space<smem>>
    %922 = vector.broadcast %921 : f32 to vector<5x5xf32>
    %923 = arith.mulf %922, %916 : vector<5x5xf32>
    %924 = arith.addf %907, %923 : vector<5x5xf32>
    %c2_443 = arith.constant 2 : index
    %c4_444 = arith.constant 4 : index
    %925 = memref.load %arg4[%c2_443, %c4_444] : memref<4x36xf32, #tpu.memory_space<smem>>
    %926 = vector.broadcast %925 : f32 to vector<5x5xf32>
    %927 = arith.mulf %926, %916 : vector<5x5xf32>
    %928 = arith.addf %911, %927 : vector<5x5xf32>
    %c3_445 = arith.constant 3 : index
    %c4_446 = arith.constant 4 : index
    %929 = memref.load %arg4[%c3_445, %c4_446] : memref<4x36xf32, #tpu.memory_space<smem>>
    %930 = vector.broadcast %929 : f32 to vector<5x5xf32>
    %931 = arith.mulf %930, %916 : vector<5x5xf32>
    %932 = arith.addf %915, %931 : vector<5x5xf32>
    %933 = vector.extract_strided_slice %701 {offsets = [1, 2], sizes = [5, 5], strides = [1, 1]} : vector<7x7xf32> to vector<5x5xf32>
    %c0_447 = arith.constant 0 : index
    %c5_448 = arith.constant 5 : index
    %934 = memref.load %arg4[%c0_447, %c5_448] : memref<4x36xf32, #tpu.memory_space<smem>>
    %935 = vector.broadcast %934 : f32 to vector<5x5xf32>
    %936 = arith.mulf %935, %933 : vector<5x5xf32>
    %937 = arith.addf %920, %936 : vector<5x5xf32>
    %c1_449 = arith.constant 1 : index
    %c5_450 = arith.constant 5 : index
    %938 = memref.load %arg4[%c1_449, %c5_450] : memref<4x36xf32, #tpu.memory_space<smem>>
    %939 = vector.broadcast %938 : f32 to vector<5x5xf32>
    %940 = arith.mulf %939, %933 : vector<5x5xf32>
    %941 = arith.addf %924, %940 : vector<5x5xf32>
    %c2_451 = arith.constant 2 : index
    %c5_452 = arith.constant 5 : index
    %942 = memref.load %arg4[%c2_451, %c5_452] : memref<4x36xf32, #tpu.memory_space<smem>>
    %943 = vector.broadcast %942 : f32 to vector<5x5xf32>
    %944 = arith.mulf %943, %933 : vector<5x5xf32>
    %945 = arith.addf %928, %944 : vector<5x5xf32>
    %c3_453 = arith.constant 3 : index
    %c5_454 = arith.constant 5 : index
    %946 = memref.load %arg4[%c3_453, %c5_454] : memref<4x36xf32, #tpu.memory_space<smem>>
    %947 = vector.broadcast %946 : f32 to vector<5x5xf32>
    %948 = arith.mulf %947, %933 : vector<5x5xf32>
    %949 = arith.addf %932, %948 : vector<5x5xf32>
    %950 = vector.extract_strided_slice %701 {offsets = [2, 0], sizes = [5, 5], strides = [1, 1]} : vector<7x7xf32> to vector<5x5xf32>
    %c0_455 = arith.constant 0 : index
    %c6_456 = arith.constant 6 : index
    %951 = memref.load %arg4[%c0_455, %c6_456] : memref<4x36xf32, #tpu.memory_space<smem>>
    %952 = vector.broadcast %951 : f32 to vector<5x5xf32>
    %953 = arith.mulf %952, %950 : vector<5x5xf32>
    %954 = arith.addf %937, %953 : vector<5x5xf32>
    %c1_457 = arith.constant 1 : index
    %c6_458 = arith.constant 6 : index
    %955 = memref.load %arg4[%c1_457, %c6_458] : memref<4x36xf32, #tpu.memory_space<smem>>
    %956 = vector.broadcast %955 : f32 to vector<5x5xf32>
    %957 = arith.mulf %956, %950 : vector<5x5xf32>
    %958 = arith.addf %941, %957 : vector<5x5xf32>
    %c2_459 = arith.constant 2 : index
    %c6_460 = arith.constant 6 : index
    %959 = memref.load %arg4[%c2_459, %c6_460] : memref<4x36xf32, #tpu.memory_space<smem>>
    %960 = vector.broadcast %959 : f32 to vector<5x5xf32>
    %961 = arith.mulf %960, %950 : vector<5x5xf32>
    %962 = arith.addf %945, %961 : vector<5x5xf32>
    %c3_461 = arith.constant 3 : index
    %c6_462 = arith.constant 6 : index
    %963 = memref.load %arg4[%c3_461, %c6_462] : memref<4x36xf32, #tpu.memory_space<smem>>
    %964 = vector.broadcast %963 : f32 to vector<5x5xf32>
    %965 = arith.mulf %964, %950 : vector<5x5xf32>
    %966 = arith.addf %949, %965 : vector<5x5xf32>
    %967 = vector.extract_strided_slice %701 {offsets = [2, 1], sizes = [5, 5], strides = [1, 1]} : vector<7x7xf32> to vector<5x5xf32>
    %c0_463 = arith.constant 0 : index
    %c7_464 = arith.constant 7 : index
    %968 = memref.load %arg4[%c0_463, %c7_464] : memref<4x36xf32, #tpu.memory_space<smem>>
    %969 = vector.broadcast %968 : f32 to vector<5x5xf32>
    %970 = arith.mulf %969, %967 : vector<5x5xf32>
    %971 = arith.addf %954, %970 : vector<5x5xf32>
    %c1_465 = arith.constant 1 : index
    %c7_466 = arith.constant 7 : index
    %972 = memref.load %arg4[%c1_465, %c7_466] : memref<4x36xf32, #tpu.memory_space<smem>>
    %973 = vector.broadcast %972 : f32 to vector<5x5xf32>
    %974 = arith.mulf %973, %967 : vector<5x5xf32>
    %975 = arith.addf %958, %974 : vector<5x5xf32>
    %c2_467 = arith.constant 2 : index
    %c7_468 = arith.constant 7 : index
    %976 = memref.load %arg4[%c2_467, %c7_468] : memref<4x36xf32, #tpu.memory_space<smem>>
    %977 = vector.broadcast %976 : f32 to vector<5x5xf32>
    %978 = arith.mulf %977, %967 : vector<5x5xf32>
    %979 = arith.addf %962, %978 : vector<5x5xf32>
    %c3_469 = arith.constant 3 : index
    %c7_470 = arith.constant 7 : index
    %980 = memref.load %arg4[%c3_469, %c7_470] : memref<4x36xf32, #tpu.memory_space<smem>>
    %981 = vector.broadcast %980 : f32 to vector<5x5xf32>
    %982 = arith.mulf %981, %967 : vector<5x5xf32>
    %983 = arith.addf %966, %982 : vector<5x5xf32>
    %984 = vector.extract_strided_slice %701 {offsets = [2, 2], sizes = [5, 5], strides = [1, 1]} : vector<7x7xf32> to vector<5x5xf32>
    %c0_471 = arith.constant 0 : index
    %c8_472 = arith.constant 8 : index
    %985 = memref.load %arg4[%c0_471, %c8_472] : memref<4x36xf32, #tpu.memory_space<smem>>
    %986 = vector.broadcast %985 : f32 to vector<5x5xf32>
    %987 = arith.mulf %986, %984 : vector<5x5xf32>
    %988 = arith.addf %971, %987 : vector<5x5xf32>
    %c1_473 = arith.constant 1 : index
    %c8_474 = arith.constant 8 : index
    %989 = memref.load %arg4[%c1_473, %c8_474] : memref<4x36xf32, #tpu.memory_space<smem>>
    %990 = vector.broadcast %989 : f32 to vector<5x5xf32>
    %991 = arith.mulf %990, %984 : vector<5x5xf32>
    %992 = arith.addf %975, %991 : vector<5x5xf32>
    %c2_475 = arith.constant 2 : index
    %c8_476 = arith.constant 8 : index
    %993 = memref.load %arg4[%c2_475, %c8_476] : memref<4x36xf32, #tpu.memory_space<smem>>
    %994 = vector.broadcast %993 : f32 to vector<5x5xf32>
    %995 = arith.mulf %994, %984 : vector<5x5xf32>
    %996 = arith.addf %979, %995 : vector<5x5xf32>
    %c3_477 = arith.constant 3 : index
    %c8_478 = arith.constant 8 : index
    %997 = memref.load %arg4[%c3_477, %c8_478] : memref<4x36xf32, #tpu.memory_space<smem>>
    %998 = vector.broadcast %997 : f32 to vector<5x5xf32>
    %999 = arith.mulf %998, %984 : vector<5x5xf32>
    %1000 = arith.addf %983, %999 : vector<5x5xf32>
    %1001 = vector.extract_strided_slice %747 {offsets = [0, 0], sizes = [5, 5], strides = [1, 1]} : vector<7x7xf32> to vector<5x5xf32>
    %c0_479 = arith.constant 0 : index
    %c9_480 = arith.constant 9 : index
    %1002 = memref.load %arg4[%c0_479, %c9_480] : memref<4x36xf32, #tpu.memory_space<smem>>
    %1003 = vector.broadcast %1002 : f32 to vector<5x5xf32>
    %1004 = arith.mulf %1003, %1001 : vector<5x5xf32>
    %1005 = arith.addf %988, %1004 : vector<5x5xf32>
    %c1_481 = arith.constant 1 : index
    %c9_482 = arith.constant 9 : index
    %1006 = memref.load %arg4[%c1_481, %c9_482] : memref<4x36xf32, #tpu.memory_space<smem>>
    %1007 = vector.broadcast %1006 : f32 to vector<5x5xf32>
    %1008 = arith.mulf %1007, %1001 : vector<5x5xf32>
    %1009 = arith.addf %992, %1008 : vector<5x5xf32>
    %c2_483 = arith.constant 2 : index
    %c9_484 = arith.constant 9 : index
    %1010 = memref.load %arg4[%c2_483, %c9_484] : memref<4x36xf32, #tpu.memory_space<smem>>
    %1011 = vector.broadcast %1010 : f32 to vector<5x5xf32>
    %1012 = arith.mulf %1011, %1001 : vector<5x5xf32>
    %1013 = arith.addf %996, %1012 : vector<5x5xf32>
    %c3_485 = arith.constant 3 : index
    %c9_486 = arith.constant 9 : index
    %1014 = memref.load %arg4[%c3_485, %c9_486] : memref<4x36xf32, #tpu.memory_space<smem>>
    %1015 = vector.broadcast %1014 : f32 to vector<5x5xf32>
    %1016 = arith.mulf %1015, %1001 : vector<5x5xf32>
    %1017 = arith.addf %1000, %1016 : vector<5x5xf32>
    %1018 = vector.extract_strided_slice %747 {offsets = [0, 1], sizes = [5, 5], strides = [1, 1]} : vector<7x7xf32> to vector<5x5xf32>
    %c0_487 = arith.constant 0 : index
    %c10_488 = arith.constant 10 : index
    %1019 = memref.load %arg4[%c0_487, %c10_488] : memref<4x36xf32, #tpu.memory_space<smem>>
    %1020 = vector.broadcast %1019 : f32 to vector<5x5xf32>
    %1021 = arith.mulf %1020, %1018 : vector<5x5xf32>
    %1022 = arith.addf %1005, %1021 : vector<5x5xf32>
    %c1_489 = arith.constant 1 : index
    %c10_490 = arith.constant 10 : index
    %1023 = memref.load %arg4[%c1_489, %c10_490] : memref<4x36xf32, #tpu.memory_space<smem>>
    %1024 = vector.broadcast %1023 : f32 to vector<5x5xf32>
    %1025 = arith.mulf %1024, %1018 : vector<5x5xf32>
    %1026 = arith.addf %1009, %1025 : vector<5x5xf32>
    %c2_491 = arith.constant 2 : index
    %c10_492 = arith.constant 10 : index
    %1027 = memref.load %arg4[%c2_491, %c10_492] : memref<4x36xf32, #tpu.memory_space<smem>>
    %1028 = vector.broadcast %1027 : f32 to vector<5x5xf32>
    %1029 = arith.mulf %1028, %1018 : vector<5x5xf32>
    %1030 = arith.addf %1013, %1029 : vector<5x5xf32>
    %c3_493 = arith.constant 3 : index
    %c10_494 = arith.constant 10 : index
    %1031 = memref.load %arg4[%c3_493, %c10_494] : memref<4x36xf32, #tpu.memory_space<smem>>
    %1032 = vector.broadcast %1031 : f32 to vector<5x5xf32>
    %1033 = arith.mulf %1032, %1018 : vector<5x5xf32>
    %1034 = arith.addf %1017, %1033 : vector<5x5xf32>
    %1035 = vector.extract_strided_slice %747 {offsets = [0, 2], sizes = [5, 5], strides = [1, 1]} : vector<7x7xf32> to vector<5x5xf32>
    %c0_495 = arith.constant 0 : index
    %c11_496 = arith.constant 11 : index
    %1036 = memref.load %arg4[%c0_495, %c11_496] : memref<4x36xf32, #tpu.memory_space<smem>>
    %1037 = vector.broadcast %1036 : f32 to vector<5x5xf32>
    %1038 = arith.mulf %1037, %1035 : vector<5x5xf32>
    %1039 = arith.addf %1022, %1038 : vector<5x5xf32>
    %c1_497 = arith.constant 1 : index
    %c11_498 = arith.constant 11 : index
    %1040 = memref.load %arg4[%c1_497, %c11_498] : memref<4x36xf32, #tpu.memory_space<smem>>
    %1041 = vector.broadcast %1040 : f32 to vector<5x5xf32>
    %1042 = arith.mulf %1041, %1035 : vector<5x5xf32>
    %1043 = arith.addf %1026, %1042 : vector<5x5xf32>
    %c2_499 = arith.constant 2 : index
    %c11_500 = arith.constant 11 : index
    %1044 = memref.load %arg4[%c2_499, %c11_500] : memref<4x36xf32, #tpu.memory_space<smem>>
    %1045 = vector.broadcast %1044 : f32 to vector<5x5xf32>
    %1046 = arith.mulf %1045, %1035 : vector<5x5xf32>
    %1047 = arith.addf %1030, %1046 : vector<5x5xf32>
    %c3_501 = arith.constant 3 : index
    %c11_502 = arith.constant 11 : index
    %1048 = memref.load %arg4[%c3_501, %c11_502] : memref<4x36xf32, #tpu.memory_space<smem>>
    %1049 = vector.broadcast %1048 : f32 to vector<5x5xf32>
    %1050 = arith.mulf %1049, %1035 : vector<5x5xf32>
    %1051 = arith.addf %1034, %1050 : vector<5x5xf32>
    %1052 = vector.extract_strided_slice %747 {offsets = [1, 0], sizes = [5, 5], strides = [1, 1]} : vector<7x7xf32> to vector<5x5xf32>
    %c0_503 = arith.constant 0 : index
    %c12_504 = arith.constant 12 : index
    %1053 = memref.load %arg4[%c0_503, %c12_504] : memref<4x36xf32, #tpu.memory_space<smem>>
    %1054 = vector.broadcast %1053 : f32 to vector<5x5xf32>
    %1055 = arith.mulf %1054, %1052 : vector<5x5xf32>
    %1056 = arith.addf %1039, %1055 : vector<5x5xf32>
    %c1_505 = arith.constant 1 : index
    %c12_506 = arith.constant 12 : index
    %1057 = memref.load %arg4[%c1_505, %c12_506] : memref<4x36xf32, #tpu.memory_space<smem>>
    %1058 = vector.broadcast %1057 : f32 to vector<5x5xf32>
    %1059 = arith.mulf %1058, %1052 : vector<5x5xf32>
    %1060 = arith.addf %1043, %1059 : vector<5x5xf32>
    %c2_507 = arith.constant 2 : index
    %c12_508 = arith.constant 12 : index
    %1061 = memref.load %arg4[%c2_507, %c12_508] : memref<4x36xf32, #tpu.memory_space<smem>>
    %1062 = vector.broadcast %1061 : f32 to vector<5x5xf32>
    %1063 = arith.mulf %1062, %1052 : vector<5x5xf32>
    %1064 = arith.addf %1047, %1063 : vector<5x5xf32>
    %c3_509 = arith.constant 3 : index
    %c12_510 = arith.constant 12 : index
    %1065 = memref.load %arg4[%c3_509, %c12_510] : memref<4x36xf32, #tpu.memory_space<smem>>
    %1066 = vector.broadcast %1065 : f32 to vector<5x5xf32>
    %1067 = arith.mulf %1066, %1052 : vector<5x5xf32>
    %1068 = arith.addf %1051, %1067 : vector<5x5xf32>
    %1069 = vector.extract_strided_slice %747 {offsets = [1, 1], sizes = [5, 5], strides = [1, 1]} : vector<7x7xf32> to vector<5x5xf32>
    %c0_511 = arith.constant 0 : index
    %c13_512 = arith.constant 13 : index
    %1070 = memref.load %arg4[%c0_511, %c13_512] : memref<4x36xf32, #tpu.memory_space<smem>>
    %1071 = vector.broadcast %1070 : f32 to vector<5x5xf32>
    %1072 = arith.mulf %1071, %1069 : vector<5x5xf32>
    %1073 = arith.addf %1056, %1072 : vector<5x5xf32>
    %c1_513 = arith.constant 1 : index
    %c13_514 = arith.constant 13 : index
    %1074 = memref.load %arg4[%c1_513, %c13_514] : memref<4x36xf32, #tpu.memory_space<smem>>
    %1075 = vector.broadcast %1074 : f32 to vector<5x5xf32>
    %1076 = arith.mulf %1075, %1069 : vector<5x5xf32>
    %1077 = arith.addf %1060, %1076 : vector<5x5xf32>
    %c2_515 = arith.constant 2 : index
    %c13_516 = arith.constant 13 : index
    %1078 = memref.load %arg4[%c2_515, %c13_516] : memref<4x36xf32, #tpu.memory_space<smem>>
    %1079 = vector.broadcast %1078 : f32 to vector<5x5xf32>
    %1080 = arith.mulf %1079, %1069 : vector<5x5xf32>
    %1081 = arith.addf %1064, %1080 : vector<5x5xf32>
    %c3_517 = arith.constant 3 : index
    %c13_518 = arith.constant 13 : index
    %1082 = memref.load %arg4[%c3_517, %c13_518] : memref<4x36xf32, #tpu.memory_space<smem>>
    %1083 = vector.broadcast %1082 : f32 to vector<5x5xf32>
    %1084 = arith.mulf %1083, %1069 : vector<5x5xf32>
    %1085 = arith.addf %1068, %1084 : vector<5x5xf32>
    %1086 = vector.extract_strided_slice %747 {offsets = [1, 2], sizes = [5, 5], strides = [1, 1]} : vector<7x7xf32> to vector<5x5xf32>
    %c0_519 = arith.constant 0 : index
    %c14_520 = arith.constant 14 : index
    %1087 = memref.load %arg4[%c0_519, %c14_520] : memref<4x36xf32, #tpu.memory_space<smem>>
    %1088 = vector.broadcast %1087 : f32 to vector<5x5xf32>
    %1089 = arith.mulf %1088, %1086 : vector<5x5xf32>
    %1090 = arith.addf %1073, %1089 : vector<5x5xf32>
    %c1_521 = arith.constant 1 : index
    %c14_522 = arith.constant 14 : index
    %1091 = memref.load %arg4[%c1_521, %c14_522] : memref<4x36xf32, #tpu.memory_space<smem>>
    %1092 = vector.broadcast %1091 : f32 to vector<5x5xf32>
    %1093 = arith.mulf %1092, %1086 : vector<5x5xf32>
    %1094 = arith.addf %1077, %1093 : vector<5x5xf32>
    %c2_523 = arith.constant 2 : index
    %c14_524 = arith.constant 14 : index
    %1095 = memref.load %arg4[%c2_523, %c14_524] : memref<4x36xf32, #tpu.memory_space<smem>>
    %1096 = vector.broadcast %1095 : f32 to vector<5x5xf32>
    %1097 = arith.mulf %1096, %1086 : vector<5x5xf32>
    %1098 = arith.addf %1081, %1097 : vector<5x5xf32>
    %c3_525 = arith.constant 3 : index
    %c14_526 = arith.constant 14 : index
    %1099 = memref.load %arg4[%c3_525, %c14_526] : memref<4x36xf32, #tpu.memory_space<smem>>
    %1100 = vector.broadcast %1099 : f32 to vector<5x5xf32>
    %1101 = arith.mulf %1100, %1086 : vector<5x5xf32>
    %1102 = arith.addf %1085, %1101 : vector<5x5xf32>
    %1103 = vector.extract_strided_slice %747 {offsets = [2, 0], sizes = [5, 5], strides = [1, 1]} : vector<7x7xf32> to vector<5x5xf32>
    %c0_527 = arith.constant 0 : index
    %c15_528 = arith.constant 15 : index
    %1104 = memref.load %arg4[%c0_527, %c15_528] : memref<4x36xf32, #tpu.memory_space<smem>>
    %1105 = vector.broadcast %1104 : f32 to vector<5x5xf32>
    %1106 = arith.mulf %1105, %1103 : vector<5x5xf32>
    %1107 = arith.addf %1090, %1106 : vector<5x5xf32>
    %c1_529 = arith.constant 1 : index
    %c15_530 = arith.constant 15 : index
    %1108 = memref.load %arg4[%c1_529, %c15_530] : memref<4x36xf32, #tpu.memory_space<smem>>
    %1109 = vector.broadcast %1108 : f32 to vector<5x5xf32>
    %1110 = arith.mulf %1109, %1103 : vector<5x5xf32>
    %1111 = arith.addf %1094, %1110 : vector<5x5xf32>
    %c2_531 = arith.constant 2 : index
    %c15_532 = arith.constant 15 : index
    %1112 = memref.load %arg4[%c2_531, %c15_532] : memref<4x36xf32, #tpu.memory_space<smem>>
    %1113 = vector.broadcast %1112 : f32 to vector<5x5xf32>
    %1114 = arith.mulf %1113, %1103 : vector<5x5xf32>
    %1115 = arith.addf %1098, %1114 : vector<5x5xf32>
    %c3_533 = arith.constant 3 : index
    %c15_534 = arith.constant 15 : index
    %1116 = memref.load %arg4[%c3_533, %c15_534] : memref<4x36xf32, #tpu.memory_space<smem>>
    %1117 = vector.broadcast %1116 : f32 to vector<5x5xf32>
    %1118 = arith.mulf %1117, %1103 : vector<5x5xf32>
    %1119 = arith.addf %1102, %1118 : vector<5x5xf32>
    %1120 = vector.extract_strided_slice %747 {offsets = [2, 1], sizes = [5, 5], strides = [1, 1]} : vector<7x7xf32> to vector<5x5xf32>
    %c0_535 = arith.constant 0 : index
    %c16_536 = arith.constant 16 : index
    %1121 = memref.load %arg4[%c0_535, %c16_536] : memref<4x36xf32, #tpu.memory_space<smem>>
    %1122 = vector.broadcast %1121 : f32 to vector<5x5xf32>
    %1123 = arith.mulf %1122, %1120 : vector<5x5xf32>
    %1124 = arith.addf %1107, %1123 : vector<5x5xf32>
    %c1_537 = arith.constant 1 : index
    %c16_538 = arith.constant 16 : index
    %1125 = memref.load %arg4[%c1_537, %c16_538] : memref<4x36xf32, #tpu.memory_space<smem>>
    %1126 = vector.broadcast %1125 : f32 to vector<5x5xf32>
    %1127 = arith.mulf %1126, %1120 : vector<5x5xf32>
    %1128 = arith.addf %1111, %1127 : vector<5x5xf32>
    %c2_539 = arith.constant 2 : index
    %c16_540 = arith.constant 16 : index
    %1129 = memref.load %arg4[%c2_539, %c16_540] : memref<4x36xf32, #tpu.memory_space<smem>>
    %1130 = vector.broadcast %1129 : f32 to vector<5x5xf32>
    %1131 = arith.mulf %1130, %1120 : vector<5x5xf32>
    %1132 = arith.addf %1115, %1131 : vector<5x5xf32>
    %c3_541 = arith.constant 3 : index
    %c16_542 = arith.constant 16 : index
    %1133 = memref.load %arg4[%c3_541, %c16_542] : memref<4x36xf32, #tpu.memory_space<smem>>
    %1134 = vector.broadcast %1133 : f32 to vector<5x5xf32>
    %1135 = arith.mulf %1134, %1120 : vector<5x5xf32>
    %1136 = arith.addf %1119, %1135 : vector<5x5xf32>
    %1137 = vector.extract_strided_slice %747 {offsets = [2, 2], sizes = [5, 5], strides = [1, 1]} : vector<7x7xf32> to vector<5x5xf32>
    %c0_543 = arith.constant 0 : index
    %c17_544 = arith.constant 17 : index
    %1138 = memref.load %arg4[%c0_543, %c17_544] : memref<4x36xf32, #tpu.memory_space<smem>>
    %1139 = vector.broadcast %1138 : f32 to vector<5x5xf32>
    %1140 = arith.mulf %1139, %1137 : vector<5x5xf32>
    %1141 = arith.addf %1124, %1140 : vector<5x5xf32>
    %c1_545 = arith.constant 1 : index
    %c17_546 = arith.constant 17 : index
    %1142 = memref.load %arg4[%c1_545, %c17_546] : memref<4x36xf32, #tpu.memory_space<smem>>
    %1143 = vector.broadcast %1142 : f32 to vector<5x5xf32>
    %1144 = arith.mulf %1143, %1137 : vector<5x5xf32>
    %1145 = arith.addf %1128, %1144 : vector<5x5xf32>
    %c2_547 = arith.constant 2 : index
    %c17_548 = arith.constant 17 : index
    %1146 = memref.load %arg4[%c2_547, %c17_548] : memref<4x36xf32, #tpu.memory_space<smem>>
    %1147 = vector.broadcast %1146 : f32 to vector<5x5xf32>
    %1148 = arith.mulf %1147, %1137 : vector<5x5xf32>
    %1149 = arith.addf %1132, %1148 : vector<5x5xf32>
    %c3_549 = arith.constant 3 : index
    %c17_550 = arith.constant 17 : index
    %1150 = memref.load %arg4[%c3_549, %c17_550] : memref<4x36xf32, #tpu.memory_space<smem>>
    %1151 = vector.broadcast %1150 : f32 to vector<5x5xf32>
    %1152 = arith.mulf %1151, %1137 : vector<5x5xf32>
    %1153 = arith.addf %1136, %1152 : vector<5x5xf32>
    %1154 = vector.extract_strided_slice %793 {offsets = [0, 0], sizes = [5, 5], strides = [1, 1]} : vector<7x7xf32> to vector<5x5xf32>
    %c0_551 = arith.constant 0 : index
    %c18_552 = arith.constant 18 : index
    %1155 = memref.load %arg4[%c0_551, %c18_552] : memref<4x36xf32, #tpu.memory_space<smem>>
    %1156 = vector.broadcast %1155 : f32 to vector<5x5xf32>
    %1157 = arith.mulf %1156, %1154 : vector<5x5xf32>
    %1158 = arith.addf %1141, %1157 : vector<5x5xf32>
    %c1_553 = arith.constant 1 : index
    %c18_554 = arith.constant 18 : index
    %1159 = memref.load %arg4[%c1_553, %c18_554] : memref<4x36xf32, #tpu.memory_space<smem>>
    %1160 = vector.broadcast %1159 : f32 to vector<5x5xf32>
    %1161 = arith.mulf %1160, %1154 : vector<5x5xf32>
    %1162 = arith.addf %1145, %1161 : vector<5x5xf32>
    %c2_555 = arith.constant 2 : index
    %c18_556 = arith.constant 18 : index
    %1163 = memref.load %arg4[%c2_555, %c18_556] : memref<4x36xf32, #tpu.memory_space<smem>>
    %1164 = vector.broadcast %1163 : f32 to vector<5x5xf32>
    %1165 = arith.mulf %1164, %1154 : vector<5x5xf32>
    %1166 = arith.addf %1149, %1165 : vector<5x5xf32>
    %c3_557 = arith.constant 3 : index
    %c18_558 = arith.constant 18 : index
    %1167 = memref.load %arg4[%c3_557, %c18_558] : memref<4x36xf32, #tpu.memory_space<smem>>
    %1168 = vector.broadcast %1167 : f32 to vector<5x5xf32>
    %1169 = arith.mulf %1168, %1154 : vector<5x5xf32>
    %1170 = arith.addf %1153, %1169 : vector<5x5xf32>
    %1171 = vector.extract_strided_slice %793 {offsets = [0, 1], sizes = [5, 5], strides = [1, 1]} : vector<7x7xf32> to vector<5x5xf32>
    %c0_559 = arith.constant 0 : index
    %c19_560 = arith.constant 19 : index
    %1172 = memref.load %arg4[%c0_559, %c19_560] : memref<4x36xf32, #tpu.memory_space<smem>>
    %1173 = vector.broadcast %1172 : f32 to vector<5x5xf32>
    %1174 = arith.mulf %1173, %1171 : vector<5x5xf32>
    %1175 = arith.addf %1158, %1174 : vector<5x5xf32>
    %c1_561 = arith.constant 1 : index
    %c19_562 = arith.constant 19 : index
    %1176 = memref.load %arg4[%c1_561, %c19_562] : memref<4x36xf32, #tpu.memory_space<smem>>
    %1177 = vector.broadcast %1176 : f32 to vector<5x5xf32>
    %1178 = arith.mulf %1177, %1171 : vector<5x5xf32>
    %1179 = arith.addf %1162, %1178 : vector<5x5xf32>
    %c2_563 = arith.constant 2 : index
    %c19_564 = arith.constant 19 : index
    %1180 = memref.load %arg4[%c2_563, %c19_564] : memref<4x36xf32, #tpu.memory_space<smem>>
    %1181 = vector.broadcast %1180 : f32 to vector<5x5xf32>
    %1182 = arith.mulf %1181, %1171 : vector<5x5xf32>
    %1183 = arith.addf %1166, %1182 : vector<5x5xf32>
    %c3_565 = arith.constant 3 : index
    %c19_566 = arith.constant 19 : index
    %1184 = memref.load %arg4[%c3_565, %c19_566] : memref<4x36xf32, #tpu.memory_space<smem>>
    %1185 = vector.broadcast %1184 : f32 to vector<5x5xf32>
    %1186 = arith.mulf %1185, %1171 : vector<5x5xf32>
    %1187 = arith.addf %1170, %1186 : vector<5x5xf32>
    %1188 = vector.extract_strided_slice %793 {offsets = [0, 2], sizes = [5, 5], strides = [1, 1]} : vector<7x7xf32> to vector<5x5xf32>
    %c0_567 = arith.constant 0 : index
    %c20_568 = arith.constant 20 : index
    %1189 = memref.load %arg4[%c0_567, %c20_568] : memref<4x36xf32, #tpu.memory_space<smem>>
    %1190 = vector.broadcast %1189 : f32 to vector<5x5xf32>
    %1191 = arith.mulf %1190, %1188 : vector<5x5xf32>
    %1192 = arith.addf %1175, %1191 : vector<5x5xf32>
    %c1_569 = arith.constant 1 : index
    %c20_570 = arith.constant 20 : index
    %1193 = memref.load %arg4[%c1_569, %c20_570] : memref<4x36xf32, #tpu.memory_space<smem>>
    %1194 = vector.broadcast %1193 : f32 to vector<5x5xf32>
    %1195 = arith.mulf %1194, %1188 : vector<5x5xf32>
    %1196 = arith.addf %1179, %1195 : vector<5x5xf32>
    %c2_571 = arith.constant 2 : index
    %c20_572 = arith.constant 20 : index
    %1197 = memref.load %arg4[%c2_571, %c20_572] : memref<4x36xf32, #tpu.memory_space<smem>>
    %1198 = vector.broadcast %1197 : f32 to vector<5x5xf32>
    %1199 = arith.mulf %1198, %1188 : vector<5x5xf32>
    %1200 = arith.addf %1183, %1199 : vector<5x5xf32>
    %c3_573 = arith.constant 3 : index
    %c20_574 = arith.constant 20 : index
    %1201 = memref.load %arg4[%c3_573, %c20_574] : memref<4x36xf32, #tpu.memory_space<smem>>
    %1202 = vector.broadcast %1201 : f32 to vector<5x5xf32>
    %1203 = arith.mulf %1202, %1188 : vector<5x5xf32>
    %1204 = arith.addf %1187, %1203 : vector<5x5xf32>
    %1205 = vector.extract_strided_slice %793 {offsets = [1, 0], sizes = [5, 5], strides = [1, 1]} : vector<7x7xf32> to vector<5x5xf32>
    %c0_575 = arith.constant 0 : index
    %c21_576 = arith.constant 21 : index
    %1206 = memref.load %arg4[%c0_575, %c21_576] : memref<4x36xf32, #tpu.memory_space<smem>>
    %1207 = vector.broadcast %1206 : f32 to vector<5x5xf32>
    %1208 = arith.mulf %1207, %1205 : vector<5x5xf32>
    %1209 = arith.addf %1192, %1208 : vector<5x5xf32>
    %c1_577 = arith.constant 1 : index
    %c21_578 = arith.constant 21 : index
    %1210 = memref.load %arg4[%c1_577, %c21_578] : memref<4x36xf32, #tpu.memory_space<smem>>
    %1211 = vector.broadcast %1210 : f32 to vector<5x5xf32>
    %1212 = arith.mulf %1211, %1205 : vector<5x5xf32>
    %1213 = arith.addf %1196, %1212 : vector<5x5xf32>
    %c2_579 = arith.constant 2 : index
    %c21_580 = arith.constant 21 : index
    %1214 = memref.load %arg4[%c2_579, %c21_580] : memref<4x36xf32, #tpu.memory_space<smem>>
    %1215 = vector.broadcast %1214 : f32 to vector<5x5xf32>
    %1216 = arith.mulf %1215, %1205 : vector<5x5xf32>
    %1217 = arith.addf %1200, %1216 : vector<5x5xf32>
    %c3_581 = arith.constant 3 : index
    %c21_582 = arith.constant 21 : index
    %1218 = memref.load %arg4[%c3_581, %c21_582] : memref<4x36xf32, #tpu.memory_space<smem>>
    %1219 = vector.broadcast %1218 : f32 to vector<5x5xf32>
    %1220 = arith.mulf %1219, %1205 : vector<5x5xf32>
    %1221 = arith.addf %1204, %1220 : vector<5x5xf32>
    %1222 = vector.extract_strided_slice %793 {offsets = [1, 1], sizes = [5, 5], strides = [1, 1]} : vector<7x7xf32> to vector<5x5xf32>
    %c0_583 = arith.constant 0 : index
    %c22_584 = arith.constant 22 : index
    %1223 = memref.load %arg4[%c0_583, %c22_584] : memref<4x36xf32, #tpu.memory_space<smem>>
    %1224 = vector.broadcast %1223 : f32 to vector<5x5xf32>
    %1225 = arith.mulf %1224, %1222 : vector<5x5xf32>
    %1226 = arith.addf %1209, %1225 : vector<5x5xf32>
    %c1_585 = arith.constant 1 : index
    %c22_586 = arith.constant 22 : index
    %1227 = memref.load %arg4[%c1_585, %c22_586] : memref<4x36xf32, #tpu.memory_space<smem>>
    %1228 = vector.broadcast %1227 : f32 to vector<5x5xf32>
    %1229 = arith.mulf %1228, %1222 : vector<5x5xf32>
    %1230 = arith.addf %1213, %1229 : vector<5x5xf32>
    %c2_587 = arith.constant 2 : index
    %c22_588 = arith.constant 22 : index
    %1231 = memref.load %arg4[%c2_587, %c22_588] : memref<4x36xf32, #tpu.memory_space<smem>>
    %1232 = vector.broadcast %1231 : f32 to vector<5x5xf32>
    %1233 = arith.mulf %1232, %1222 : vector<5x5xf32>
    %1234 = arith.addf %1217, %1233 : vector<5x5xf32>
    %c3_589 = arith.constant 3 : index
    %c22_590 = arith.constant 22 : index
    %1235 = memref.load %arg4[%c3_589, %c22_590] : memref<4x36xf32, #tpu.memory_space<smem>>
    %1236 = vector.broadcast %1235 : f32 to vector<5x5xf32>
    %1237 = arith.mulf %1236, %1222 : vector<5x5xf32>
    %1238 = arith.addf %1221, %1237 : vector<5x5xf32>
    %1239 = vector.extract_strided_slice %793 {offsets = [1, 2], sizes = [5, 5], strides = [1, 1]} : vector<7x7xf32> to vector<5x5xf32>
    %c0_591 = arith.constant 0 : index
    %c23_592 = arith.constant 23 : index
    %1240 = memref.load %arg4[%c0_591, %c23_592] : memref<4x36xf32, #tpu.memory_space<smem>>
    %1241 = vector.broadcast %1240 : f32 to vector<5x5xf32>
    %1242 = arith.mulf %1241, %1239 : vector<5x5xf32>
    %1243 = arith.addf %1226, %1242 : vector<5x5xf32>
    %c1_593 = arith.constant 1 : index
    %c23_594 = arith.constant 23 : index
    %1244 = memref.load %arg4[%c1_593, %c23_594] : memref<4x36xf32, #tpu.memory_space<smem>>
    %1245 = vector.broadcast %1244 : f32 to vector<5x5xf32>
    %1246 = arith.mulf %1245, %1239 : vector<5x5xf32>
    %1247 = arith.addf %1230, %1246 : vector<5x5xf32>
    %c2_595 = arith.constant 2 : index
    %c23_596 = arith.constant 23 : index
    %1248 = memref.load %arg4[%c2_595, %c23_596] : memref<4x36xf32, #tpu.memory_space<smem>>
    %1249 = vector.broadcast %1248 : f32 to vector<5x5xf32>
    %1250 = arith.mulf %1249, %1239 : vector<5x5xf32>
    %1251 = arith.addf %1234, %1250 : vector<5x5xf32>
    %c3_597 = arith.constant 3 : index
    %c23_598 = arith.constant 23 : index
    %1252 = memref.load %arg4[%c3_597, %c23_598] : memref<4x36xf32, #tpu.memory_space<smem>>
    %1253 = vector.broadcast %1252 : f32 to vector<5x5xf32>
    %1254 = arith.mulf %1253, %1239 : vector<5x5xf32>
    %1255 = arith.addf %1238, %1254 : vector<5x5xf32>
    %1256 = vector.extract_strided_slice %793 {offsets = [2, 0], sizes = [5, 5], strides = [1, 1]} : vector<7x7xf32> to vector<5x5xf32>
    %c0_599 = arith.constant 0 : index
    %c24_600 = arith.constant 24 : index
    %1257 = memref.load %arg4[%c0_599, %c24_600] : memref<4x36xf32, #tpu.memory_space<smem>>
    %1258 = vector.broadcast %1257 : f32 to vector<5x5xf32>
    %1259 = arith.mulf %1258, %1256 : vector<5x5xf32>
    %1260 = arith.addf %1243, %1259 : vector<5x5xf32>
    %c1_601 = arith.constant 1 : index
    %c24_602 = arith.constant 24 : index
    %1261 = memref.load %arg4[%c1_601, %c24_602] : memref<4x36xf32, #tpu.memory_space<smem>>
    %1262 = vector.broadcast %1261 : f32 to vector<5x5xf32>
    %1263 = arith.mulf %1262, %1256 : vector<5x5xf32>
    %1264 = arith.addf %1247, %1263 : vector<5x5xf32>
    %c2_603 = arith.constant 2 : index
    %c24_604 = arith.constant 24 : index
    %1265 = memref.load %arg4[%c2_603, %c24_604] : memref<4x36xf32, #tpu.memory_space<smem>>
    %1266 = vector.broadcast %1265 : f32 to vector<5x5xf32>
    %1267 = arith.mulf %1266, %1256 : vector<5x5xf32>
    %1268 = arith.addf %1251, %1267 : vector<5x5xf32>
    %c3_605 = arith.constant 3 : index
    %c24_606 = arith.constant 24 : index
    %1269 = memref.load %arg4[%c3_605, %c24_606] : memref<4x36xf32, #tpu.memory_space<smem>>
    %1270 = vector.broadcast %1269 : f32 to vector<5x5xf32>
    %1271 = arith.mulf %1270, %1256 : vector<5x5xf32>
    %1272 = arith.addf %1255, %1271 : vector<5x5xf32>
    %1273 = vector.extract_strided_slice %793 {offsets = [2, 1], sizes = [5, 5], strides = [1, 1]} : vector<7x7xf32> to vector<5x5xf32>
    %c0_607 = arith.constant 0 : index
    %c25_608 = arith.constant 25 : index
    %1274 = memref.load %arg4[%c0_607, %c25_608] : memref<4x36xf32, #tpu.memory_space<smem>>
    %1275 = vector.broadcast %1274 : f32 to vector<5x5xf32>
    %1276 = arith.mulf %1275, %1273 : vector<5x5xf32>
    %1277 = arith.addf %1260, %1276 : vector<5x5xf32>
    %c1_609 = arith.constant 1 : index
    %c25_610 = arith.constant 25 : index
    %1278 = memref.load %arg4[%c1_609, %c25_610] : memref<4x36xf32, #tpu.memory_space<smem>>
    %1279 = vector.broadcast %1278 : f32 to vector<5x5xf32>
    %1280 = arith.mulf %1279, %1273 : vector<5x5xf32>
    %1281 = arith.addf %1264, %1280 : vector<5x5xf32>
    %c2_611 = arith.constant 2 : index
    %c25_612 = arith.constant 25 : index
    %1282 = memref.load %arg4[%c2_611, %c25_612] : memref<4x36xf32, #tpu.memory_space<smem>>
    %1283 = vector.broadcast %1282 : f32 to vector<5x5xf32>
    %1284 = arith.mulf %1283, %1273 : vector<5x5xf32>
    %1285 = arith.addf %1268, %1284 : vector<5x5xf32>
    %c3_613 = arith.constant 3 : index
    %c25_614 = arith.constant 25 : index
    %1286 = memref.load %arg4[%c3_613, %c25_614] : memref<4x36xf32, #tpu.memory_space<smem>>
    %1287 = vector.broadcast %1286 : f32 to vector<5x5xf32>
    %1288 = arith.mulf %1287, %1273 : vector<5x5xf32>
    %1289 = arith.addf %1272, %1288 : vector<5x5xf32>
    %1290 = vector.extract_strided_slice %793 {offsets = [2, 2], sizes = [5, 5], strides = [1, 1]} : vector<7x7xf32> to vector<5x5xf32>
    %c0_615 = arith.constant 0 : index
    %c26_616 = arith.constant 26 : index
    %1291 = memref.load %arg4[%c0_615, %c26_616] : memref<4x36xf32, #tpu.memory_space<smem>>
    %1292 = vector.broadcast %1291 : f32 to vector<5x5xf32>
    %1293 = arith.mulf %1292, %1290 : vector<5x5xf32>
    %1294 = arith.addf %1277, %1293 : vector<5x5xf32>
    %c1_617 = arith.constant 1 : index
    %c26_618 = arith.constant 26 : index
    %1295 = memref.load %arg4[%c1_617, %c26_618] : memref<4x36xf32, #tpu.memory_space<smem>>
    %1296 = vector.broadcast %1295 : f32 to vector<5x5xf32>
    %1297 = arith.mulf %1296, %1290 : vector<5x5xf32>
    %1298 = arith.addf %1281, %1297 : vector<5x5xf32>
    %c2_619 = arith.constant 2 : index
    %c26_620 = arith.constant 26 : index
    %1299 = memref.load %arg4[%c2_619, %c26_620] : memref<4x36xf32, #tpu.memory_space<smem>>
    %1300 = vector.broadcast %1299 : f32 to vector<5x5xf32>
    %1301 = arith.mulf %1300, %1290 : vector<5x5xf32>
    %1302 = arith.addf %1285, %1301 : vector<5x5xf32>
    %c3_621 = arith.constant 3 : index
    %c26_622 = arith.constant 26 : index
    %1303 = memref.load %arg4[%c3_621, %c26_622] : memref<4x36xf32, #tpu.memory_space<smem>>
    %1304 = vector.broadcast %1303 : f32 to vector<5x5xf32>
    %1305 = arith.mulf %1304, %1290 : vector<5x5xf32>
    %1306 = arith.addf %1289, %1305 : vector<5x5xf32>
    %1307 = vector.extract_strided_slice %839 {offsets = [0, 0], sizes = [5, 5], strides = [1, 1]} : vector<7x7xf32> to vector<5x5xf32>
    %c0_623 = arith.constant 0 : index
    %c27_624 = arith.constant 27 : index
    %1308 = memref.load %arg4[%c0_623, %c27_624] : memref<4x36xf32, #tpu.memory_space<smem>>
    %1309 = vector.broadcast %1308 : f32 to vector<5x5xf32>
    %1310 = arith.mulf %1309, %1307 : vector<5x5xf32>
    %1311 = arith.addf %1294, %1310 : vector<5x5xf32>
    %c1_625 = arith.constant 1 : index
    %c27_626 = arith.constant 27 : index
    %1312 = memref.load %arg4[%c1_625, %c27_626] : memref<4x36xf32, #tpu.memory_space<smem>>
    %1313 = vector.broadcast %1312 : f32 to vector<5x5xf32>
    %1314 = arith.mulf %1313, %1307 : vector<5x5xf32>
    %1315 = arith.addf %1298, %1314 : vector<5x5xf32>
    %c2_627 = arith.constant 2 : index
    %c27_628 = arith.constant 27 : index
    %1316 = memref.load %arg4[%c2_627, %c27_628] : memref<4x36xf32, #tpu.memory_space<smem>>
    %1317 = vector.broadcast %1316 : f32 to vector<5x5xf32>
    %1318 = arith.mulf %1317, %1307 : vector<5x5xf32>
    %1319 = arith.addf %1302, %1318 : vector<5x5xf32>
    %c3_629 = arith.constant 3 : index
    %c27_630 = arith.constant 27 : index
    %1320 = memref.load %arg4[%c3_629, %c27_630] : memref<4x36xf32, #tpu.memory_space<smem>>
    %1321 = vector.broadcast %1320 : f32 to vector<5x5xf32>
    %1322 = arith.mulf %1321, %1307 : vector<5x5xf32>
    %1323 = arith.addf %1306, %1322 : vector<5x5xf32>
    %1324 = vector.extract_strided_slice %839 {offsets = [0, 1], sizes = [5, 5], strides = [1, 1]} : vector<7x7xf32> to vector<5x5xf32>
    %c0_631 = arith.constant 0 : index
    %c28_632 = arith.constant 28 : index
    %1325 = memref.load %arg4[%c0_631, %c28_632] : memref<4x36xf32, #tpu.memory_space<smem>>
    %1326 = vector.broadcast %1325 : f32 to vector<5x5xf32>
    %1327 = arith.mulf %1326, %1324 : vector<5x5xf32>
    %1328 = arith.addf %1311, %1327 : vector<5x5xf32>
    %c1_633 = arith.constant 1 : index
    %c28_634 = arith.constant 28 : index
    %1329 = memref.load %arg4[%c1_633, %c28_634] : memref<4x36xf32, #tpu.memory_space<smem>>
    %1330 = vector.broadcast %1329 : f32 to vector<5x5xf32>
    %1331 = arith.mulf %1330, %1324 : vector<5x5xf32>
    %1332 = arith.addf %1315, %1331 : vector<5x5xf32>
    %c2_635 = arith.constant 2 : index
    %c28_636 = arith.constant 28 : index
    %1333 = memref.load %arg4[%c2_635, %c28_636] : memref<4x36xf32, #tpu.memory_space<smem>>
    %1334 = vector.broadcast %1333 : f32 to vector<5x5xf32>
    %1335 = arith.mulf %1334, %1324 : vector<5x5xf32>
    %1336 = arith.addf %1319, %1335 : vector<5x5xf32>
    %c3_637 = arith.constant 3 : index
    %c28_638 = arith.constant 28 : index
    %1337 = memref.load %arg4[%c3_637, %c28_638] : memref<4x36xf32, #tpu.memory_space<smem>>
    %1338 = vector.broadcast %1337 : f32 to vector<5x5xf32>
    %1339 = arith.mulf %1338, %1324 : vector<5x5xf32>
    %1340 = arith.addf %1323, %1339 : vector<5x5xf32>
    %1341 = vector.extract_strided_slice %839 {offsets = [0, 2], sizes = [5, 5], strides = [1, 1]} : vector<7x7xf32> to vector<5x5xf32>
    %c0_639 = arith.constant 0 : index
    %c29_640 = arith.constant 29 : index
    %1342 = memref.load %arg4[%c0_639, %c29_640] : memref<4x36xf32, #tpu.memory_space<smem>>
    %1343 = vector.broadcast %1342 : f32 to vector<5x5xf32>
    %1344 = arith.mulf %1343, %1341 : vector<5x5xf32>
    %1345 = arith.addf %1328, %1344 : vector<5x5xf32>
    %c1_641 = arith.constant 1 : index
    %c29_642 = arith.constant 29 : index
    %1346 = memref.load %arg4[%c1_641, %c29_642] : memref<4x36xf32, #tpu.memory_space<smem>>
    %1347 = vector.broadcast %1346 : f32 to vector<5x5xf32>
    %1348 = arith.mulf %1347, %1341 : vector<5x5xf32>
    %1349 = arith.addf %1332, %1348 : vector<5x5xf32>
    %c2_643 = arith.constant 2 : index
    %c29_644 = arith.constant 29 : index
    %1350 = memref.load %arg4[%c2_643, %c29_644] : memref<4x36xf32, #tpu.memory_space<smem>>
    %1351 = vector.broadcast %1350 : f32 to vector<5x5xf32>
    %1352 = arith.mulf %1351, %1341 : vector<5x5xf32>
    %1353 = arith.addf %1336, %1352 : vector<5x5xf32>
    %c3_645 = arith.constant 3 : index
    %c29_646 = arith.constant 29 : index
    %1354 = memref.load %arg4[%c3_645, %c29_646] : memref<4x36xf32, #tpu.memory_space<smem>>
    %1355 = vector.broadcast %1354 : f32 to vector<5x5xf32>
    %1356 = arith.mulf %1355, %1341 : vector<5x5xf32>
    %1357 = arith.addf %1340, %1356 : vector<5x5xf32>
    %1358 = vector.extract_strided_slice %839 {offsets = [1, 0], sizes = [5, 5], strides = [1, 1]} : vector<7x7xf32> to vector<5x5xf32>
    %c0_647 = arith.constant 0 : index
    %c30_648 = arith.constant 30 : index
    %1359 = memref.load %arg4[%c0_647, %c30_648] : memref<4x36xf32, #tpu.memory_space<smem>>
    %1360 = vector.broadcast %1359 : f32 to vector<5x5xf32>
    %1361 = arith.mulf %1360, %1358 : vector<5x5xf32>
    %1362 = arith.addf %1345, %1361 : vector<5x5xf32>
    %c1_649 = arith.constant 1 : index
    %c30_650 = arith.constant 30 : index
    %1363 = memref.load %arg4[%c1_649, %c30_650] : memref<4x36xf32, #tpu.memory_space<smem>>
    %1364 = vector.broadcast %1363 : f32 to vector<5x5xf32>
    %1365 = arith.mulf %1364, %1358 : vector<5x5xf32>
    %1366 = arith.addf %1349, %1365 : vector<5x5xf32>
    %c2_651 = arith.constant 2 : index
    %c30_652 = arith.constant 30 : index
    %1367 = memref.load %arg4[%c2_651, %c30_652] : memref<4x36xf32, #tpu.memory_space<smem>>
    %1368 = vector.broadcast %1367 : f32 to vector<5x5xf32>
    %1369 = arith.mulf %1368, %1358 : vector<5x5xf32>
    %1370 = arith.addf %1353, %1369 : vector<5x5xf32>
    %c3_653 = arith.constant 3 : index
    %c30_654 = arith.constant 30 : index
    %1371 = memref.load %arg4[%c3_653, %c30_654] : memref<4x36xf32, #tpu.memory_space<smem>>
    %1372 = vector.broadcast %1371 : f32 to vector<5x5xf32>
    %1373 = arith.mulf %1372, %1358 : vector<5x5xf32>
    %1374 = arith.addf %1357, %1373 : vector<5x5xf32>
    %1375 = vector.extract_strided_slice %839 {offsets = [1, 1], sizes = [5, 5], strides = [1, 1]} : vector<7x7xf32> to vector<5x5xf32>
    %c0_655 = arith.constant 0 : index
    %c31_656 = arith.constant 31 : index
    %1376 = memref.load %arg4[%c0_655, %c31_656] : memref<4x36xf32, #tpu.memory_space<smem>>
    %1377 = vector.broadcast %1376 : f32 to vector<5x5xf32>
    %1378 = arith.mulf %1377, %1375 : vector<5x5xf32>
    %1379 = arith.addf %1362, %1378 : vector<5x5xf32>
    %c1_657 = arith.constant 1 : index
    %c31_658 = arith.constant 31 : index
    %1380 = memref.load %arg4[%c1_657, %c31_658] : memref<4x36xf32, #tpu.memory_space<smem>>
    %1381 = vector.broadcast %1380 : f32 to vector<5x5xf32>
    %1382 = arith.mulf %1381, %1375 : vector<5x5xf32>
    %1383 = arith.addf %1366, %1382 : vector<5x5xf32>
    %c2_659 = arith.constant 2 : index
    %c31_660 = arith.constant 31 : index
    %1384 = memref.load %arg4[%c2_659, %c31_660] : memref<4x36xf32, #tpu.memory_space<smem>>
    %1385 = vector.broadcast %1384 : f32 to vector<5x5xf32>
    %1386 = arith.mulf %1385, %1375 : vector<5x5xf32>
    %1387 = arith.addf %1370, %1386 : vector<5x5xf32>
    %c3_661 = arith.constant 3 : index
    %c31_662 = arith.constant 31 : index
    %1388 = memref.load %arg4[%c3_661, %c31_662] : memref<4x36xf32, #tpu.memory_space<smem>>
    %1389 = vector.broadcast %1388 : f32 to vector<5x5xf32>
    %1390 = arith.mulf %1389, %1375 : vector<5x5xf32>
    %1391 = arith.addf %1374, %1390 : vector<5x5xf32>
    %1392 = vector.extract_strided_slice %839 {offsets = [1, 2], sizes = [5, 5], strides = [1, 1]} : vector<7x7xf32> to vector<5x5xf32>
    %c0_663 = arith.constant 0 : index
    %c32_664 = arith.constant 32 : index
    %1393 = memref.load %arg4[%c0_663, %c32_664] : memref<4x36xf32, #tpu.memory_space<smem>>
    %1394 = vector.broadcast %1393 : f32 to vector<5x5xf32>
    %1395 = arith.mulf %1394, %1392 : vector<5x5xf32>
    %1396 = arith.addf %1379, %1395 : vector<5x5xf32>
    %c1_665 = arith.constant 1 : index
    %c32_666 = arith.constant 32 : index
    %1397 = memref.load %arg4[%c1_665, %c32_666] : memref<4x36xf32, #tpu.memory_space<smem>>
    %1398 = vector.broadcast %1397 : f32 to vector<5x5xf32>
    %1399 = arith.mulf %1398, %1392 : vector<5x5xf32>
    %1400 = arith.addf %1383, %1399 : vector<5x5xf32>
    %c2_667 = arith.constant 2 : index
    %c32_668 = arith.constant 32 : index
    %1401 = memref.load %arg4[%c2_667, %c32_668] : memref<4x36xf32, #tpu.memory_space<smem>>
    %1402 = vector.broadcast %1401 : f32 to vector<5x5xf32>
    %1403 = arith.mulf %1402, %1392 : vector<5x5xf32>
    %1404 = arith.addf %1387, %1403 : vector<5x5xf32>
    %c3_669 = arith.constant 3 : index
    %c32_670 = arith.constant 32 : index
    %1405 = memref.load %arg4[%c3_669, %c32_670] : memref<4x36xf32, #tpu.memory_space<smem>>
    %1406 = vector.broadcast %1405 : f32 to vector<5x5xf32>
    %1407 = arith.mulf %1406, %1392 : vector<5x5xf32>
    %1408 = arith.addf %1391, %1407 : vector<5x5xf32>
    %1409 = vector.extract_strided_slice %839 {offsets = [2, 0], sizes = [5, 5], strides = [1, 1]} : vector<7x7xf32> to vector<5x5xf32>
    %c0_671 = arith.constant 0 : index
    %c33_672 = arith.constant 33 : index
    %1410 = memref.load %arg4[%c0_671, %c33_672] : memref<4x36xf32, #tpu.memory_space<smem>>
    %1411 = vector.broadcast %1410 : f32 to vector<5x5xf32>
    %1412 = arith.mulf %1411, %1409 : vector<5x5xf32>
    %1413 = arith.addf %1396, %1412 : vector<5x5xf32>
    %c1_673 = arith.constant 1 : index
    %c33_674 = arith.constant 33 : index
    %1414 = memref.load %arg4[%c1_673, %c33_674] : memref<4x36xf32, #tpu.memory_space<smem>>
    %1415 = vector.broadcast %1414 : f32 to vector<5x5xf32>
    %1416 = arith.mulf %1415, %1409 : vector<5x5xf32>
    %1417 = arith.addf %1400, %1416 : vector<5x5xf32>
    %c2_675 = arith.constant 2 : index
    %c33_676 = arith.constant 33 : index
    %1418 = memref.load %arg4[%c2_675, %c33_676] : memref<4x36xf32, #tpu.memory_space<smem>>
    %1419 = vector.broadcast %1418 : f32 to vector<5x5xf32>
    %1420 = arith.mulf %1419, %1409 : vector<5x5xf32>
    %1421 = arith.addf %1404, %1420 : vector<5x5xf32>
    %c3_677 = arith.constant 3 : index
    %c33_678 = arith.constant 33 : index
    %1422 = memref.load %arg4[%c3_677, %c33_678] : memref<4x36xf32, #tpu.memory_space<smem>>
    %1423 = vector.broadcast %1422 : f32 to vector<5x5xf32>
    %1424 = arith.mulf %1423, %1409 : vector<5x5xf32>
    %1425 = arith.addf %1408, %1424 : vector<5x5xf32>
    %1426 = vector.extract_strided_slice %839 {offsets = [2, 1], sizes = [5, 5], strides = [1, 1]} : vector<7x7xf32> to vector<5x5xf32>
    %c0_679 = arith.constant 0 : index
    %c34_680 = arith.constant 34 : index
    %1427 = memref.load %arg4[%c0_679, %c34_680] : memref<4x36xf32, #tpu.memory_space<smem>>
    %1428 = vector.broadcast %1427 : f32 to vector<5x5xf32>
    %1429 = arith.mulf %1428, %1426 : vector<5x5xf32>
    %1430 = arith.addf %1413, %1429 : vector<5x5xf32>
    %c1_681 = arith.constant 1 : index
    %c34_682 = arith.constant 34 : index
    %1431 = memref.load %arg4[%c1_681, %c34_682] : memref<4x36xf32, #tpu.memory_space<smem>>
    %1432 = vector.broadcast %1431 : f32 to vector<5x5xf32>
    %1433 = arith.mulf %1432, %1426 : vector<5x5xf32>
    %1434 = arith.addf %1417, %1433 : vector<5x5xf32>
    %c2_683 = arith.constant 2 : index
    %c34_684 = arith.constant 34 : index
    %1435 = memref.load %arg4[%c2_683, %c34_684] : memref<4x36xf32, #tpu.memory_space<smem>>
    %1436 = vector.broadcast %1435 : f32 to vector<5x5xf32>
    %1437 = arith.mulf %1436, %1426 : vector<5x5xf32>
    %1438 = arith.addf %1421, %1437 : vector<5x5xf32>
    %c3_685 = arith.constant 3 : index
    %c34_686 = arith.constant 34 : index
    %1439 = memref.load %arg4[%c3_685, %c34_686] : memref<4x36xf32, #tpu.memory_space<smem>>
    %1440 = vector.broadcast %1439 : f32 to vector<5x5xf32>
    %1441 = arith.mulf %1440, %1426 : vector<5x5xf32>
    %1442 = arith.addf %1425, %1441 : vector<5x5xf32>
    %1443 = vector.extract_strided_slice %839 {offsets = [2, 2], sizes = [5, 5], strides = [1, 1]} : vector<7x7xf32> to vector<5x5xf32>
    %c0_687 = arith.constant 0 : index
    %c35_688 = arith.constant 35 : index
    %1444 = memref.load %arg4[%c0_687, %c35_688] : memref<4x36xf32, #tpu.memory_space<smem>>
    %1445 = vector.broadcast %1444 : f32 to vector<5x5xf32>
    %1446 = arith.mulf %1445, %1443 : vector<5x5xf32>
    %1447 = arith.addf %1430, %1446 : vector<5x5xf32>
    %c1_689 = arith.constant 1 : index
    %c35_690 = arith.constant 35 : index
    %1448 = memref.load %arg4[%c1_689, %c35_690] : memref<4x36xf32, #tpu.memory_space<smem>>
    %1449 = vector.broadcast %1448 : f32 to vector<5x5xf32>
    %1450 = arith.mulf %1449, %1443 : vector<5x5xf32>
    %1451 = arith.addf %1434, %1450 : vector<5x5xf32>
    %c2_691 = arith.constant 2 : index
    %c35_692 = arith.constant 35 : index
    %1452 = memref.load %arg4[%c2_691, %c35_692] : memref<4x36xf32, #tpu.memory_space<smem>>
    %1453 = vector.broadcast %1452 : f32 to vector<5x5xf32>
    %1454 = arith.mulf %1453, %1443 : vector<5x5xf32>
    %1455 = arith.addf %1438, %1454 : vector<5x5xf32>
    %c3_693 = arith.constant 3 : index
    %c35_694 = arith.constant 35 : index
    %1456 = memref.load %arg4[%c3_693, %c35_694] : memref<4x36xf32, #tpu.memory_space<smem>>
    %1457 = vector.broadcast %1456 : f32 to vector<5x5xf32>
    %1458 = arith.mulf %1457, %1443 : vector<5x5xf32>
    %1459 = arith.addf %1442, %1458 : vector<5x5xf32>
    %cst_695 = arith.constant 0.000000e+00 : f32
    %1460 = vector.broadcast %cst_695 : f32 to vector<5x5xf32>
    %1461 = arith.maximumf %1447, %1460 : vector<5x5xf32>
    %1462 = vector.extract_strided_slice %1461 {offsets = [0, 0], sizes = [1, 5], strides = [1, 1]} : vector<5x5xf32> to vector<1x5xf32>
    %1463 = vector.extract_strided_slice %1461 {offsets = [1, 0], sizes = [1, 5], strides = [1, 1]} : vector<5x5xf32> to vector<1x5xf32>
    %1464 = arith.maximumf %1462, %1463 : vector<1x5xf32>
    %1465 = vector.extract_strided_slice %1461 {offsets = [2, 0], sizes = [1, 5], strides = [1, 1]} : vector<5x5xf32> to vector<1x5xf32>
    %1466 = arith.maximumf %1464, %1465 : vector<1x5xf32>
    %1467 = vector.extract_strided_slice %1461 {offsets = [3, 0], sizes = [1, 5], strides = [1, 1]} : vector<5x5xf32> to vector<1x5xf32>
    %1468 = arith.maximumf %1466, %1467 : vector<1x5xf32>
    %1469 = vector.extract_strided_slice %1461 {offsets = [4, 0], sizes = [1, 5], strides = [1, 1]} : vector<5x5xf32> to vector<1x5xf32>
    %1470 = arith.maximumf %1468, %1469 : vector<1x5xf32>
    %cst_696 = arith.constant 0.000000e+00 : f32
    %1471 = vector.broadcast %cst_696 : f32 to vector<5x5xf32>
    %1472 = arith.maximumf %1451, %1471 : vector<5x5xf32>
    %1473 = vector.extract_strided_slice %1472 {offsets = [0, 0], sizes = [1, 5], strides = [1, 1]} : vector<5x5xf32> to vector<1x5xf32>
    %1474 = vector.extract_strided_slice %1472 {offsets = [1, 0], sizes = [1, 5], strides = [1, 1]} : vector<5x5xf32> to vector<1x5xf32>
    %1475 = arith.maximumf %1473, %1474 : vector<1x5xf32>
    %1476 = vector.extract_strided_slice %1472 {offsets = [2, 0], sizes = [1, 5], strides = [1, 1]} : vector<5x5xf32> to vector<1x5xf32>
    %1477 = arith.maximumf %1475, %1476 : vector<1x5xf32>
    %1478 = vector.extract_strided_slice %1472 {offsets = [3, 0], sizes = [1, 5], strides = [1, 1]} : vector<5x5xf32> to vector<1x5xf32>
    %1479 = arith.maximumf %1477, %1478 : vector<1x5xf32>
    %1480 = vector.extract_strided_slice %1472 {offsets = [4, 0], sizes = [1, 5], strides = [1, 1]} : vector<5x5xf32> to vector<1x5xf32>
    %1481 = arith.maximumf %1479, %1480 : vector<1x5xf32>
    %1482 = arith.maximumf %1470, %1481 : vector<1x5xf32>
    %cst_697 = arith.constant 0.000000e+00 : f32
    %1483 = vector.broadcast %cst_697 : f32 to vector<5x5xf32>
    %1484 = arith.maximumf %1455, %1483 : vector<5x5xf32>
    %1485 = vector.extract_strided_slice %1484 {offsets = [0, 0], sizes = [1, 5], strides = [1, 1]} : vector<5x5xf32> to vector<1x5xf32>
    %1486 = vector.extract_strided_slice %1484 {offsets = [1, 0], sizes = [1, 5], strides = [1, 1]} : vector<5x5xf32> to vector<1x5xf32>
    %1487 = arith.maximumf %1485, %1486 : vector<1x5xf32>
    %1488 = vector.extract_strided_slice %1484 {offsets = [2, 0], sizes = [1, 5], strides = [1, 1]} : vector<5x5xf32> to vector<1x5xf32>
    %1489 = arith.maximumf %1487, %1488 : vector<1x5xf32>
    %1490 = vector.extract_strided_slice %1484 {offsets = [3, 0], sizes = [1, 5], strides = [1, 1]} : vector<5x5xf32> to vector<1x5xf32>
    %1491 = arith.maximumf %1489, %1490 : vector<1x5xf32>
    %1492 = vector.extract_strided_slice %1484 {offsets = [4, 0], sizes = [1, 5], strides = [1, 1]} : vector<5x5xf32> to vector<1x5xf32>
    %1493 = arith.maximumf %1491, %1492 : vector<1x5xf32>
    %1494 = arith.maximumf %1482, %1493 : vector<1x5xf32>
    %cst_698 = arith.constant 0.000000e+00 : f32
    %1495 = vector.broadcast %cst_698 : f32 to vector<5x5xf32>
    %1496 = arith.maximumf %1459, %1495 : vector<5x5xf32>
    %1497 = vector.extract_strided_slice %1496 {offsets = [0, 0], sizes = [1, 5], strides = [1, 1]} : vector<5x5xf32> to vector<1x5xf32>
    %1498 = vector.extract_strided_slice %1496 {offsets = [1, 0], sizes = [1, 5], strides = [1, 1]} : vector<5x5xf32> to vector<1x5xf32>
    %1499 = arith.maximumf %1497, %1498 : vector<1x5xf32>
    %1500 = vector.extract_strided_slice %1496 {offsets = [2, 0], sizes = [1, 5], strides = [1, 1]} : vector<5x5xf32> to vector<1x5xf32>
    %1501 = arith.maximumf %1499, %1500 : vector<1x5xf32>
    %1502 = vector.extract_strided_slice %1496 {offsets = [3, 0], sizes = [1, 5], strides = [1, 1]} : vector<5x5xf32> to vector<1x5xf32>
    %1503 = arith.maximumf %1501, %1502 : vector<1x5xf32>
    %1504 = vector.extract_strided_slice %1496 {offsets = [4, 0], sizes = [1, 5], strides = [1, 1]} : vector<5x5xf32> to vector<1x5xf32>
    %1505 = arith.maximumf %1503, %1504 : vector<1x5xf32>
    %1506 = arith.maximumf %1494, %1505 : vector<1x5xf32>
    %1507 = vector.extract_strided_slice %1506 {offsets = [0, 0], sizes = [1, 1], strides = [1, 1]} : vector<1x5xf32> to vector<1x1xf32>
    %1508 = vector.extract_strided_slice %1506 {offsets = [0, 1], sizes = [1, 1], strides = [1, 1]} : vector<1x5xf32> to vector<1x1xf32>
    %1509 = arith.maximumf %1507, %1508 : vector<1x1xf32>
    %1510 = vector.extract_strided_slice %1506 {offsets = [0, 1], sizes = [1, 1], strides = [1, 1]} : vector<1x5xf32> to vector<1x1xf32>
    %1511 = vector.extract_strided_slice %1506 {offsets = [0, 2], sizes = [1, 1], strides = [1, 1]} : vector<1x5xf32> to vector<1x1xf32>
    %1512 = arith.maximumf %1510, %1511 : vector<1x1xf32>
    %1513 = vector.extract_strided_slice %1506 {offsets = [0, 2], sizes = [1, 1], strides = [1, 1]} : vector<1x5xf32> to vector<1x1xf32>
    %1514 = vector.extract_strided_slice %1506 {offsets = [0, 3], sizes = [1, 1], strides = [1, 1]} : vector<1x5xf32> to vector<1x1xf32>
    %1515 = arith.maximumf %1513, %1514 : vector<1x1xf32>
    %1516 = vector.extract_strided_slice %1506 {offsets = [0, 3], sizes = [1, 1], strides = [1, 1]} : vector<1x5xf32> to vector<1x1xf32>
    %1517 = vector.extract_strided_slice %1506 {offsets = [0, 4], sizes = [1, 1], strides = [1, 1]} : vector<1x5xf32> to vector<1x1xf32>
    %1518 = arith.maximumf %1516, %1517 : vector<1x1xf32>
    %1519 = tpu.concatenate %1509, %1512, %1515, %1518 in 1 : vector<1x1xf32>, vector<1x1xf32>, vector<1x1xf32>, vector<1x1xf32> -> vector<1x4xf32>
    %1520 = vector.shape_cast %1519 : vector<1x4xf32> to vector<1x1x4xf32>
    %c0_699 = arith.constant 0 : index
    %c0_700 = arith.constant 0 : index
    %c0_701 = arith.constant 0 : index
    %1521 = vector.load %arg6[%c0_699, %c0_700, %c0_701] : memref<1x1x4xf32, #tpu.memory_space<vmem>>, vector<1x1x4xf32>
    tpu.vector_store %arg6[%c0_699, %c0_700, %c0_701], %1520 {strides = array<i32>} : memref<1x1x4xf32, #tpu.memory_space<vmem>>, vector<1x1x4xf32>,
    return
  }
  func.func @transform_0(%arg0: i32) -> (i32, i32, i32, i32) {
    %c0_i32 = arith.constant 0 : i32
    %c0_i32_0 = arith.constant 0 : i32
    %c0_i32_1 = arith.constant 0 : i32
    %c0_i32_2 = arith.constant 0 : i32
    return %arg0, %c0_i32, %c0_i32_0, %c0_i32_1 : i32, i32, i32, i32
  }
  func.func @transform_1(%arg0: i32) -> (i32, i32) {
    %c0_i32 = arith.constant 0 : i32
    %c0_i32_0 = arith.constant 0 : i32
    %c0_i32_1 = arith.constant 0 : i32
    return %c0_i32, %c0_i32_0 : i32, i32
  }
  func.func @transform_2(%arg0: i32) -> i32 {
    %c0_i32 = arith.constant 0 : i32
    %c0_i32_0 = arith.constant 0 : i32
    return %c0_i32 : i32
  }
  func.func @transform_3(%arg0: i32) -> (i32, i32) {
    %c0_i32 = arith.constant 0 : i32
    %c0_i32_0 = arith.constant 0 : i32
    %c0_i32_1 = arith.constant 0 : i32
    return %c0_i32, %c0_i32_0 : i32, i32
  }
  func.func @transform_4(%arg0: i32) -> i32 {
    %c0_i32 = arith.constant 0 : i32
    %c0_i32_0 = arith.constant 0 : i32
    return %c0_i32 : i32
  }
  func.func @transform_5(%arg0: i32) -> (i32, i32, i32) {
    %c0_i32 = arith.constant 0 : i32
    %c0_i32_0 = arith.constant 0 : i32
    %c0_i32_1 = arith.constant 0 : i32
    return %arg0, %c0_i32, %c0_i32_0 : i32, i32, i32
  }
}

</mosaic_0001>

<llo_original>
// kernel: tpu_custom_call.1
$region0: #{tpu_custom_call.1}
  #allocation0 [shape = 'u32[]', space=smem, size = 0x4, offset = 0x4, fixed_abs, tag = 'smem constant byte address 0x4 - core index']
  #allocation1 [shape = 'u32[144,128]{1,0:T(1,128)}', space=vmem, size = 0x12000, scoped, tag = 'internal scratch']
  %s0 = inlined_call_operand.hbm [shape: f32[2,4,16,16], index: 0, kind: input, shape index: {}]
  %s1 = inlined_call_operand.hbm [shape: f32[4,36], index: 1, kind: input, shape index: {}]
  %s2 = inlined_call_operand.vmem [shape: f32[4], index: 2, kind: input, shape index: {}]
  %s3 = inlined_call_operand.vmem [shape: f32[4,36], index: 3, kind: input, shape index: {}]
  %s4 = inlined_call_operand.vmem [shape: f32[4], index: 4, kind: input, shape index: {}]
  %s5 = inlined_call_operand.hbm [shape: f32[2,1,4], index: 5, kind: output, shape index: {}]
  %s6 = sld [smem:[#allocation0]]
  $region73: #{tpu_custom_call.1} parent=0
    _
  %s8 = ssub.s32 1, %s6
  %s9 = scalar_select 0, %s8, %s6
  $region1: #{tpu_custom_call.1} parent=0
    #allocation2 [shape = 'u8[65536]{0}', space=vmem, size = 0x10000, scoped, tag = 'input window, operand 0']
    #allocation3 [shape = 's32[2]{0}', space=sflag, size = 0x8, scoped, tag = 'scoped memory for tpu_custom_call.1']
    #allocation4 [shape = 's32[2]{0}', space=sflag, size = 0x8, scoped, tag = 'scoped memory for tpu_custom_call.1']
    #allocation5 [shape = 's32[2]{0}', space=sflag, size = 0x8, scoped, tag = 'scoped memory for tpu_custom_call.1']
    #allocation6 [shape = 's32[2]{0}', space=sflag, size = 0x8, scoped, tag = 'scoped memory for tpu_custom_call.1']
    #allocation7 [shape = 'u8[2048]{0}', space=smem, size = 0x800, scoped, tag = 'input window, operand 1, single buffered']
    #allocation8 [shape = 'u8[512]{0}', space=smem, size = 0x200, scoped, tag = 'input window, operand 2, single buffered']
    #allocation9 [shape = 'u8[2048]{0}', space=smem, size = 0x800, scoped, tag = 'input window, operand 3, single buffered']
    #allocation10 [shape = 's32[1]{0}', space=sflag, size = 0x4, scoped, tag = 'scoped memory for tpu_custom_call.1']
    #allocation11 [shape = 'u8[512]{0}', space=smem, size = 0x200, scoped, tag = 'input window, operand 4, single buffered']
    #allocation12 [shape = 'u8[1024]{0}', space=vmem, size = 0x400, scoped, tag = 'output window, operand 0']
    %10 = vsyncpa [#allocation3], 0
    %s11 = scalar_lea.sflag [#allocation3], 1
    %12 = vsyncpa %s11, 0
    %13 = vsyncpa [#allocation5], 0
    %14 = vsyncpa [#allocation6], 0
    %15 = vsyncpa [#allocation10], 0
    %16 = vsyncpa [#allocation4], 0
    %s17 = scalar_lea.sflag [#allocation4], 1
    %18 = vsyncpa %s17, 0
    loop: start=0, step=1, limit=4
    $region2: #{tpu_custom_call.1} parent=1 // loop_pre_header
      _
    $region3: #{tpu_custom_call.1} parent=1 // loop_header
      %s20 = sphi 0, %s24
      %p21 = scmp.ge.s32.totalorder %s20, 4
      %s30 = sphi 0, %s32
      %s33 = sphi 0, %s30
      %s34 = sphi 0, %s33
      %s50 = sphi 0, %s34
      %s54 = sphi 0, %s54
      %s56 = sphi 0, %s54
      %s57 = sphi 0, %s56
      %s71 = sphi 0, %s57
      %s75 = sphi 0, %s75
      %s77 = sphi 0, %s75
      %s78 = sphi 0, %s77
      %s92 = sphi 0, %s78
      %s96 = sphi 0, %s96
      %s98 = sphi 0, %s96
      %s99 = sphi 0, %s98
      %s113 = sphi 0, %s99
      %s117 = sphi 0, %s117
      %s119 = sphi 0, %s117
      %s120 = sphi 0, %s119
      %s134 = sphi 0, %s120
      %s140 = sphi 0, %s142
      %s143 = sphi 0, %s140
      %s144 = sphi 0, %s143
      %s160 = sphi 0, %s144
    $region4: #{tpu_custom_call.1} parent=1 // loop_header_branch
      %23 = sbr.rel (%p21) target = $region8
    $region5: #{tpu_custom_call.1} parent=1 // loop_body
      %s25 = ssub.s32 %s20, 1
      %s26 = ssub.s32 %s20, 2
      %s27 = sadd.s32 %s20, 1
      %s28 = ssub.s32 %s20, %s27
      %p29 = scmp.eq.s32.totalorder %s28, 0
      %s31 = sadd.s32 %s30, 1
      %s32 = scalar_select %p29, %s30, %s31
      %p35 = pneg %p29
      %p36 = scmp.eq.s32.totalorder %s20, 1
      %p37 = por %p35, %p36
      %p38 = scmp.ne.s32.totalorder %s30, %s33
      %p39 = scmp.eq.s32.totalorder %s20, 0
      %p40 = por %p38, %p39
      %p41 = scmp.ne.s32.totalorder %s30, %s33
      %p42 = scmp.eq.s32.totalorder %s25, 1
      %p43 = por %p41, %p42
      %p44 = scmp.ne.s32.totalorder %s33, %s34
      %p45 = scmp.eq.s32.totalorder %s25, 0
      %p46 = por %p44, %p45
      %p47 = scmp.ne.s32.totalorder %s33, %s34
      %p48 = scmp.eq.s32.totalorder %s26, 1
      %p49 = por %p47, %p48
      %p51 = scmp.ne.s32.totalorder %s34, %s50
      %p52 = scmp.eq.s32.totalorder %s26, 0
      %p53 = por %p51, %p52
      %s55 = sadd.s32 %s54, 1
      %p58 = scmp.eq.s32.totalorder %s20, 1
      %p59 = scmp.ne.s32.totalorder %s54, %s56
      %p60 = scmp.eq.s32.totalorder %s20, 0
      %p61 = por %p59, %p60
      %p62 = scmp.ne.s32.totalorder %s54, %s56
      %p63 = scmp.eq.s32.totalorder %s25, 1
      %p64 = por %p62, %p63
      %p65 = scmp.ne.s32.totalorder %s56, %s57
      %p66 = scmp.eq.s32.totalorder %s25, 0
      %p67 = por %p65, %p66
      %p68 = scmp.ne.s32.totalorder %s56, %s57
      %p69 = scmp.eq.s32.totalorder %s26, 1
      %p70 = por %p68, %p69
      %p72 = scmp.ne.s32.totalorder %s57, %s71
      %p73 = scmp.eq.s32.totalorder %s26, 0
      %p74 = por %p72, %p73
      %s76 = sadd.s32 %s75, 1
      %p79 = scmp.eq.s32.totalorder %s20, 1
      %p80 = scmp.ne.s32.totalorder %s75, %s77
      %p81 = scmp.eq.s32.totalorder %s20, 0
      %p82 = por %p80, %p81
      %p83 = scmp.ne.s32.totalorder %s75, %s77
      %p84 = scmp.eq.s32.totalorder %s25, 1
      %p85 = por %p83, %p84
      %p86 = scmp.ne.s32.totalorder %s77, %s78
      %p87 = scmp.eq.s32.totalorder %s25, 0
      %p88 = por %p86, %p87
      %p89 = scmp.ne.s32.totalorder %s77, %s78
      %p90 = scmp.eq.s32.totalorder %s26, 1
      %p91 = por %p89, %p90
      %p93 = scmp.ne.s32.totalorder %s78, %s92
      %p94 = scmp.eq.s32.totalorder %s26, 0
      %p95 = por %p93, %p94
      %s97 = sadd.s32 %s96, 1
      %p100 = scmp.eq.s32.totalorder %s20, 1
      %p101 = scmp.ne.s32.totalorder %s96, %s98
      %p102 = scmp.eq.s32.totalorder %s20, 0
      %p103 = por %p101, %p102
      %p104 = scmp.ne.s32.totalorder %s96, %s98
      %p105 = scmp.eq.s32.totalorder %s25, 1
      %p106 = por %p104, %p105
      %p107 = scmp.ne.s32.totalorder %s98, %s99
      %p108 = scmp.eq.s32.totalorder %s25, 0
      %p109 = por %p107, %p108
      %p110 = scmp.ne.s32.totalorder %s98, %s99
      %p111 = scmp.eq.s32.totalorder %s26, 1
      %p112 = por %p110, %p111
      %p114 = scmp.ne.s32.totalorder %s99, %s113
      %p115 = scmp.eq.s32.totalorder %s26, 0
      %p116 = por %p114, %p115
      %s118 = sadd.s32 %s117, 1
      %p121 = scmp.eq.s32.totalorder %s20, 1
      %p122 = scmp.ne.s32.totalorder %s117, %s119
      %p123 = scmp.eq.s32.totalorder %s20, 0
      %p124 = por %p122, %p123
      %p125 = scmp.ne.s32.totalorder %s117, %s119
      %p126 = scmp.eq.s32.totalorder %s25, 1
      %p127 = por %p125, %p126
      %p128 = scmp.ne.s32.totalorder %s119, %s120
      %p129 = scmp.eq.s32.totalorder %s25, 0
      %p130 = por %p128, %p129
      %p131 = scmp.ne.s32.totalorder %s119, %s120
      %p132 = scmp.eq.s32.totalorder %s26, 1
      %p133 = por %p131, %p132
      %p135 = scmp.ne.s32.totalorder %s120, %s134
      %p136 = scmp.eq.s32.totalorder %s26, 0
      %p137 = por %p135, %p136
      %s138 = ssub.s32 %s20, %s27
      %p139 = scmp.eq.s32.totalorder %s138, 0
      %s141 = sadd.s32 %s140, 1
      %s142 = scalar_select %p139, %s140, %s141
      %p145 = pneg %p139
      %p146 = scmp.eq.s32.totalorder %s20, 1
      %p147 = por %p145, %p146
      %p148 = scmp.ne.s32.totalorder %s140, %s143
      %p149 = scmp.eq.s32.totalorder %s20, 0
      %p150 = por %p148, %p149
      %p151 = scmp.ne.s32.totalorder %s140, %s143
      %p152 = scmp.eq.s32.totalorder %s25, 1
      %p153 = por %p151, %p152
      %p154 = scmp.ne.s32.totalorder %s143, %s144
      %p155 = scmp.eq.s32.totalorder %s25, 0
      %p156 = por %p154, %p155
      %p157 = scmp.ne.s32.totalorder %s143, %s144
      %p158 = scmp.eq.s32.totalorder %s26, 1
      %p159 = por %p157, %p158
      %p161 = scmp.ne.s32.totalorder %s144, %s160
      %p162 = scmp.eq.s32.totalorder %s26, 0
      %p163 = por %p161, %p162
      %p164 = scmp.le.s32.totalorder 1, %s20
      %p165 = scmp.lt.s32.totalorder %s20, 3
      %p166 = pnand %p164, %p165
      %p167 = pneg %p166
      // Predicated region
      $region9: #{tpu_custom_call.1} parent=5 // pred_check
        _
      $region10: #{tpu_custom_call.1} parent=5 // pred_check_branch
        %169 = sbr.rel (%p166) target = $region12
      $region11: #{tpu_custom_call.1} parent=5 // pred_region
        %s170 = ssub.s32 %s20, 1
        // Predicated region
        $region13: #{tpu_custom_call.1} parent=11 // pred_check
          %p171 = pneg %p67
        $region14: #{tpu_custom_call.1} parent=11 // pred_check_branch
          %173 = sbr.rel (%p171) target = $region16
        $region15: #{tpu_custom_call.1} parent=11 // pred_region
          %s175 = ssub.s32 64, 64
          %176 = vsyncadd [#allocation5], %s175
          %179 = dma.hbm_to_smem %s1, 64, [#allocation7], [#allocation5]
        $region16: #{tpu_custom_call.1} parent=11 // pred_fallthru
          _
        // Predicated region
        $region17: #{tpu_custom_call.1} parent=11 // pred_check
          %p180 = pneg %p88
        $region18: #{tpu_custom_call.1} parent=11 // pred_check_branch
          %182 = sbr.rel (%p180) target = $region20
        $region19: #{tpu_custom_call.1} parent=11 // pred_region
          %s184 = ssub.s32 16, 16
          %185 = vsyncadd [#allocation6], %s184
          %s187 = sshll.u32 %s2, 4
          %s188 = int_to_ptr.vmem [resolvable:$true] %s187
          %190 = dma.vmem_to_smem %s188, 16, [#allocation8], [#allocation6]
        $region20: #{tpu_custom_call.1} parent=11 // pred_fallthru
          _
        // Predicated region
        $region21: #{tpu_custom_call.1} parent=11 // pred_check
          %p191 = pneg %p109
        $region22: #{tpu_custom_call.1} parent=11 // pred_check_branch
          %193 = sbr.rel (%p191) target = $region24
        $region23: #{tpu_custom_call.1} parent=11 // pred_region
          %s195 = ssub.s32 64, 64
          %196 = vsyncadd [#allocation10], %s195
          %s198 = sshll.u32 %s3, 4
          %s199 = int_to_ptr.vmem [resolvable:$true] %s198
          %201 = dma.vmem_to_smem %s199, 64, [#allocation9], [#allocation10]
        $region24: #{tpu_custom_call.1} parent=11 // pred_fallthru
          _
        // Predicated region
        $region25: #{tpu_custom_call.1} parent=11 // pred_check
          %p202 = pneg %p130
        $region26: #{tpu_custom_call.1} parent=11 // pred_check_branch
          %204 = sbr.rel (%p202) target = $region28
        $region27: #{tpu_custom_call.1} parent=11 // pred_region
          %s206 = ssub.s32 16, 16
          %207 = vsyncadd [#allocation10], %s206
          %s209 = sshll.u32 %s4, 4
          %s210 = int_to_ptr.vmem [resolvable:$true] %s209
          %212 = dma.vmem_to_smem %s210, 16, [#allocation11], [#allocation10]
        $region28: #{tpu_custom_call.1} parent=11 // pred_fallthru
          _
      $region12: #{tpu_custom_call.1} parent=5 // pred_fallthru
        _
      %p213 = scmp.lt.s32.totalorder %s20, 2
      // Predicated region
      $region29: #{tpu_custom_call.1} parent=5 // pred_check
        %p214 = pneg %p213
      $region30: #{tpu_custom_call.1} parent=5 // pred_check_branch
        %216 = sbr.rel (%p214) target = $region32
      $region31: #{tpu_custom_call.1} parent=5 // pred_region
        // Predicated region
        $region33: #{tpu_custom_call.1} parent=31 // pred_check
          %p217 = pneg %p40
        $region34: #{tpu_custom_call.1} parent=31 // pred_check_branch
          %219 = sbr.rel (%p217) target = $region36
        $region35: #{tpu_custom_call.1} parent=31 // pred_region
          %s220 = sand.u32 %s30, 1
          %s221 = scalar_lea.sflag [#allocation3], %s220
          %s222 = sand.u32 %s30, 1
          %s223 = smul.addr %s222, 64
          %s224 = scalar_lea.vmem [#allocation2], %s223
          %s226 = ssub.s32 1024, 1024
          %227 = vsyncadd %s221, %s226
          %s228 = smul.addr %s20, 8
          %s229 = smul.addr %s228, 128
          %s230 = scalar_lea.hbm %s0, %s229
          %s231 = sshll.u32 %s224, 4
          %s232 = int_to_ptr.vmem [resolvable:$true] %s231
          %237 = dma.hbm_to_vmem [thread:$0]  %s230, 1024, %s232, %s221, 128, 128, 8
        $region36: #{tpu_custom_call.1} parent=31 // pred_fallthru
          _
      $region32: #{tpu_custom_call.1} parent=5 // pred_fallthru
        _
      %p238 = scmp.le.s32.totalorder 1, %s20
      %p239 = scmp.lt.s32.totalorder %s20, 3
      %p240 = pnand %p238, %p239
      %p241 = pneg %p240
      // Predicated region
      $region37: #{tpu_custom_call.1} parent=5 // pred_check
        _
      $region38: #{tpu_custom_call.1} parent=5 // pred_check_branch
        %243 = sbr.rel (%p240) target = $region40
      $region39: #{tpu_custom_call.1} parent=5 // pred_region
        %s244 = ssub.s32 %s20, 1
        %s245 = sand.u32 %s33, 1
        %s246 = scalar_lea.sflag [#allocation3], %s245
        %s247 = sand.u32 %s33, 1
        %s248 = smul.addr %s247, 64
        %s249 = scalar_lea.vmem [#allocation2], %s248
        // Predicated region
        $region41: #{tpu_custom_call.1} parent=39 // pred_check
          %p250 = pneg %p46
        $region42: #{tpu_custom_call.1} parent=39 // pred_check_branch
          %252 = sbr.rel (%p250) target = $region44
        $region43: #{tpu_custom_call.1} parent=39 // pred_region
          %253 = dma.done %s246, 1024
        $region44: #{tpu_custom_call.1} parent=39 // pred_fallthru
          _
        // Predicated region
        $region45: #{tpu_custom_call.1} parent=39 // pred_check
          %p254 = pneg %p67
        $region46: #{tpu_custom_call.1} parent=39 // pred_check_branch
          %256 = sbr.rel (%p254) target = $region48
        $region47: #{tpu_custom_call.1} parent=39 // pred_region
          %257 = dma.done [#allocation5], 64
        $region48: #{tpu_custom_call.1} parent=39 // pred_fallthru
          _
        // Predicated region
        $region49: #{tpu_custom_call.1} parent=39 // pred_check
          %p258 = pneg %p88
        $region50: #{tpu_custom_call.1} parent=39 // pred_check_branch
          %260 = sbr.rel (%p258) target = $region52
        $region51: #{tpu_custom_call.1} parent=39 // pred_region
          %261 = dma.done [#allocation6], 16
        $region52: #{tpu_custom_call.1} parent=39 // pred_fallthru
          _
        // Predicated region
        $region53: #{tpu_custom_call.1} parent=39 // pred_check
          %p262 = pneg %p109
        $region54: #{tpu_custom_call.1} parent=39 // pred_check_branch
          %264 = sbr.rel (%p262) target = $region56
        $region55: #{tpu_custom_call.1} parent=39 // pred_region
          %265 = dma.done [#allocation10], 64
        $region56: #{tpu_custom_call.1} parent=39 // pred_fallthru
          _
        // Predicated region
        $region57: #{tpu_custom_call.1} parent=39 // pred_check
          %p266 = pneg %p130
        $region58: #{tpu_custom_call.1} parent=39 // pred_check_branch
          %268 = sbr.rel (%p266) target = $region60
        $region59: #{tpu_custom_call.1} parent=39 // pred_region
          %269 = dma.done [#allocation10], 16
        $region60: #{tpu_custom_call.1} parent=39 // pred_fallthru
          _
        %270 = sfence
        %s271 = sand.u32 %s33, 1
        %s272 = scalar_lea.sflag [#allocation3], %s271
        %s273 = sand.u32 %s33, 1
        %s274 = smul.addr %s273, 64
        %s275 = scalar_lea.vmem [#allocation2], %s274
        %p276 = pneg %p46
        %p277 = pneg %p43
        %p278 = pneg %p67
        %p279 = pneg %p64
        %p280 = pneg %p88
        %p281 = pneg %p85
        %p282 = pneg %p109
        %p283 = pneg %p106
        %p284 = pneg %p130
        %p285 = pneg %p127
        %p286 = pneg %p156
        %p287 = pneg %p153
        %s288 = sand.u32 %s143, 1
        %s289 = scalar_lea.sflag [#allocation4], %s288
        %s290 = sand.u32 %s143, 1
        %s291 = scalar_lea.vmem [#allocation12], %s290
        %s292 = sld [smem:[#allocation8]]
        %v293 = vstv %s292
        %s294 = sld [smem:[#allocation8 + $0x1]]
        %v295 = vstv %s294
        %s296 = sld [smem:[#allocation8 + $0x2]]
        %v297 = vstv %s296
        %s298 = sld [smem:[#allocation8 + $0x3]]
        %v299 = vstv %s298
        %v300 = vld [vmem:[%s249] sm:$0xff]
        %v301 = vld [vmem:[%s249 + $0x8] sm:$0x3f]
        %s302 = sld [smem:[#allocation7]]
        %v303 = vstv %s302
        %v304 = vmul.f32 %v303, %v300
        %v305 = vmul.f32 %v303, %v301
        %v306 = vadd.f32 %v293, %v304
        %v307 = vadd.f32 %v293, %v305
        %s308 = sld [smem:[#allocation7 + $0x80]]
        %v309 = vstv %s308
        %v310 = vmul.f32 %v309, %v300
        %v311 = vmul.f32 %v309, %v301
        %v312 = vadd.f32 %v295, %v310
        %v313 = vadd.f32 %v295, %v311
        %s314 = sld [smem:[#allocation7 + $0x100]]
        %v315 = vstv %s314
        %v316 = vmul.f32 %v315, %v300
        %v317 = vmul.f32 %v315, %v301
        %v318 = vadd.f32 %v297, %v316
        %v319 = vadd.f32 %v297, %v317
        %s320 = sld [smem:[#allocation7 + $0x180]]
        %v321 = vstv %s320
        %v322 = vmul.f32 %v321, %v300
        %v323 = vmul.f32 %v321, %v301
        %v324 = vadd.f32 %v299, %v322
        %v325 = vadd.f32 %v299, %v323
        %s326 = sld [smem:[#allocation7 + $0x1]]
        %v327 = vstv %s326
        %v328 = vmul.f32 %v327, %v300
        %v329 = vmul.f32 %v327, %v301
        %332 = vrot.lane.b32.xlu0 %v328, 127
        %v333 = vpop.permute.xlu0 %332
        %334 = vrot.lane.b32.xlu0 %v329, 127
        %v335 = vpop.permute.xlu0 %334
        %v338 = vadd.f32 %v306, %v333
        %v339 = vadd.f32 %v307, %v335
        %s340 = sld [smem:[#allocation7 + $0x81]]
        %v341 = vstv %s340
        %v342 = vmul.f32 %v341, %v300
        %v343 = vmul.f32 %v341, %v301
        %346 = vrot.lane.b32.xlu0 %v342, 127
        %v347 = vpop.permute.xlu0 %346
        %348 = vrot.lane.b32.xlu0 %v343, 127
        %v349 = vpop.permute.xlu0 %348
        %v352 = vadd.f32 %v312, %v347
        %v353 = vadd.f32 %v313, %v349
        %s354 = sld [smem:[#allocation7 + $0x101]]
        %v355 = vstv %s354
        %v356 = vmul.f32 %v355, %v300
        %v357 = vmul.f32 %v355, %v301
        %360 = vrot.lane.b32.xlu0 %v356, 127
        %v361 = vpop.permute.xlu0 %360
        %362 = vrot.lane.b32.xlu0 %v357, 127
        %v363 = vpop.permute.xlu0 %362
        %v366 = vadd.f32 %v318, %v361
        %v367 = vadd.f32 %v319, %v363
        %s368 = sld [smem:[#allocation7 + $0x181]]
        %v369 = vstv %s368
        %v370 = vmul.f32 %v369, %v300
        %v371 = vmul.f32 %v369, %v301
        %374 = vrot.lane.b32.xlu0 %v370, 127
        %v375 = vpop.permute.xlu0 %374
        %376 = vrot.lane.b32.xlu0 %v371, 127
        %v377 = vpop.permute.xlu0 %376
        %v380 = vadd.f32 %v324, %v375
        %v381 = vadd.f32 %v325, %v377
        %s382 = sld [smem:[#allocation7 + $0x2]]
        %v383 = vstv %s382
        %v384 = vmul.f32 %v383, %v300
        %v385 = vmul.f32 %v383, %v301
        %388 = vrot.lane.b32.xlu0 %v384, 126
        %v389 = vpop.permute.xlu0 %388
        %390 = vrot.lane.b32.xlu0 %v385, 126
        %v391 = vpop.permute.xlu0 %390
        %v394 = vadd.f32 %v338, %v389
        %v395 = vadd.f32 %v339, %v391
        %s396 = sld [smem:[#allocation7 + $0x82]]
        %v397 = vstv %s396
        %v398 = vmul.f32 %v397, %v300
        %v399 = vmul.f32 %v397, %v301
        %402 = vrot.lane.b32.xlu0 %v398, 126
        %v403 = vpop.permute.xlu0 %402
        %404 = vrot.lane.b32.xlu0 %v399, 126
        %v405 = vpop.permute.xlu0 %404
        %v408 = vadd.f32 %v352, %v403
        %v409 = vadd.f32 %v353, %v405
        %s410 = sld [smem:[#allocation7 + $0x102]]
        %v411 = vstv %s410
        %v412 = vmul.f32 %v411, %v300
        %v413 = vmul.f32 %v411, %v301
        %416 = vrot.lane.b32.xlu0 %v412, 126
        %v417 = vpop.permute.xlu0 %416
        %418 = vrot.lane.b32.xlu0 %v413, 126
        %v419 = vpop.permute.xlu0 %418
        %v422 = vadd.f32 %v366, %v417
        %v423 = vadd.f32 %v367, %v419
        %s424 = sld [smem:[#allocation7 + $0x182]]
        %v425 = vstv %s424
        %v426 = vmul.f32 %v425, %v300
        %v427 = vmul.f32 %v425, %v301
        %430 = vrot.lane.b32.xlu0 %v426, 126
        %v431 = vpop.permute.xlu0 %430
        %432 = vrot.lane.b32.xlu0 %v427, 126
        %v433 = vpop.permute.xlu0 %432
        %v436 = vadd.f32 %v380, %v431
        %v437 = vadd.f32 %v381, %v433
        %v438 = vld [vmem:[%s249 + $0x1] sm:$0xff]
        %v439 = vld [vmem:[%s249 + $0x9] sm:$0x3f]
        %s440 = sld [smem:[#allocation7 + $0x3]]
        %v441 = vstv %s440
        %v442 = vmul.f32 %v441, %v438
        %v443 = vmul.f32 %v441, %v439
        %v444 = vadd.f32 %v394, %v442
        %v445 = vadd.f32 %v395, %v443
        %s446 = sld [smem:[#allocation7 + $0x83]]
        %v447 = vstv %s446
        %v448 = vmul.f32 %v447, %v438
        %v449 = vmul.f32 %v447, %v439
        %v450 = vadd.f32 %v408, %v448
        %v451 = vadd.f32 %v409, %v449
        %s452 = sld [smem:[#allocation7 + $0x103]]
        %v453 = vstv %s452
        %v454 = vmul.f32 %v453, %v438
        %v455 = vmul.f32 %v453, %v439
        %v456 = vadd.f32 %v422, %v454
        %v457 = vadd.f32 %v423, %v455
        %s458 = sld [smem:[#allocation7 + $0x183]]
        %v459 = vstv %s458
        %v460 = vmul.f32 %v459, %v438
        %v461 = vmul.f32 %v459, %v439
        %v462 = vadd.f32 %v436, %v460
        %v463 = vadd.f32 %v437, %v461
        %s464 = sld [smem:[#allocation7 + $0x4]]
        %v465 = vstv %s464
        %v466 = vmul.f32 %v465, %v438
        %v467 = vmul.f32 %v465, %v439
        %470 = vrot.lane.b32.xlu0 %v466, 127
        %v471 = vpop.permute.xlu0 %470
        %472 = vrot.lane.b32.xlu0 %v467, 127
        %v473 = vpop.permute.xlu0 %472
        %v476 = vadd.f32 %v444, %v471
        %v477 = vadd.f32 %v445, %v473
        %s478 = sld [smem:[#allocation7 + $0x84]]
        %v479 = vstv %s478
        %v480 = vmul.f32 %v479, %v438
        %v481 = vmul.f32 %v479, %v439
        %484 = vrot.lane.b32.xlu0 %v480, 127
        %v485 = vpop.permute.xlu0 %484
        %486 = vrot.lane.b32.xlu0 %v481, 127
        %v487 = vpop.permute.xlu0 %486
        %v490 = vadd.f32 %v450, %v485
        %v491 = vadd.f32 %v451, %v487
        %s492 = sld [smem:[#allocation7 + $0x104]]
        %v493 = vstv %s492
        %v494 = vmul.f32 %v493, %v438
        %v495 = vmul.f32 %v493, %v439
        %498 = vrot.lane.b32.xlu0 %v494, 127
        %v499 = vpop.permute.xlu0 %498
        %500 = vrot.lane.b32.xlu0 %v495, 127
        %v501 = vpop.permute.xlu0 %500
        %v504 = vadd.f32 %v456, %v499
        %v505 = vadd.f32 %v457, %v501
        %s506 = sld [smem:[#allocation7 + $0x184]]
        %v507 = vstv %s506
        %v508 = vmul.f32 %v507, %v438
        %v509 = vmul.f32 %v507, %v439
        %512 = vrot.lane.b32.xlu0 %v508, 127
        %v513 = vpop.permute.xlu0 %512
        %514 = vrot.lane.b32.xlu0 %v509, 127
        %v515 = vpop.permute.xlu0 %514
        %v518 = vadd.f32 %v462, %v513
        %v519 = vadd.f32 %v463, %v515
        %s520 = sld [smem:[#allocation7 + $0x5]]
        %v521 = vstv %s520
        %v522 = vmul.f32 %v521, %v438
        %v523 = vmul.f32 %v521, %v439
        %526 = vrot.lane.b32.xlu0 %v522, 126
        %v527 = vpop.permute.xlu0 %526
        %528 = vrot.lane.b32.xlu0 %v523, 126
        %v529 = vpop.permute.xlu0 %528
        %v532 = vadd.f32 %v476, %v527
        %v533 = vadd.f32 %v477, %v529
        %s534 = sld [smem:[#allocation7 + $0x85]]
        %v535 = vstv %s534
        %v536 = vmul.f32 %v535, %v438
        %v537 = vmul.f32 %v535, %v439
        %540 = vrot.lane.b32.xlu0 %v536, 126
        %v541 = vpop.permute.xlu0 %540
        %542 = vrot.lane.b32.xlu0 %v537, 126
        %v543 = vpop.permute.xlu0 %542
        %v546 = vadd.f32 %v490, %v541
        %v547 = vadd.f32 %v491, %v543
        %s548 = sld [smem:[#allocation7 + $0x105]]
        %v549 = vstv %s548
        %v550 = vmul.f32 %v549, %v438
        %v551 = vmul.f32 %v549, %v439
        %554 = vrot.lane.b32.xlu0 %v550, 126
        %v555 = vpop.permute.xlu0 %554
        %556 = vrot.lane.b32.xlu0 %v551, 126
        %v557 = vpop.permute.xlu0 %556
        %v560 = vadd.f32 %v504, %v555
        %v561 = vadd.f32 %v505, %v557
        %s562 = sld [smem:[#allocation7 + $0x185]]
        %v563 = vstv %s562
        %v564 = vmul.f32 %v563, %v438
        %v565 = vmul.f32 %v563, %v439
        %568 = vrot.lane.b32.xlu0 %v564, 126
        %v569 = vpop.permute.xlu0 %568
        %570 = vrot.lane.b32.xlu0 %v565, 126
        %v571 = vpop.permute.xlu0 %570
        %v574 = vadd.f32 %v518, %v569
        %v575 = vadd.f32 %v519, %v571
        %v576 = vld [vmem:[%s249 + $0x2] sm:$0xff]
        %v577 = vld [vmem:[%s249 + $0xa] sm:$0x3f]
        %s578 = sld [smem:[#allocation7 + $0x6]]
        %v579 = vstv %s578
        %v580 = vmul.f32 %v579, %v576
        %v581 = vmul.f32 %v579, %v577
        %v582 = vadd.f32 %v532, %v580
        %v583 = vadd.f32 %v533, %v581
        %s584 = sld [smem:[#allocation7 + $0x86]]
        %v585 = vstv %s584
        %v586 = vmul.f32 %v585, %v576
        %v587 = vmul.f32 %v585, %v577
        %v588 = vadd.f32 %v546, %v586
        %v589 = vadd.f32 %v547, %v587
        %s590 = sld [smem:[#allocation7 + $0x106]]
        %v591 = vstv %s590
        %v592 = vmul.f32 %v591, %v576
        %v593 = vmul.f32 %v591, %v577
        %v594 = vadd.f32 %v560, %v592
        %v595 = vadd.f32 %v561, %v593
        %s596 = sld [smem:[#allocation7 + $0x186]]
        %v597 = vstv %s596
        %v598 = vmul.f32 %v597, %v576
        %v599 = vmul.f32 %v597, %v577
        %v600 = vadd.f32 %v574, %v598
        %v601 = vadd.f32 %v575, %v599
        %s602 = sld [smem:[#allocation7 + $0x7]]
        %v603 = vstv %s602
        %v604 = vmul.f32 %v603, %v576
        %v605 = vmul.f32 %v603, %v577
        %608 = vrot.lane.b32.xlu0 %v604, 127
        %v609 = vpop.permute.xlu0 %608
        %610 = vrot.lane.b32.xlu0 %v605, 127
        %v611 = vpop.permute.xlu0 %610
        %v614 = vadd.f32 %v582, %v609
        %v615 = vadd.f32 %v583, %v611
        %s616 = sld [smem:[#allocation7 + $0x87]]
        %v617 = vstv %s616
        %v618 = vmul.f32 %v617, %v576
        %v619 = vmul.f32 %v617, %v577
        %622 = vrot.lane.b32.xlu0 %v618, 127
        %v623 = vpop.permute.xlu0 %622
        %624 = vrot.lane.b32.xlu0 %v619, 127
        %v625 = vpop.permute.xlu0 %624
        %v628 = vadd.f32 %v588, %v623
        %v629 = vadd.f32 %v589, %v625
        %s630 = sld [smem:[#allocation7 + $0x107]]
        %v631 = vstv %s630
        %v632 = vmul.f32 %v631, %v576
        %v633 = vmul.f32 %v631, %v577
        %636 = vrot.lane.b32.xlu0 %v632, 127
        %v637 = vpop.permute.xlu0 %636
        %638 = vrot.lane.b32.xlu0 %v633, 127
        %v639 = vpop.permute.xlu0 %638
        %v642 = vadd.f32 %v594, %v637
        %v643 = vadd.f32 %v595, %v639
        %s644 = sld [smem:[#allocation7 + $0x187]]
        %v645 = vstv %s644
        %v646 = vmul.f32 %v645, %v576
        %v647 = vmul.f32 %v645, %v577
        %650 = vrot.lane.b32.xlu0 %v646, 127
        %v651 = vpop.permute.xlu0 %650
        %652 = vrot.lane.b32.xlu0 %v647, 127
        %v653 = vpop.permute.xlu0 %652
        %v656 = vadd.f32 %v600, %v651
        %v657 = vadd.f32 %v601, %v653
        %s658 = sld [smem:[#allocation7 + $0x8]]
        %v659 = vstv %s658
        %v660 = vmul.f32 %v659, %v576
        %v661 = vmul.f32 %v659, %v577
        %664 = vrot.lane.b32.xlu0 %v660, 126
        %v665 = vpop.permute.xlu0 %664
        %666 = vrot.lane.b32.xlu0 %v661, 126
        %v667 = vpop.permute.xlu0 %666
        %v670 = vadd.f32 %v614, %v665
        %v671 = vadd.f32 %v615, %v667
        %s672 = sld [smem:[#allocation7 + $0x88]]
        %v673 = vstv %s672
        %v674 = vmul.f32 %v673, %v576
        %v675 = vmul.f32 %v673, %v577
        %678 = vrot.lane.b32.xlu0 %v674, 126
        %v679 = vpop.permute.xlu0 %678
        %680 = vrot.lane.b32.xlu0 %v675, 126
        %v681 = vpop.permute.xlu0 %680
        %v684 = vadd.f32 %v628, %v679
        %v685 = vadd.f32 %v629, %v681
        %s686 = sld [smem:[#allocation7 + $0x108]]
        %v687 = vstv %s686
        %v688 = vmul.f32 %v687, %v576
        %v689 = vmul.f32 %v687, %v577
        %692 = vrot.lane.b32.xlu0 %v688, 126
        %v693 = vpop.permute.xlu0 %692
        %694 = vrot.lane.b32.xlu0 %v689, 126
        %v695 = vpop.permute.xlu0 %694
        %v698 = vadd.f32 %v642, %v693
        %v699 = vadd.f32 %v643, %v695
        %s700 = sld [smem:[#allocation7 + $0x188]]
        %v701 = vstv %s700
        %v702 = vmul.f32 %v701, %v576
        %v703 = vmul.f32 %v701, %v577
        %706 = vrot.lane.b32.xlu0 %v702, 126
        %v707 = vpop.permute.xlu0 %706
        %708 = vrot.lane.b32.xlu0 %v703, 126
        %v709 = vpop.permute.xlu0 %708
        %v712 = vadd.f32 %v656, %v707
        %v713 = vadd.f32 %v657, %v709
        %s714 = scalar_lea.vmem %s249, 16 [#allocation2]
        %v715 = vld [vmem:[%s714] sm:$0xff]
        %v716 = vld [vmem:[%s714 + $0x8] sm:$0x3f]
        %s717 = sld [smem:[#allocation7 + $0x9]]
        %v718 = vstv %s717
        %v719 = vmul.f32 %v718, %v715
        %v720 = vmul.f32 %v718, %v716
        %v721 = vadd.f32 %v670, %v719
        %v722 = vadd.f32 %v671, %v720
        %s723 = sld [smem:[#allocation7 + $0x89]]
        %v724 = vstv %s723
        %v725 = vmul.f32 %v724, %v715
        %v726 = vmul.f32 %v724, %v716
        %v727 = vadd.f32 %v684, %v725
        %v728 = vadd.f32 %v685, %v726
        %s729 = sld [smem:[#allocation7 + $0x109]]
        %v730 = vstv %s729
        %v731 = vmul.f32 %v730, %v715
        %v732 = vmul.f32 %v730, %v716
        %v733 = vadd.f32 %v698, %v731
        %v734 = vadd.f32 %v699, %v732
        %s735 = sld [smem:[#allocation7 + $0x189]]
        %v736 = vstv %s735
        %v737 = vmul.f32 %v736, %v715
        %v738 = vmul.f32 %v736, %v716
        %v739 = vadd.f32 %v712, %v737
        %v740 = vadd.f32 %v713, %v738
        %s741 = sld [smem:[#allocation7 + $0xa]]
        %v742 = vstv %s741
        %v743 = vmul.f32 %v742, %v715
        %v744 = vmul.f32 %v742, %v716
        %747 = vrot.lane.b32.xlu0 %v743, 127
        %v748 = vpop.permute.xlu0 %747
        %749 = vrot.lane.b32.xlu0 %v744, 127
        %v750 = vpop.permute.xlu0 %749
        %v753 = vadd.f32 %v721, %v748
        %v754 = vadd.f32 %v722, %v750
        %s755 = sld [smem:[#allocation7 + $0x8a]]
        %v756 = vstv %s755
        %v757 = vmul.f32 %v756, %v715
        %v758 = vmul.f32 %v756, %v716
        %761 = vrot.lane.b32.xlu0 %v757, 127
        %v762 = vpop.permute.xlu0 %761
        %763 = vrot.lane.b32.xlu0 %v758, 127
        %v764 = vpop.permute.xlu0 %763
        %v767 = vadd.f32 %v727, %v762
        %v768 = vadd.f32 %v728, %v764
        %s769 = sld [smem:[#allocation7 + $0x10a]]
        %v770 = vstv %s769
        %v771 = vmul.f32 %v770, %v715
        %v772 = vmul.f32 %v770, %v716
        %775 = vrot.lane.b32.xlu0 %v771, 127
        %v776 = vpop.permute.xlu0 %775
        %777 = vrot.lane.b32.xlu0 %v772, 127
        %v778 = vpop.permute.xlu0 %777
        %v781 = vadd.f32 %v733, %v776
        %v782 = vadd.f32 %v734, %v778
        %s783 = sld [smem:[#allocation7 + $0x18a]]
        %v784 = vstv %s783
        %v785 = vmul.f32 %v784, %v715
        %v786 = vmul.f32 %v784, %v716
        %789 = vrot.lane.b32.xlu0 %v785, 127
        %v790 = vpop.permute.xlu0 %789
        %791 = vrot.lane.b32.xlu0 %v786, 127
        %v792 = vpop.permute.xlu0 %791
        %v795 = vadd.f32 %v739, %v790
        %v796 = vadd.f32 %v740, %v792
        %s797 = sld [smem:[#allocation7 + $0xb]]
        %v798 = vstv %s797
        %v799 = vmul.f32 %v798, %v715
        %v800 = vmul.f32 %v798, %v716
        %803 = vrot.lane.b32.xlu0 %v799, 126
        %v804 = vpop.permute.xlu0 %803
        %805 = vrot.lane.b32.xlu0 %v800, 126
        %v806 = vpop.permute.xlu0 %805
        %v809 = vadd.f32 %v753, %v804
        %v810 = vadd.f32 %v754, %v806
        %s811 = sld [smem:[#allocation7 + $0x8b]]
        %v812 = vstv %s811
        %v813 = vmul.f32 %v812, %v715
        %v814 = vmul.f32 %v812, %v716
        %817 = vrot.lane.b32.xlu0 %v813, 126
        %v818 = vpop.permute.xlu0 %817
        %819 = vrot.lane.b32.xlu0 %v814, 126
        %v820 = vpop.permute.xlu0 %819
        %v823 = vadd.f32 %v767, %v818
        %v824 = vadd.f32 %v768, %v820
        %s825 = sld [smem:[#allocation7 + $0x10b]]
        %v826 = vstv %s825
        %v827 = vmul.f32 %v826, %v715
        %v828 = vmul.f32 %v826, %v716
        %831 = vrot.lane.b32.xlu0 %v827, 126
        %v832 = vpop.permute.xlu0 %831
        %833 = vrot.lane.b32.xlu0 %v828, 126
        %v834 = vpop.permute.xlu0 %833
        %v837 = vadd.f32 %v781, %v832
        %v838 = vadd.f32 %v782, %v834
        %s839 = sld [smem:[#allocation7 + $0x18b]]
        %v840 = vstv %s839
        %v841 = vmul.f32 %v840, %v715
        %v842 = vmul.f32 %v840, %v716
        %845 = vrot.lane.b32.xlu0 %v841, 126
        %v846 = vpop.permute.xlu0 %845
        %847 = vrot.lane.b32.xlu0 %v842, 126
        %v848 = vpop.permute.xlu0 %847
        %v851 = vadd.f32 %v795, %v846
        %v852 = vadd.f32 %v796, %v848
        %v853 = vld [vmem:[%s714 + $0x1] sm:$0xff]
        %v854 = vld [vmem:[%s714 + $0x9] sm:$0x3f]
        %s855 = sld [smem:[#allocation7 + $0xc]]
        %v856 = vstv %s855
        %v857 = vmul.f32 %v856, %v853
        %v858 = vmul.f32 %v856, %v854
        %v859 = vadd.f32 %v809, %v857
        %v860 = vadd.f32 %v810, %v858
        %s861 = sld [smem:[#allocation7 + $0x8c]]
        %v862 = vstv %s861
        %v863 = vmul.f32 %v862, %v853
        %v864 = vmul.f32 %v862, %v854
        %v865 = vadd.f32 %v823, %v863
        %v866 = vadd.f32 %v824, %v864
        %s867 = sld [smem:[#allocation7 + $0x10c]]
        %v868 = vstv %s867
        %v869 = vmul.f32 %v868, %v853
        %v870 = vmul.f32 %v868, %v854
        %v871 = vadd.f32 %v837, %v869
        %v872 = vadd.f32 %v838, %v870
        %s873 = sld [smem:[#allocation7 + $0x18c]]
        %v874 = vstv %s873
        %v875 = vmul.f32 %v874, %v853
        %v876 = vmul.f32 %v874, %v854
        %v877 = vadd.f32 %v851, %v875
        %v878 = vadd.f32 %v852, %v876
        %s879 = sld [smem:[#allocation7 + $0xd]]
        %v880 = vstv %s879
        %v881 = vmul.f32 %v880, %v853
        %v882 = vmul.f32 %v880, %v854
        %885 = vrot.lane.b32.xlu0 %v881, 127
        %v886 = vpop.permute.xlu0 %885
        %887 = vrot.lane.b32.xlu0 %v882, 127
        %v888 = vpop.permute.xlu0 %887
        %v891 = vadd.f32 %v859, %v886
        %v892 = vadd.f32 %v860, %v888
        %s893 = sld [smem:[#allocation7 + $0x8d]]
        %v894 = vstv %s893
        %v895 = vmul.f32 %v894, %v853
        %v896 = vmul.f32 %v894, %v854
        %899 = vrot.lane.b32.xlu0 %v895, 127
        %v900 = vpop.permute.xlu0 %899
        %901 = vrot.lane.b32.xlu0 %v896, 127
        %v902 = vpop.permute.xlu0 %901
        %v905 = vadd.f32 %v865, %v900
        %v906 = vadd.f32 %v866, %v902
        %s907 = sld [smem:[#allocation7 + $0x10d]]
        %v908 = vstv %s907
        %v909 = vmul.f32 %v908, %v853
        %v910 = vmul.f32 %v908, %v854
        %913 = vrot.lane.b32.xlu0 %v909, 127
        %v914 = vpop.permute.xlu0 %913
        %915 = vrot.lane.b32.xlu0 %v910, 127
        %v916 = vpop.permute.xlu0 %915
        %v919 = vadd.f32 %v871, %v914
        %v920 = vadd.f32 %v872, %v916
        %s921 = sld [smem:[#allocation7 + $0x18d]]
        %v922 = vstv %s921
        %v923 = vmul.f32 %v922, %v853
        %v924 = vmul.f32 %v922, %v854
        %927 = vrot.lane.b32.xlu0 %v923, 127
        %v928 = vpop.permute.xlu0 %927
        %929 = vrot.lane.b32.xlu0 %v924, 127
        %v930 = vpop.permute.xlu0 %929
        %v933 = vadd.f32 %v877, %v928
        %v934 = vadd.f32 %v878, %v930
        %s935 = sld [smem:[#allocation7 + $0xe]]
        %v936 = vstv %s935
        %v937 = vmul.f32 %v936, %v853
        %v938 = vmul.f32 %v936, %v854
        %941 = vrot.lane.b32.xlu0 %v937, 126
        %v942 = vpop.permute.xlu0 %941
        %943 = vrot.lane.b32.xlu0 %v938, 126
        %v944 = vpop.permute.xlu0 %943
        %v947 = vadd.f32 %v891, %v942
        %v948 = vadd.f32 %v892, %v944
        %s949 = sld [smem:[#allocation7 + $0x8e]]
        %v950 = vstv %s949
        %v951 = vmul.f32 %v950, %v853
        %v952 = vmul.f32 %v950, %v854
        %955 = vrot.lane.b32.xlu0 %v951, 126
        %v956 = vpop.permute.xlu0 %955
        %957 = vrot.lane.b32.xlu0 %v952, 126
        %v958 = vpop.permute.xlu0 %957
        %v961 = vadd.f32 %v905, %v956
        %v962 = vadd.f32 %v906, %v958
        %s963 = sld [smem:[#allocation7 + $0x10e]]
        %v964 = vstv %s963
        %v965 = vmul.f32 %v964, %v853
        %v966 = vmul.f32 %v964, %v854
        %969 = vrot.lane.b32.xlu0 %v965, 126
        %v970 = vpop.permute.xlu0 %969
        %971 = vrot.lane.b32.xlu0 %v966, 126
        %v972 = vpop.permute.xlu0 %971
        %v975 = vadd.f32 %v919, %v970
        %v976 = vadd.f32 %v920, %v972
        %s977 = sld [smem:[#allocation7 + $0x18e]]
        %v978 = vstv %s977
        %v979 = vmul.f32 %v978, %v853
        %v980 = vmul.f32 %v978, %v854
        %983 = vrot.lane.b32.xlu0 %v979, 126
        %v984 = vpop.permute.xlu0 %983
        %985 = vrot.lane.b32.xlu0 %v980, 126
        %v986 = vpop.permute.xlu0 %985
        %v989 = vadd.f32 %v933, %v984
        %v990 = vadd.f32 %v934, %v986
        %v991 = vld [vmem:[%s714 + $0x2] sm:$0xff]
        %v992 = vld [vmem:[%s714 + $0xa] sm:$0x3f]
        %s993 = sld [smem:[#allocation7 + $0xf]]
        %v994 = vstv %s993
        %v995 = vmul.f32 %v994, %v991
        %v996 = vmul.f32 %v994, %v992
        %v997 = vadd.f32 %v947, %v995
        %v998 = vadd.f32 %v948, %v996
        %s999 = sld [smem:[#allocation7 + $0x8f]]
        %v1000 = vstv %s999
        %v1001 = vmul.f32 %v1000, %v991
        %v1002 = vmul.f32 %v1000, %v992
        %v1003 = vadd.f32 %v961, %v1001
        %v1004 = vadd.f32 %v962, %v1002
        %s1005 = sld [smem:[#allocation7 + $0x10f]]
        %v1006 = vstv %s1005
        %v1007 = vmul.f32 %v1006, %v991
        %v1008 = vmul.f32 %v1006, %v992
        %v1009 = vadd.f32 %v975, %v1007
        %v1010 = vadd.f32 %v976, %v1008
        %s1011 = sld [smem:[#allocation7 + $0x18f]]
        %v1012 = vstv %s1011
        %v1013 = vmul.f32 %v1012, %v991
        %v1014 = vmul.f32 %v1012, %v992
        %v1015 = vadd.f32 %v989, %v1013
        %v1016 = vadd.f32 %v990, %v1014
        %s1017 = sld [smem:[#allocation7 + $0x10]]
        %v1018 = vstv %s1017
        %v1019 = vmul.f32 %v1018, %v991
        %v1020 = vmul.f32 %v1018, %v992
        %1023 = vrot.lane.b32.xlu0 %v1019, 127
        %v1024 = vpop.permute.xlu0 %1023
        %1025 = vrot.lane.b32.xlu0 %v1020, 127
        %v1026 = vpop.permute.xlu0 %1025
        %v1029 = vadd.f32 %v997, %v1024
        %v1030 = vadd.f32 %v998, %v1026
        %s1031 = sld [smem:[#allocation7 + $0x90]]
        %v1032 = vstv %s1031
        %v1033 = vmul.f32 %v1032, %v991
        %v1034 = vmul.f32 %v1032, %v992
        %1037 = vrot.lane.b32.xlu0 %v1033, 127
        %v1038 = vpop.permute.xlu0 %1037
        %1039 = vrot.lane.b32.xlu0 %v1034, 127
        %v1040 = vpop.permute.xlu0 %1039
        %v1043 = vadd.f32 %v1003, %v1038
        %v1044 = vadd.f32 %v1004, %v1040
        %s1045 = sld [smem:[#allocation7 + $0x110]]
        %v1046 = vstv %s1045
        %v1047 = vmul.f32 %v1046, %v991
        %v1048 = vmul.f32 %v1046, %v992
        %1051 = vrot.lane.b32.xlu0 %v1047, 127
        %v1052 = vpop.permute.xlu0 %1051
        %1053 = vrot.lane.b32.xlu0 %v1048, 127
        %v1054 = vpop.permute.xlu0 %1053
        %v1057 = vadd.f32 %v1009, %v1052
        %v1058 = vadd.f32 %v1010, %v1054
        %s1059 = sld [smem:[#allocation7 + $0x190]]
        %v1060 = vstv %s1059
        %v1061 = vmul.f32 %v1060, %v991
        %v1062 = vmul.f32 %v1060, %v992
        %1065 = vrot.lane.b32.xlu0 %v1061, 127
        %v1066 = vpop.permute.xlu0 %1065
        %1067 = vrot.lane.b32.xlu0 %v1062, 127
        %v1068 = vpop.permute.xlu0 %1067
        %v1071 = vadd.f32 %v1015, %v1066
        %v1072 = vadd.f32 %v1016, %v1068
        %s1073 = sld [smem:[#allocation7 + $0x11]]
        %v1074 = vstv %s1073
        %v1075 = vmul.f32 %v1074, %v991
        %v1076 = vmul.f32 %v1074, %v992
        %1079 = vrot.lane.b32.xlu0 %v1075, 126
        %v1080 = vpop.permute.xlu0 %1079
        %1081 = vrot.lane.b32.xlu0 %v1076, 126
        %v1082 = vpop.permute.xlu0 %1081
        %v1085 = vadd.f32 %v1029, %v1080
        %v1086 = vadd.f32 %v1030, %v1082
        %s1087 = sld [smem:[#allocation7 + $0x91]]
        %v1088 = vstv %s1087
        %v1089 = vmul.f32 %v1088, %v991
        %v1090 = vmul.f32 %v1088, %v992
        %1093 = vrot.lane.b32.xlu0 %v1089, 126
        %v1094 = vpop.permute.xlu0 %1093
        %1095 = vrot.lane.b32.xlu0 %v1090, 126
        %v1096 = vpop.permute.xlu0 %1095
        %v1099 = vadd.f32 %v1043, %v1094
        %v1100 = vadd.f32 %v1044, %v1096
        %s1101 = sld [smem:[#allocation7 + $0x111]]
        %v1102 = vstv %s1101
        %v1103 = vmul.f32 %v1102, %v991
        %v1104 = vmul.f32 %v1102, %v992
        %1107 = vrot.lane.b32.xlu0 %v1103, 126
        %v1108 = vpop.permute.xlu0 %1107
        %1109 = vrot.lane.b32.xlu0 %v1104, 126
        %v1110 = vpop.permute.xlu0 %1109
        %v1113 = vadd.f32 %v1057, %v1108
        %v1114 = vadd.f32 %v1058, %v1110
        %s1115 = sld [smem:[#allocation7 + $0x191]]
        %v1116 = vstv %s1115
        %v1117 = vmul.f32 %v1116, %v991
        %v1118 = vmul.f32 %v1116, %v992
        %1121 = vrot.lane.b32.xlu0 %v1117, 126
        %v1122 = vpop.permute.xlu0 %1121
        %1123 = vrot.lane.b32.xlu0 %v1118, 126
        %v1124 = vpop.permute.xlu0 %1123
        %v1127 = vadd.f32 %v1071, %v1122
        %v1128 = vadd.f32 %v1072, %v1124
        %s1129 = scalar_lea.vmem %s249, 32 [#allocation2]
        %v1130 = vld [vmem:[%s1129] sm:$0xff]
        %v1131 = vld [vmem:[%s1129 + $0x8] sm:$0x3f]
        %s1132 = sld [smem:[#allocation7 + $0x12]]
        %v1133 = vstv %s1132
        %v1134 = vmul.f32 %v1133, %v1130
        %v1135 = vmul.f32 %v1133, %v1131
        %v1136 = vadd.f32 %v1085, %v1134
        %v1137 = vadd.f32 %v1086, %v1135
        %s1138 = sld [smem:[#allocation7 + $0x92]]
        %v1139 = vstv %s1138
        %v1140 = vmul.f32 %v1139, %v1130
        %v1141 = vmul.f32 %v1139, %v1131
        %v1142 = vadd.f32 %v1099, %v1140
        %v1143 = vadd.f32 %v1100, %v1141
        %s1144 = sld [smem:[#allocation7 + $0x112]]
        %v1145 = vstv %s1144
        %v1146 = vmul.f32 %v1145, %v1130
        %v1147 = vmul.f32 %v1145, %v1131
        %v1148 = vadd.f32 %v1113, %v1146
        %v1149 = vadd.f32 %v1114, %v1147
        %s1150 = sld [smem:[#allocation7 + $0x192]]
        %v1151 = vstv %s1150
        %v1152 = vmul.f32 %v1151, %v1130
        %v1153 = vmul.f32 %v1151, %v1131
        %v1154 = vadd.f32 %v1127, %v1152
        %v1155 = vadd.f32 %v1128, %v1153
        %s1156 = sld [smem:[#allocation7 + $0x13]]
        %v1157 = vstv %s1156
        %v1158 = vmul.f32 %v1157, %v1130
        %v1159 = vmul.f32 %v1157, %v1131
        %1162 = vrot.lane.b32.xlu0 %v1158, 127
        %v1163 = vpop.permute.xlu0 %1162
        %1164 = vrot.lane.b32.xlu0 %v1159, 127
        %v1165 = vpop.permute.xlu0 %1164
        %v1168 = vadd.f32 %v1136, %v1163
        %v1169 = vadd.f32 %v1137, %v1165
        %s1170 = sld [smem:[#allocation7 + $0x93]]
        %v1171 = vstv %s1170
        %v1172 = vmul.f32 %v1171, %v1130
        %v1173 = vmul.f32 %v1171, %v1131
        %1176 = vrot.lane.b32.xlu0 %v1172, 127
        %v1177 = vpop.permute.xlu0 %1176
        %1178 = vrot.lane.b32.xlu0 %v1173, 127
        %v1179 = vpop.permute.xlu0 %1178
        %v1182 = vadd.f32 %v1142, %v1177
        %v1183 = vadd.f32 %v1143, %v1179
        %s1184 = sld [smem:[#allocation7 + $0x113]]
        %v1185 = vstv %s1184
        %v1186 = vmul.f32 %v1185, %v1130
        %v1187 = vmul.f32 %v1185, %v1131
        %1190 = vrot.lane.b32.xlu0 %v1186, 127
        %v1191 = vpop.permute.xlu0 %1190
        %1192 = vrot.lane.b32.xlu0 %v1187, 127
        %v1193 = vpop.permute.xlu0 %1192
        %v1196 = vadd.f32 %v1148, %v1191
        %v1197 = vadd.f32 %v1149, %v1193
        %s1198 = sld [smem:[#allocation7 + $0x193]]
        %v1199 = vstv %s1198
        %v1200 = vmul.f32 %v1199, %v1130
        %v1201 = vmul.f32 %v1199, %v1131
        %1204 = vrot.lane.b32.xlu0 %v1200, 127
        %v1205 = vpop.permute.xlu0 %1204
        %1206 = vrot.lane.b32.xlu0 %v1201, 127
        %v1207 = vpop.permute.xlu0 %1206
        %v1210 = vadd.f32 %v1154, %v1205
        %v1211 = vadd.f32 %v1155, %v1207
        %s1212 = sld [smem:[#allocation7 + $0x14]]
        %v1213 = vstv %s1212
        %v1214 = vmul.f32 %v1213, %v1130
        %v1215 = vmul.f32 %v1213, %v1131
        %1218 = vrot.lane.b32.xlu0 %v1214, 126
        %v1219 = vpop.permute.xlu0 %1218
        %1220 = vrot.lane.b32.xlu0 %v1215, 126
        %v1221 = vpop.permute.xlu0 %1220
        %v1224 = vadd.f32 %v1168, %v1219
        %v1225 = vadd.f32 %v1169, %v1221
        %s1226 = sld [smem:[#allocation7 + $0x94]]
        %v1227 = vstv %s1226
        %v1228 = vmul.f32 %v1227, %v1130
        %v1229 = vmul.f32 %v1227, %v1131
        %1232 = vrot.lane.b32.xlu0 %v1228, 126
        %v1233 = vpop.permute.xlu0 %1232
        %1234 = vrot.lane.b32.xlu0 %v1229, 126
        %v1235 = vpop.permute.xlu0 %1234
        %v1238 = vadd.f32 %v1182, %v1233
        %v1239 = vadd.f32 %v1183, %v1235
        %s1240 = sld [smem:[#allocation7 + $0x114]]
        %v1241 = vstv %s1240
        %v1242 = vmul.f32 %v1241, %v1130
        %v1243 = vmul.f32 %v1241, %v1131
        %1246 = vrot.lane.b32.xlu0 %v1242, 126
        %v1247 = vpop.permute.xlu0 %1246
        %1248 = vrot.lane.b32.xlu0 %v1243, 126
        %v1249 = vpop.permute.xlu0 %1248
        %v1252 = vadd.f32 %v1196, %v1247
        %v1253 = vadd.f32 %v1197, %v1249
        %s1254 = sld [smem:[#allocation7 + $0x194]]
        %v1255 = vstv %s1254
        %v1256 = vmul.f32 %v1255, %v1130
        %v1257 = vmul.f32 %v1255, %v1131
        %1260 = vrot.lane.b32.xlu0 %v1256, 126
        %v1261 = vpop.permute.xlu0 %1260
        %1262 = vrot.lane.b32.xlu0 %v1257, 126
        %v1263 = vpop.permute.xlu0 %1262
        %v1266 = vadd.f32 %v1210, %v1261
        %v1267 = vadd.f32 %v1211, %v1263
        %v1268 = vld [vmem:[%s1129 + $0x1] sm:$0xff]
        %v1269 = vld [vmem:[%s1129 + $0x9] sm:$0x3f]
        %s1270 = sld [smem:[#allocation7 + $0x15]]
        %v1271 = vstv %s1270
        %v1272 = vmul.f32 %v1271, %v1268
        %v1273 = vmul.f32 %v1271, %v1269
        %v1274 = vadd.f32 %v1224, %v1272
        %v1275 = vadd.f32 %v1225, %v1273
        %s1276 = sld [smem:[#allocation7 + $0x95]]
        %v1277 = vstv %s1276
        %v1278 = vmul.f32 %v1277, %v1268
        %v1279 = vmul.f32 %v1277, %v1269
        %v1280 = vadd.f32 %v1238, %v1278
        %v1281 = vadd.f32 %v1239, %v1279
        %s1282 = sld [smem:[#allocation7 + $0x115]]
        %v1283 = vstv %s1282
        %v1284 = vmul.f32 %v1283, %v1268
        %v1285 = vmul.f32 %v1283, %v1269
        %v1286 = vadd.f32 %v1252, %v1284
        %v1287 = vadd.f32 %v1253, %v1285
        %s1288 = sld [smem:[#allocation7 + $0x195]]
        %v1289 = vstv %s1288
        %v1290 = vmul.f32 %v1289, %v1268
        %v1291 = vmul.f32 %v1289, %v1269
        %v1292 = vadd.f32 %v1266, %v1290
        %v1293 = vadd.f32 %v1267, %v1291
        %s1294 = sld [smem:[#allocation7 + $0x16]]
        %v1295 = vstv %s1294
        %v1296 = vmul.f32 %v1295, %v1268
        %v1297 = vmul.f32 %v1295, %v1269
        %1300 = vrot.lane.b32.xlu0 %v1296, 127
        %v1301 = vpop.permute.xlu0 %1300
        %1302 = vrot.lane.b32.xlu0 %v1297, 127
        %v1303 = vpop.permute.xlu0 %1302
        %v1306 = vadd.f32 %v1274, %v1301
        %v1307 = vadd.f32 %v1275, %v1303
        %s1308 = sld [smem:[#allocation7 + $0x96]]
        %v1309 = vstv %s1308
        %v1310 = vmul.f32 %v1309, %v1268
        %v1311 = vmul.f32 %v1309, %v1269
        %1314 = vrot.lane.b32.xlu0 %v1310, 127
        %v1315 = vpop.permute.xlu0 %1314
        %1316 = vrot.lane.b32.xlu0 %v1311, 127
        %v1317 = vpop.permute.xlu0 %1316
        %v1320 = vadd.f32 %v1280, %v1315
        %v1321 = vadd.f32 %v1281, %v1317
        %s1322 = sld [smem:[#allocation7 + $0x116]]
        %v1323 = vstv %s1322
        %v1324 = vmul.f32 %v1323, %v1268
        %v1325 = vmul.f32 %v1323, %v1269
        %1328 = vrot.lane.b32.xlu0 %v1324, 127
        %v1329 = vpop.permute.xlu0 %1328
        %1330 = vrot.lane.b32.xlu0 %v1325, 127
        %v1331 = vpop.permute.xlu0 %1330
        %v1334 = vadd.f32 %v1286, %v1329
        %v1335 = vadd.f32 %v1287, %v1331
        %s1336 = sld [smem:[#allocation7 + $0x196]]
        %v1337 = vstv %s1336
        %v1338 = vmul.f32 %v1337, %v1268
        %v1339 = vmul.f32 %v1337, %v1269
        %1342 = vrot.lane.b32.xlu0 %v1338, 127
        %v1343 = vpop.permute.xlu0 %1342
        %1344 = vrot.lane.b32.xlu0 %v1339, 127
        %v1345 = vpop.permute.xlu0 %1344
        %v1348 = vadd.f32 %v1292, %v1343
        %v1349 = vadd.f32 %v1293, %v1345
        %s1350 = sld [smem:[#allocation7 + $0x17]]
        %v1351 = vstv %s1350
        %v1352 = vmul.f32 %v1351, %v1268
        %v1353 = vmul.f32 %v1351, %v1269
        %1356 = vrot.lane.b32.xlu0 %v1352, 126
        %v1357 = vpop.permute.xlu0 %1356
        %1358 = vrot.lane.b32.xlu0 %v1353, 126
        %v1359 = vpop.permute.xlu0 %1358
        %v1362 = vadd.f32 %v1306, %v1357
        %v1363 = vadd.f32 %v1307, %v1359
        %s1364 = sld [smem:[#allocation7 + $0x97]]
        %v1365 = vstv %s1364
        %v1366 = vmul.f32 %v1365, %v1268
        %v1367 = vmul.f32 %v1365, %v1269
        %1370 = vrot.lane.b32.xlu0 %v1366, 126
        %v1371 = vpop.permute.xlu0 %1370
        %1372 = vrot.lane.b32.xlu0 %v1367, 126
        %v1373 = vpop.permute.xlu0 %1372
        %v1376 = vadd.f32 %v1320, %v1371
        %v1377 = vadd.f32 %v1321, %v1373
        %s1378 = sld [smem:[#allocation7 + $0x117]]
        %v1379 = vstv %s1378
        %v1380 = vmul.f32 %v1379, %v1268
        %v1381 = vmul.f32 %v1379, %v1269
        %1384 = vrot.lane.b32.xlu0 %v1380, 126
        %v1385 = vpop.permute.xlu0 %1384
        %1386 = vrot.lane.b32.xlu0 %v1381, 126
        %v1387 = vpop.permute.xlu0 %1386
        %v1390 = vadd.f32 %v1334, %v1385
        %v1391 = vadd.f32 %v1335, %v1387
        %s1392 = sld [smem:[#allocation7 + $0x197]]
        %v1393 = vstv %s1392
        %v1394 = vmul.f32 %v1393, %v1268
        %v1395 = vmul.f32 %v1393, %v1269
        %1398 = vrot.lane.b32.xlu0 %v1394, 126
        %v1399 = vpop.permute.xlu0 %1398
        %1400 = vrot.lane.b32.xlu0 %v1395, 126
        %v1401 = vpop.permute.xlu0 %1400
        %v1404 = vadd.f32 %v1348, %v1399
        %v1405 = vadd.f32 %v1349, %v1401
        %v1406 = vld [vmem:[%s1129 + $0x2] sm:$0xff]
        %v1407 = vld [vmem:[%s1129 + $0xa] sm:$0x3f]
        %s1408 = sld [smem:[#allocation7 + $0x18]]
        %v1409 = vstv %s1408
        %v1410 = vmul.f32 %v1409, %v1406
        %v1411 = vmul.f32 %v1409, %v1407
        %v1412 = vadd.f32 %v1362, %v1410
        %v1413 = vadd.f32 %v1363, %v1411
        %s1414 = sld [smem:[#allocation7 + $0x98]]
        %v1415 = vstv %s1414
        %v1416 = vmul.f32 %v1415, %v1406
        %v1417 = vmul.f32 %v1415, %v1407
        %v1418 = vadd.f32 %v1376, %v1416
        %v1419 = vadd.f32 %v1377, %v1417
        %s1420 = sld [smem:[#allocation7 + $0x118]]
        %v1421 = vstv %s1420
        %v1422 = vmul.f32 %v1421, %v1406
        %v1423 = vmul.f32 %v1421, %v1407
        %v1424 = vadd.f32 %v1390, %v1422
        %v1425 = vadd.f32 %v1391, %v1423
        %s1426 = sld [smem:[#allocation7 + $0x198]]
        %v1427 = vstv %s1426
        %v1428 = vmul.f32 %v1427, %v1406
        %v1429 = vmul.f32 %v1427, %v1407
        %v1430 = vadd.f32 %v1404, %v1428
        %v1431 = vadd.f32 %v1405, %v1429
        %s1432 = sld [smem:[#allocation7 + $0x19]]
        %v1433 = vstv %s1432
        %v1434 = vmul.f32 %v1433, %v1406
        %v1435 = vmul.f32 %v1433, %v1407
        %1438 = vrot.lane.b32.xlu0 %v1434, 127
        %v1439 = vpop.permute.xlu0 %1438
        %1440 = vrot.lane.b32.xlu0 %v1435, 127
        %v1441 = vpop.permute.xlu0 %1440
        %v1444 = vadd.f32 %v1412, %v1439
        %v1445 = vadd.f32 %v1413, %v1441
        %s1446 = sld [smem:[#allocation7 + $0x99]]
        %v1447 = vstv %s1446
        %v1448 = vmul.f32 %v1447, %v1406
        %v1449 = vmul.f32 %v1447, %v1407
        %1452 = vrot.lane.b32.xlu0 %v1448, 127
        %v1453 = vpop.permute.xlu0 %1452
        %1454 = vrot.lane.b32.xlu0 %v1449, 127
        %v1455 = vpop.permute.xlu0 %1454
        %v1458 = vadd.f32 %v1418, %v1453
        %v1459 = vadd.f32 %v1419, %v1455
        %s1460 = sld [smem:[#allocation7 + $0x119]]
        %v1461 = vstv %s1460
        %v1462 = vmul.f32 %v1461, %v1406
        %v1463 = vmul.f32 %v1461, %v1407
        %1466 = vrot.lane.b32.xlu0 %v1462, 127
        %v1467 = vpop.permute.xlu0 %1466
        %1468 = vrot.lane.b32.xlu0 %v1463, 127
        %v1469 = vpop.permute.xlu0 %1468
        %v1472 = vadd.f32 %v1424, %v1467
        %v1473 = vadd.f32 %v1425, %v1469
        %s1474 = sld [smem:[#allocation7 + $0x199]]
        %v1475 = vstv %s1474
        %v1476 = vmul.f32 %v1475, %v1406
        %v1477 = vmul.f32 %v1475, %v1407
        %1480 = vrot.lane.b32.xlu0 %v1476, 127
        %v1481 = vpop.permute.xlu0 %1480
        %1482 = vrot.lane.b32.xlu0 %v1477, 127
        %v1483 = vpop.permute.xlu0 %1482
        %v1486 = vadd.f32 %v1430, %v1481
        %v1487 = vadd.f32 %v1431, %v1483
        %s1488 = sld [smem:[#allocation7 + $0x1a]]
        %v1489 = vstv %s1488
        %v1490 = vmul.f32 %v1489, %v1406
        %v1491 = vmul.f32 %v1489, %v1407
        %1494 = vrot.lane.b32.xlu0 %v1490, 126
        %v1495 = vpop.permute.xlu0 %1494
        %1496 = vrot.lane.b32.xlu0 %v1491, 126
        %v1497 = vpop.permute.xlu0 %1496
        %v1500 = vadd.f32 %v1444, %v1495
        %v1501 = vadd.f32 %v1445, %v1497
        %s1502 = sld [smem:[#allocation7 + $0x9a]]
        %v1503 = vstv %s1502
        %v1504 = vmul.f32 %v1503, %v1406
        %v1505 = vmul.f32 %v1503, %v1407
        %1508 = vrot.lane.b32.xlu0 %v1504, 126
        %v1509 = vpop.permute.xlu0 %1508
        %1510 = vrot.lane.b32.xlu0 %v1505, 126
        %v1511 = vpop.permute.xlu0 %1510
        %v1514 = vadd.f32 %v1458, %v1509
        %v1515 = vadd.f32 %v1459, %v1511
        %s1516 = sld [smem:[#allocation7 + $0x11a]]
        %v1517 = vstv %s1516
        %v1518 = vmul.f32 %v1517, %v1406
        %v1519 = vmul.f32 %v1517, %v1407
        %1522 = vrot.lane.b32.xlu0 %v1518, 126
        %v1523 = vpop.permute.xlu0 %1522
        %1524 = vrot.lane.b32.xlu0 %v1519, 126
        %v1525 = vpop.permute.xlu0 %1524
        %v1528 = vadd.f32 %v1472, %v1523
        %v1529 = vadd.f32 %v1473, %v1525
        %s1530 = sld [smem:[#allocation7 + $0x19a]]
        %v1531 = vstv %s1530
        %v1532 = vmul.f32 %v1531, %v1406
        %v1533 = vmul.f32 %v1531, %v1407
        %1536 = vrot.lane.b32.xlu0 %v1532, 126
        %v1537 = vpop.permute.xlu0 %1536
        %1538 = vrot.lane.b32.xlu0 %v1533, 126
        %v1539 = vpop.permute.xlu0 %1538
        %v1542 = vadd.f32 %v1486, %v1537
        %v1543 = vadd.f32 %v1487, %v1539
        %s1544 = scalar_lea.vmem %s249, 48 [#allocation2]
        %v1545 = vld [vmem:[%s1544] sm:$0xff]
        %v1546 = vld [vmem:[%s1544 + $0x8] sm:$0x3f]
        %s1547 = sld [smem:[#allocation7 + $0x1b]]
        %v1548 = vstv %s1547
        %v1549 = vmul.f32 %v1548, %v1545
        %v1550 = vmul.f32 %v1548, %v1546
        %v1551 = vadd.f32 %v1500, %v1549
        %v1552 = vadd.f32 %v1501, %v1550
        %s1553 = sld [smem:[#allocation7 + $0x9b]]
        %v1554 = vstv %s1553
        %v1555 = vmul.f32 %v1554, %v1545
        %v1556 = vmul.f32 %v1554, %v1546
        %v1557 = vadd.f32 %v1514, %v1555
        %v1558 = vadd.f32 %v1515, %v1556
        %s1559 = sld [smem:[#allocation7 + $0x11b]]
        %v1560 = vstv %s1559
        %v1561 = vmul.f32 %v1560, %v1545
        %v1562 = vmul.f32 %v1560, %v1546
        %v1563 = vadd.f32 %v1528, %v1561
        %v1564 = vadd.f32 %v1529, %v1562
        %s1565 = sld [smem:[#allocation7 + $0x19b]]
        %v1566 = vstv %s1565
        %v1567 = vmul.f32 %v1566, %v1545
        %v1568 = vmul.f32 %v1566, %v1546
        %v1569 = vadd.f32 %v1542, %v1567
        %v1570 = vadd.f32 %v1543, %v1568
        %s1571 = sld [smem:[#allocation7 + $0x1c]]
        %v1572 = vstv %s1571
        %v1573 = vmul.f32 %v1572, %v1545
        %v1574 = vmul.f32 %v1572, %v1546
        %1577 = vrot.lane.b32.xlu0 %v1573, 127
        %v1578 = vpop.permute.xlu0 %1577
        %1579 = vrot.lane.b32.xlu0 %v1574, 127
        %v1580 = vpop.permute.xlu0 %1579
        %v1583 = vadd.f32 %v1551, %v1578
        %v1584 = vadd.f32 %v1552, %v1580
        %s1585 = sld [smem:[#allocation7 + $0x9c]]
        %v1586 = vstv %s1585
        %v1587 = vmul.f32 %v1586, %v1545
        %v1588 = vmul.f32 %v1586, %v1546
        %1591 = vrot.lane.b32.xlu0 %v1587, 127
        %v1592 = vpop.permute.xlu0 %1591
        %1593 = vrot.lane.b32.xlu0 %v1588, 127
        %v1594 = vpop.permute.xlu0 %1593
        %v1597 = vadd.f32 %v1557, %v1592
        %v1598 = vadd.f32 %v1558, %v1594
        %s1599 = sld [smem:[#allocation7 + $0x11c]]
        %v1600 = vstv %s1599
        %v1601 = vmul.f32 %v1600, %v1545
        %v1602 = vmul.f32 %v1600, %v1546
        %1605 = vrot.lane.b32.xlu0 %v1601, 127
        %v1606 = vpop.permute.xlu0 %1605
        %1607 = vrot.lane.b32.xlu0 %v1602, 127
        %v1608 = vpop.permute.xlu0 %1607
        %v1611 = vadd.f32 %v1563, %v1606
        %v1612 = vadd.f32 %v1564, %v1608
        %s1613 = sld [smem:[#allocation7 + $0x19c]]
        %v1614 = vstv %s1613
        %v1615 = vmul.f32 %v1614, %v1545
        %v1616 = vmul.f32 %v1614, %v1546
        %1619 = vrot.lane.b32.xlu0 %v1615, 127
        %v1620 = vpop.permute.xlu0 %1619
        %1621 = vrot.lane.b32.xlu0 %v1616, 127
        %v1622 = vpop.permute.xlu0 %1621
        %v1625 = vadd.f32 %v1569, %v1620
        %v1626 = vadd.f32 %v1570, %v1622
        %s1627 = sld [smem:[#allocation7 + $0x1d]]
        %v1628 = vstv %s1627
        %v1629 = vmul.f32 %v1628, %v1545
        %v1630 = vmul.f32 %v1628, %v1546
        %1633 = vrot.lane.b32.xlu0 %v1629, 126
        %v1634 = vpop.permute.xlu0 %1633
        %1635 = vrot.lane.b32.xlu0 %v1630, 126
        %v1636 = vpop.permute.xlu0 %1635
        %v1639 = vadd.f32 %v1583, %v1634
        %v1640 = vadd.f32 %v1584, %v1636
        %s1641 = sld [smem:[#allocation7 + $0x9d]]
        %v1642 = vstv %s1641
        %v1643 = vmul.f32 %v1642, %v1545
        %v1644 = vmul.f32 %v1642, %v1546
        %1647 = vrot.lane.b32.xlu0 %v1643, 126
        %v1648 = vpop.permute.xlu0 %1647
        %1649 = vrot.lane.b32.xlu0 %v1644, 126
        %v1650 = vpop.permute.xlu0 %1649
        %v1653 = vadd.f32 %v1597, %v1648
        %v1654 = vadd.f32 %v1598, %v1650
        %s1655 = sld [smem:[#allocation7 + $0x11d]]
        %v1656 = vstv %s1655
        %v1657 = vmul.f32 %v1656, %v1545
        %v1658 = vmul.f32 %v1656, %v1546
        %1661 = vrot.lane.b32.xlu0 %v1657, 126
        %v1662 = vpop.permute.xlu0 %1661
        %1663 = vrot.lane.b32.xlu0 %v1658, 126
        %v1664 = vpop.permute.xlu0 %1663
        %v1667 = vadd.f32 %v1611, %v1662
        %v1668 = vadd.f32 %v1612, %v1664
        %s1669 = sld [smem:[#allocation7 + $0x19d]]
        %v1670 = vstv %s1669
        %v1671 = vmul.f32 %v1670, %v1545
        %v1672 = vmul.f32 %v1670, %v1546
        %1675 = vrot.lane.b32.xlu0 %v1671, 126
        %v1676 = vpop.permute.xlu0 %1675
        %1677 = vrot.lane.b32.xlu0 %v1672, 126
        %v1678 = vpop.permute.xlu0 %1677
        %v1681 = vadd.f32 %v1625, %v1676
        %v1682 = vadd.f32 %v1626, %v1678
        %v1683 = vld [vmem:[%s1544 + $0x1] sm:$0xff]
        %v1684 = vld [vmem:[%s1544 + $0x9] sm:$0x3f]
        %s1685 = sld [smem:[#allocation7 + $0x1e]]
        %v1686 = vstv %s1685
        %v1687 = vmul.f32 %v1686, %v1683
        %v1688 = vmul.f32 %v1686, %v1684
        %v1689 = vadd.f32 %v1639, %v1687
        %v1690 = vadd.f32 %v1640, %v1688
        %s1691 = sld [smem:[#allocation7 + $0x9e]]
        %v1692 = vstv %s1691
        %v1693 = vmul.f32 %v1692, %v1683
        %v1694 = vmul.f32 %v1692, %v1684
        %v1695 = vadd.f32 %v1653, %v1693
        %v1696 = vadd.f32 %v1654, %v1694
        %s1697 = sld [smem:[#allocation7 + $0x11e]]
        %v1698 = vstv %s1697
        %v1699 = vmul.f32 %v1698, %v1683
        %v1700 = vmul.f32 %v1698, %v1684
        %v1701 = vadd.f32 %v1667, %v1699
        %v1702 = vadd.f32 %v1668, %v1700
        %s1703 = sld [smem:[#allocation7 + $0x19e]]
        %v1704 = vstv %s1703
        %v1705 = vmul.f32 %v1704, %v1683
        %v1706 = vmul.f32 %v1704, %v1684
        %v1707 = vadd.f32 %v1681, %v1705
        %v1708 = vadd.f32 %v1682, %v1706
        %s1709 = sld [smem:[#allocation7 + $0x1f]]
        %v1710 = vstv %s1709
        %v1711 = vmul.f32 %v1710, %v1683
        %v1712 = vmul.f32 %v1710, %v1684
        %1715 = vrot.lane.b32.xlu0 %v1711, 127
        %v1716 = vpop.permute.xlu0 %1715
        %1717 = vrot.lane.b32.xlu0 %v1712, 127
        %v1718 = vpop.permute.xlu0 %1717
        %v1721 = vadd.f32 %v1689, %v1716
        %v1722 = vadd.f32 %v1690, %v1718
        %s1723 = sld [smem:[#allocation7 + $0x9f]]
        %v1724 = vstv %s1723
        %v1725 = vmul.f32 %v1724, %v1683
        %v1726 = vmul.f32 %v1724, %v1684
        %1729 = vrot.lane.b32.xlu0 %v1725, 127
        %v1730 = vpop.permute.xlu0 %1729
        %1731 = vrot.lane.b32.xlu0 %v1726, 127
        %v1732 = vpop.permute.xlu0 %1731
        %v1735 = vadd.f32 %v1695, %v1730
        %v1736 = vadd.f32 %v1696, %v1732
        %s1737 = sld [smem:[#allocation7 + $0x11f]]
        %v1738 = vstv %s1737
        %v1739 = vmul.f32 %v1738, %v1683
        %v1740 = vmul.f32 %v1738, %v1684
        %1743 = vrot.lane.b32.xlu0 %v1739, 127
        %v1744 = vpop.permute.xlu0 %1743
        %1745 = vrot.lane.b32.xlu0 %v1740, 127
        %v1746 = vpop.permute.xlu0 %1745
        %v1749 = vadd.f32 %v1701, %v1744
        %v1750 = vadd.f32 %v1702, %v1746
        %s1751 = sld [smem:[#allocation7 + $0x19f]]
        %v1752 = vstv %s1751
        %v1753 = vmul.f32 %v1752, %v1683
        %v1754 = vmul.f32 %v1752, %v1684
        %1757 = vrot.lane.b32.xlu0 %v1753, 127
        %v1758 = vpop.permute.xlu0 %1757
        %1759 = vrot.lane.b32.xlu0 %v1754, 127
        %v1760 = vpop.permute.xlu0 %1759
        %v1763 = vadd.f32 %v1707, %v1758
        %v1764 = vadd.f32 %v1708, %v1760
        %s1765 = sld [smem:[#allocation7 + $0x20]]
        %v1766 = vstv %s1765
        %v1767 = vmul.f32 %v1766, %v1683
        %v1768 = vmul.f32 %v1766, %v1684
        %1771 = vrot.lane.b32.xlu0 %v1767, 126
        %v1772 = vpop.permute.xlu0 %1771
        %1773 = vrot.lane.b32.xlu0 %v1768, 126
        %v1774 = vpop.permute.xlu0 %1773
        %v1777 = vadd.f32 %v1721, %v1772
        %v1778 = vadd.f32 %v1722, %v1774
        %s1779 = sld [smem:[#allocation7 + $0xa0]]
        %v1780 = vstv %s1779
        %v1781 = vmul.f32 %v1780, %v1683
        %v1782 = vmul.f32 %v1780, %v1684
        %1785 = vrot.lane.b32.xlu0 %v1781, 126
        %v1786 = vpop.permute.xlu0 %1785
        %1787 = vrot.lane.b32.xlu0 %v1782, 126
        %v1788 = vpop.permute.xlu0 %1787
        %v1791 = vadd.f32 %v1735, %v1786
        %v1792 = vadd.f32 %v1736, %v1788
        %s1793 = sld [smem:[#allocation7 + $0x120]]
        %v1794 = vstv %s1793
        %v1795 = vmul.f32 %v1794, %v1683
        %v1796 = vmul.f32 %v1794, %v1684
        %1799 = vrot.lane.b32.xlu0 %v1795, 126
        %v1800 = vpop.permute.xlu0 %1799
        %1801 = vrot.lane.b32.xlu0 %v1796, 126
        %v1802 = vpop.permute.xlu0 %1801
        %v1805 = vadd.f32 %v1749, %v1800
        %v1806 = vadd.f32 %v1750, %v1802
        %s1807 = sld [smem:[#allocation7 + $0x1a0]]
        %v1808 = vstv %s1807
        %v1809 = vmul.f32 %v1808, %v1683
        %v1810 = vmul.f32 %v1808, %v1684
        %1813 = vrot.lane.b32.xlu0 %v1809, 126
        %v1814 = vpop.permute.xlu0 %1813
        %1815 = vrot.lane.b32.xlu0 %v1810, 126
        %v1816 = vpop.permute.xlu0 %1815
        %v1819 = vadd.f32 %v1763, %v1814
        %v1820 = vadd.f32 %v1764, %v1816
        %v1821 = vld [vmem:[%s1544 + $0x2] sm:$0xff]
        %v1822 = vld [vmem:[%s1544 + $0xa] sm:$0x3f]
        %s1823 = sld [smem:[#allocation7 + $0x21]]
        %v1824 = vstv %s1823
        %v1825 = vmul.f32 %v1824, %v1821
        %v1826 = vmul.f32 %v1824, %v1822
        %v1827 = vadd.f32 %v1777, %v1825
        %v1828 = vadd.f32 %v1778, %v1826
        %s1829 = sld [smem:[#allocation7 + $0xa1]]
        %v1830 = vstv %s1829
        %v1831 = vmul.f32 %v1830, %v1821
        %v1832 = vmul.f32 %v1830, %v1822
        %v1833 = vadd.f32 %v1791, %v1831
        %v1834 = vadd.f32 %v1792, %v1832
        %s1835 = sld [smem:[#allocation7 + $0x121]]
        %v1836 = vstv %s1835
        %v1837 = vmul.f32 %v1836, %v1821
        %v1838 = vmul.f32 %v1836, %v1822
        %v1839 = vadd.f32 %v1805, %v1837
        %v1840 = vadd.f32 %v1806, %v1838
        %s1841 = sld [smem:[#allocation7 + $0x1a1]]
        %v1842 = vstv %s1841
        %v1843 = vmul.f32 %v1842, %v1821
        %v1844 = vmul.f32 %v1842, %v1822
        %v1845 = vadd.f32 %v1819, %v1843
        %v1846 = vadd.f32 %v1820, %v1844
        %s1847 = sld [smem:[#allocation7 + $0x22]]
        %v1848 = vstv %s1847
        %v1849 = vmul.f32 %v1848, %v1821
        %v1850 = vmul.f32 %v1848, %v1822
        %1853 = vrot.lane.b32.xlu0 %v1849, 127
        %v1854 = vpop.permute.xlu0 %1853
        %1855 = vrot.lane.b32.xlu0 %v1850, 127
        %v1856 = vpop.permute.xlu0 %1855
        %v1859 = vadd.f32 %v1827, %v1854
        %v1860 = vadd.f32 %v1828, %v1856
        %s1861 = sld [smem:[#allocation7 + $0xa2]]
        %v1862 = vstv %s1861
        %v1863 = vmul.f32 %v1862, %v1821
        %v1864 = vmul.f32 %v1862, %v1822
        %1867 = vrot.lane.b32.xlu0 %v1863, 127
        %v1868 = vpop.permute.xlu0 %1867
        %1869 = vrot.lane.b32.xlu0 %v1864, 127
        %v1870 = vpop.permute.xlu0 %1869
        %v1873 = vadd.f32 %v1833, %v1868
        %v1874 = vadd.f32 %v1834, %v1870
        %s1875 = sld [smem:[#allocation7 + $0x122]]
        %v1876 = vstv %s1875
        %v1877 = vmul.f32 %v1876, %v1821
        %v1878 = vmul.f32 %v1876, %v1822
        %1881 = vrot.lane.b32.xlu0 %v1877, 127
        %v1882 = vpop.permute.xlu0 %1881
        %1883 = vrot.lane.b32.xlu0 %v1878, 127
        %v1884 = vpop.permute.xlu0 %1883
        %v1887 = vadd.f32 %v1839, %v1882
        %v1888 = vadd.f32 %v1840, %v1884
        %s1889 = sld [smem:[#allocation7 + $0x1a2]]
        %v1890 = vstv %s1889
        %v1891 = vmul.f32 %v1890, %v1821
        %v1892 = vmul.f32 %v1890, %v1822
        %1895 = vrot.lane.b32.xlu0 %v1891, 127
        %v1896 = vpop.permute.xlu0 %1895
        %1897 = vrot.lane.b32.xlu0 %v1892, 127
        %v1898 = vpop.permute.xlu0 %1897
        %v1901 = vadd.f32 %v1845, %v1896
        %v1902 = vadd.f32 %v1846, %v1898
        %s1903 = sld [smem:[#allocation7 + $0x23]]
        %v1904 = vstv %s1903
        %v1905 = vmul.f32 %v1904, %v1821
        %v1906 = vmul.f32 %v1904, %v1822
        %1909 = vrot.lane.b32.xlu0 %v1905, 126
        %v1910 = vpop.permute.xlu0 %1909
        %1911 = vrot.lane.b32.xlu0 %v1906, 126
        %v1912 = vpop.permute.xlu0 %1911
        %v1915 = vadd.f32 %v1859, %v1910
        %v1916 = vadd.f32 %v1860, %v1912
        %s1917 = sld [smem:[#allocation7 + $0xa3]]
        %v1918 = vstv %s1917
        %v1919 = vmul.f32 %v1918, %v1821
        %v1920 = vmul.f32 %v1918, %v1822
        %1923 = vrot.lane.b32.xlu0 %v1919, 126
        %v1924 = vpop.permute.xlu0 %1923
        %1925 = vrot.lane.b32.xlu0 %v1920, 126
        %v1926 = vpop.permute.xlu0 %1925
        %v1929 = vadd.f32 %v1873, %v1924
        %v1930 = vadd.f32 %v1874, %v1926
        %s1931 = sld [smem:[#allocation7 + $0x123]]
        %v1932 = vstv %s1931
        %v1933 = vmul.f32 %v1932, %v1821
        %v1934 = vmul.f32 %v1932, %v1822
        %1937 = vrot.lane.b32.xlu0 %v1933, 126
        %v1938 = vpop.permute.xlu0 %1937
        %1939 = vrot.lane.b32.xlu0 %v1934, 126
        %v1940 = vpop.permute.xlu0 %1939
        %v1943 = vadd.f32 %v1887, %v1938
        %v1944 = vadd.f32 %v1888, %v1940
        %s1945 = sld [smem:[#allocation7 + $0x1a3]]
        %v1946 = vstv %s1945
        %v1947 = vmul.f32 %v1946, %v1821
        %v1948 = vmul.f32 %v1946, %v1822
        %1951 = vrot.lane.b32.xlu0 %v1947, 126
        %v1952 = vpop.permute.xlu0 %1951
        %1953 = vrot.lane.b32.xlu0 %v1948, 126
        %v1954 = vpop.permute.xlu0 %1953
        %v1957 = vadd.f32 %v1901, %v1952
        %v1958 = vadd.f32 %v1902, %v1954
        %v1959 = vmax.f32 %v1915, 0.0
        %v1960 = vmax.f32 %v1916, 0.0
        %v1962 = vrot.slane %v1959, 1
        %v1964 = vmax.f32 %v1959, %v1962
        %v1966 = vrot.slane %v1960, 1
        %v1968 = vmax.f32 %v1960, %v1966
        %v1970 = vrot.slane %v1964, 1
        %v1972 = vrot.slane %v1964, 2
        %v1974 = vrot.slane %v1964, 3
        %v1977 = vrot.slane %v1968, 4
        %v1979 = vrot.slane %v1968, 5
        %v1981 = vrot.slane %v1968, 6
        %vm1983 = vcmask 1040384
        %v1984 = vsel %vm1983, %v1964, %v1970
        %vm1985 = vcmask 1041408
        %v1986 = vsel %vm1985, %v1984, %v1972
        %vm1987 = vcmask 1042432
        %v1988 = vsel %vm1987, %v1986, %v1974
        %vm1989 = vcmask 1043456
        %v1990 = vsel %vm1989, %v1988, %v1977
        %vm1991 = vcmask 1044480
        %v1992 = vsel %vm1991, %v1990, %v1979
        %vm1993 = vcmask 1045504
        %v1994 = vsel %vm1993, %v1992, %v1981
        %1996 = vrot.lane.b32.xlu0 %v1994, 127
        %v1997 = vpop.permute.xlu0 %1996
        %v1999 = vmax.f32 %v1994, %v1997
        %2001 = vrot.lane.b32.xlu0 %v1999, 127
        %v2002 = vpop.permute.xlu0 %2001
        %2004 = vrot.lane.b32.xlu0 %v1999, 126
        %v2005 = vpop.permute.xlu0 %2004
        %2007 = vrot.lane.b32.xlu0 %v1999, 125
        %v2008 = vpop.permute.xlu0 %2007
        %2010 = vrot.lane.b32.xlu0 %v1999, 124
        %v2011 = vpop.permute.xlu0 %2010
        %2013 = vrot.lane.b32.xlu0 %v1999, 123
        %v2014 = vpop.permute.xlu0 %2013
        %2016 = vrot.lane.b32.xlu0 %v1999, 122
        %v2017 = vpop.permute.xlu0 %2016
        %vm2019 = vcmask 7168
        %v2020 = vsel %vm2019, %v1999, %v2002
        %vm2021 = vcmask 15360
        %v2022 = vsel %vm2021, %v2020, %v2005
        %vm2023 = vcmask 23552
        %v2024 = vsel %vm2023, %v2022, %v2008
        %vm2025 = vcmask 31744
        %v2026 = vsel %vm2025, %v2024, %v2011
        %vm2027 = vcmask 39936
        %v2028 = vsel %vm2027, %v2026, %v2014
        %vm2029 = vcmask 48128
        %v2030 = vsel %vm2029, %v2028, %v2017
        %v2031 = vmax.f32 %v1929, 0.0
        %v2032 = vmax.f32 %v1930, 0.0
        %v2034 = vrot.slane %v2031, 1
        %v2036 = vmax.f32 %v2031, %v2034
        %v2038 = vrot.slane %v2032, 1
        %v2040 = vmax.f32 %v2032, %v2038
        %v2042 = vrot.slane %v2036, 1
        %v2044 = vrot.slane %v2036, 2
        %v2046 = vrot.slane %v2036, 3
        %v2049 = vrot.slane %v2040, 4
        %v2051 = vrot.slane %v2040, 5
        %v2053 = vrot.slane %v2040, 6
        %v2055 = vsel %vm1983, %v2036, %v2042
        %v2056 = vsel %vm1985, %v2055, %v2044
        %v2057 = vsel %vm1987, %v2056, %v2046
        %v2058 = vsel %vm1989, %v2057, %v2049
        %v2059 = vsel %vm1991, %v2058, %v2051
        %v2060 = vsel %vm1993, %v2059, %v2053
        %2062 = vrot.lane.b32.xlu0 %v2060, 127
        %v2063 = vpop.permute.xlu0 %2062
        %v2065 = vmax.f32 %v2060, %v2063
        %2067 = vrot.lane.b32.xlu0 %v2065, 127
        %v2068 = vpop.permute.xlu0 %2067
        %2070 = vrot.lane.b32.xlu0 %v2065, 126
        %v2071 = vpop.permute.xlu0 %2070
        %2073 = vrot.lane.b32.xlu0 %v2065, 125
        %v2074 = vpop.permute.xlu0 %2073
        %2076 = vrot.lane.b32.xlu0 %v2065, 124
        %v2077 = vpop.permute.xlu0 %2076
        %2079 = vrot.lane.b32.xlu0 %v2065, 123
        %v2080 = vpop.permute.xlu0 %2079
        %2082 = vrot.lane.b32.xlu0 %v2065, 122
        %v2083 = vpop.permute.xlu0 %2082
        %v2085 = vsel %vm2019, %v2065, %v2068
        %v2086 = vsel %vm2021, %v2085, %v2071
        %v2087 = vsel %vm2023, %v2086, %v2074
        %v2088 = vsel %vm2025, %v2087, %v2077
        %v2089 = vsel %vm2027, %v2088, %v2080
        %v2090 = vsel %vm2029, %v2089, %v2083
        %v2091 = vmax.f32 %v1943, 0.0
        %v2092 = vmax.f32 %v1944, 0.0
        %v2094 = vrot.slane %v2091, 1
        %v2096 = vmax.f32 %v2091, %v2094
        %v2098 = vrot.slane %v2092, 1
        %v2100 = vmax.f32 %v2092, %v2098
        %v2102 = vrot.slane %v2096, 1
        %v2104 = vrot.slane %v2096, 2
        %v2106 = vrot.slane %v2096, 3
        %v2109 = vrot.slane %v2100, 4
        %v2111 = vrot.slane %v2100, 5
        %v2113 = vrot.slane %v2100, 6
        %v2115 = vsel %vm1983, %v2096, %v2102
        %v2116 = vsel %vm1985, %v2115, %v2104
        %v2117 = vsel %vm1987, %v2116, %v2106
        %v2118 = vsel %vm1989, %v2117, %v2109
        %v2119 = vsel %vm1991, %v2118, %v2111
        %v2120 = vsel %vm1993, %v2119, %v2113
        %2122 = vrot.lane.b32.xlu0 %v2120, 127
        %v2123 = vpop.permute.xlu0 %2122
        %v2125 = vmax.f32 %v2120, %v2123
        %2127 = vrot.lane.b32.xlu0 %v2125, 127
        %v2128 = vpop.permute.xlu0 %2127
        %2130 = vrot.lane.b32.xlu0 %v2125, 126
        %v2131 = vpop.permute.xlu0 %2130
        %2133 = vrot.lane.b32.xlu0 %v2125, 125
        %v2134 = vpop.permute.xlu0 %2133
        %2136 = vrot.lane.b32.xlu0 %v2125, 124
        %v2137 = vpop.permute.xlu0 %2136
        %2139 = vrot.lane.b32.xlu0 %v2125, 123
        %v2140 = vpop.permute.xlu0 %2139
        %2142 = vrot.lane.b32.xlu0 %v2125, 122
        %v2143 = vpop.permute.xlu0 %2142
        %v2145 = vsel %vm2019, %v2125, %v2128
        %v2146 = vsel %vm2021, %v2145, %v2131
        %v2147 = vsel %vm2023, %v2146, %v2134
        %v2148 = vsel %vm2025, %v2147, %v2137
        %v2149 = vsel %vm2027, %v2148, %v2140
        %v2150 = vsel %vm2029, %v2149, %v2143
        %v2151 = vmax.f32 %v1957, 0.0
        %v2152 = vmax.f32 %v1958, 0.0
        %v2154 = vrot.slane %v2151, 1
        %v2156 = vmax.f32 %v2151, %v2154
        %v2158 = vrot.slane %v2152, 1
        %v2160 = vmax.f32 %v2152, %v2158
        %v2162 = vrot.slane %v2156, 1
        %v2164 = vrot.slane %v2156, 2
        %v2166 = vrot.slane %v2156, 3
        %v2169 = vrot.slane %v2160, 4
        %v2171 = vrot.slane %v2160, 5
        %v2173 = vrot.slane %v2160, 6
        %v2175 = vsel %vm1983, %v2156, %v2162
        %v2176 = vsel %vm1985, %v2175, %v2164
        %v2177 = vsel %vm1987, %v2176, %v2166
        %v2178 = vsel %vm1989, %v2177, %v2169
        %v2179 = vsel %vm1991, %v2178, %v2171
        %v2180 = vsel %vm1993, %v2179, %v2173
        %2182 = vrot.lane.b32.xlu0 %v2180, 127
        %v2183 = vpop.permute.xlu0 %2182
        %v2185 = vmax.f32 %v2180, %v2183
        %2187 = vrot.lane.b32.xlu0 %v2185, 127
        %v2188 = vpop.permute.xlu0 %2187
        %2190 = vrot.lane.b32.xlu0 %v2185, 126
        %v2191 = vpop.permute.xlu0 %2190
        %2193 = vrot.lane.b32.xlu0 %v2185, 125
        %v2194 = vpop.permute.xlu0 %2193
        %2196 = vrot.lane.b32.xlu0 %v2185, 124
        %v2197 = vpop.permute.xlu0 %2196
        %2199 = vrot.lane.b32.xlu0 %v2185, 123
        %v2200 = vpop.permute.xlu0 %2199
        %2202 = vrot.lane.b32.xlu0 %v2185, 122
        %v2203 = vpop.permute.xlu0 %2202
        %v2205 = vsel %vm2019, %v2185, %v2188
        %v2206 = vsel %vm2021, %v2205, %v2191
        %v2207 = vsel %vm2023, %v2206, %v2194
        %v2208 = vsel %vm2025, %v2207, %v2197
        %v2209 = vsel %vm2027, %v2208, %v2200
        %v2210 = vsel %vm2029, %v2209, %v2203
        %s2211 = sld [smem:[#allocation11]]
        %v2212 = vstv %s2211
        %s2213 = sld [smem:[#allocation11 + $0x1]]
        %v2214 = vstv %s2213
        %s2215 = sld [smem:[#allocation11 + $0x2]]
        %v2216 = vstv %s2215
        %s2217 = sld [smem:[#allocation11 + $0x3]]
        %v2218 = vstv %s2217
        %s2219 = sld [smem:[#allocation9]]
        %v2220 = vstv %s2219
        %v2221 = vmul.f32 %v2220, %v2030
        %v2222 = vadd.f32 %v2212, %v2221
        %s2223 = sld [smem:[#allocation9 + $0x80]]
        %v2224 = vstv %s2223
        %v2225 = vmul.f32 %v2224, %v2030
        %v2226 = vadd.f32 %v2214, %v2225
        %s2227 = sld [smem:[#allocation9 + $0x100]]
        %v2228 = vstv %s2227
        %v2229 = vmul.f32 %v2228, %v2030
        %v2230 = vadd.f32 %v2216, %v2229
        %s2231 = sld [smem:[#allocation9 + $0x180]]
        %v2232 = vstv %s2231
        %v2233 = vmul.f32 %v2232, %v2030
        %v2234 = vadd.f32 %v2218, %v2233
        %s2235 = sld [smem:[#allocation9 + $0x1]]
        %v2236 = vstv %s2235
        %v2237 = vmul.f32 %v2236, %v2030
        %2239 = vrot.lane.b32.xlu0 %v2237, 127
        %v2240 = vpop.permute.xlu0 %2239
        %v2242 = vadd.f32 %v2222, %v2240
        %s2243 = sld [smem:[#allocation9 + $0x81]]
        %v2244 = vstv %s2243
        %v2245 = vmul.f32 %v2244, %v2030
        %2247 = vrot.lane.b32.xlu0 %v2245, 127
        %v2248 = vpop.permute.xlu0 %2247
        %v2250 = vadd.f32 %v2226, %v2248
        %s2251 = sld [smem:[#allocation9 + $0x101]]
        %v2252 = vstv %s2251
        %v2253 = vmul.f32 %v2252, %v2030
        %2255 = vrot.lane.b32.xlu0 %v2253, 127
        %v2256 = vpop.permute.xlu0 %2255
        %v2258 = vadd.f32 %v2230, %v2256
        %s2259 = sld [smem:[#allocation9 + $0x181]]
        %v2260 = vstv %s2259
        %v2261 = vmul.f32 %v2260, %v2030
        %2263 = vrot.lane.b32.xlu0 %v2261, 127
        %v2264 = vpop.permute.xlu0 %2263
        %v2266 = vadd.f32 %v2234, %v2264
        %s2267 = sld [smem:[#allocation9 + $0x2]]
        %v2268 = vstv %s2267
        %v2269 = vmul.f32 %v2268, %v2030
        %2271 = vrot.lane.b32.xlu0 %v2269, 126
        %v2272 = vpop.permute.xlu0 %2271
        %v2274 = vadd.f32 %v2242, %v2272
        %s2275 = sld [smem:[#allocation9 + $0x82]]
        %v2276 = vstv %s2275
        %v2277 = vmul.f32 %v2276, %v2030
        %2279 = vrot.lane.b32.xlu0 %v2277, 126
        %v2280 = vpop.permute.xlu0 %2279
        %v2282 = vadd.f32 %v2250, %v2280
        %s2283 = sld [smem:[#allocation9 + $0x102]]
        %v2284 = vstv %s2283
        %v2285 = vmul.f32 %v2284, %v2030
        %2287 = vrot.lane.b32.xlu0 %v2285, 126
        %v2288 = vpop.permute.xlu0 %2287
        %v2290 = vadd.f32 %v2258, %v2288
        %s2291 = sld [smem:[#allocation9 + $0x182]]
        %v2292 = vstv %s2291
        %v2293 = vmul.f32 %v2292, %v2030
        %2295 = vrot.lane.b32.xlu0 %v2293, 126
        %v2296 = vpop.permute.xlu0 %2295
        %v2298 = vadd.f32 %v2266, %v2296
        %s2299 = sld [smem:[#allocation9 + $0x3]]
        %v2300 = vstv %s2299
        %v2301 = vmul.f32 %v2300, %v2030
        %v2303 = vrot.slane %v2301, 1
        %v2305 = vadd.f32 %v2274, %v2303
        %s2306 = sld [smem:[#allocation9 + $0x83]]
        %v2307 = vstv %s2306
        %v2308 = vmul.f32 %v2307, %v2030
        %v2310 = vrot.slane %v2308, 1
        %v2312 = vadd.f32 %v2282, %v2310
        %s2313 = sld [smem:[#allocation9 + $0x103]]
        %v2314 = vstv %s2313
        %v2315 = vmul.f32 %v2314, %v2030
        %v2317 = vrot.slane %v2315, 1
        %v2319 = vadd.f32 %v2290, %v2317
        %s2320 = sld [smem:[#allocation9 + $0x183]]
        %v2321 = vstv %s2320
        %v2322 = vmul.f32 %v2321, %v2030
        %v2324 = vrot.slane %v2322, 1
        %v2326 = vadd.f32 %v2298, %v2324
        %s2327 = sld [smem:[#allocation9 + $0x4]]
        %v2328 = vstv %s2327
        %v2329 = vmul.f32 %v2328, %v2030
        %v2331 = vrot.slane %v2329, 1
        %2332 = vrot.lane.b32.xlu0 %v2331, 127
        %v2333 = vpop.permute.xlu0 %2332
        %v2335 = vadd.f32 %v2305, %v2333
        %s2336 = sld [smem:[#allocation9 + $0x84]]
        %v2337 = vstv %s2336
        %v2338 = vmul.f32 %v2337, %v2030
        %v2340 = vrot.slane %v2338, 1
        %2341 = vrot.lane.b32.xlu0 %v2340, 127
        %v2342 = vpop.permute.xlu0 %2341
        %v2344 = vadd.f32 %v2312, %v2342
        %s2345 = sld [smem:[#allocation9 + $0x104]]
        %v2346 = vstv %s2345
        %v2347 = vmul.f32 %v2346, %v2030
        %v2349 = vrot.slane %v2347, 1
        %2350 = vrot.lane.b32.xlu0 %v2349, 127
        %v2351 = vpop.permute.xlu0 %2350
        %v2353 = vadd.f32 %v2319, %v2351
        %s2354 = sld [smem:[#allocation9 + $0x184]]
        %v2355 = vstv %s2354
        %v2356 = vmul.f32 %v2355, %v2030
        %v2358 = vrot.slane %v2356, 1
        %2359 = vrot.lane.b32.xlu0 %v2358, 127
        %v2360 = vpop.permute.xlu0 %2359
        %v2362 = vadd.f32 %v2326, %v2360
        %s2363 = sld [smem:[#allocation9 + $0x5]]
        %v2364 = vstv %s2363
        %v2365 = vmul.f32 %v2364, %v2030
        %v2367 = vrot.slane %v2365, 1
        %2368 = vrot.lane.b32.xlu0 %v2367, 126
        %v2369 = vpop.permute.xlu0 %2368
        %v2371 = vadd.f32 %v2335, %v2369
        %s2372 = sld [smem:[#allocation9 + $0x85]]
        %v2373 = vstv %s2372
        %v2374 = vmul.f32 %v2373, %v2030
        %v2376 = vrot.slane %v2374, 1
        %2377 = vrot.lane.b32.xlu0 %v2376, 126
        %v2378 = vpop.permute.xlu0 %2377
        %v2380 = vadd.f32 %v2344, %v2378
        %s2381 = sld [smem:[#allocation9 + $0x105]]
        %v2382 = vstv %s2381
        %v2383 = vmul.f32 %v2382, %v2030
        %v2385 = vrot.slane %v2383, 1
        %2386 = vrot.lane.b32.xlu0 %v2385, 126
        %v2387 = vpop.permute.xlu0 %2386
        %v2389 = vadd.f32 %v2353, %v2387
        %s2390 = sld [smem:[#allocation9 + $0x185]]
        %v2391 = vstv %s2390
        %v2392 = vmul.f32 %v2391, %v2030
        %v2394 = vrot.slane %v2392, 1
        %2395 = vrot.lane.b32.xlu0 %v2394, 126
        %v2396 = vpop.permute.xlu0 %2395
        %v2398 = vadd.f32 %v2362, %v2396
        %s2399 = sld [smem:[#allocation9 + $0x6]]
        %v2400 = vstv %s2399
        %v2401 = vmul.f32 %v2400, %v2030
        %v2403 = vrot.slane %v2401, 2
        %v2405 = vadd.f32 %v2371, %v2403
        %s2406 = sld [smem:[#allocation9 + $0x86]]
        %v2407 = vstv %s2406
        %v2408 = vmul.f32 %v2407, %v2030
        %v2410 = vrot.slane %v2408, 2
        %v2412 = vadd.f32 %v2380, %v2410
        %s2413 = sld [smem:[#allocation9 + $0x106]]
        %v2414 = vstv %s2413
        %v2415 = vmul.f32 %v2414, %v2030
        %v2417 = vrot.slane %v2415, 2
        %v2419 = vadd.f32 %v2389, %v2417
        %s2420 = sld [smem:[#allocation9 + $0x186]]
        %v2421 = vstv %s2420
        %v2422 = vmul.f32 %v2421, %v2030
        %v2424 = vrot.slane %v2422, 2
        %v2426 = vadd.f32 %v2398, %v2424
        %s2427 = sld [smem:[#allocation9 + $0x7]]
        %v2428 = vstv %s2427
        %v2429 = vmul.f32 %v2428, %v2030
        %v2431 = vrot.slane %v2429, 2
        %2432 = vrot.lane.b32.xlu0 %v2431, 127
        %v2433 = vpop.permute.xlu0 %2432
        %v2435 = vadd.f32 %v2405, %v2433
        %s2436 = sld [smem:[#allocation9 + $0x87]]
        %v2437 = vstv %s2436
        %v2438 = vmul.f32 %v2437, %v2030
        %v2440 = vrot.slane %v2438, 2
        %2441 = vrot.lane.b32.xlu0 %v2440, 127
        %v2442 = vpop.permute.xlu0 %2441
        %v2444 = vadd.f32 %v2412, %v2442
        %s2445 = sld [smem:[#allocation9 + $0x107]]
        %v2446 = vstv %s2445
        %v2447 = vmul.f32 %v2446, %v2030
        %v2449 = vrot.slane %v2447, 2
        %2450 = vrot.lane.b32.xlu0 %v2449, 127
        %v2451 = vpop.permute.xlu0 %2450
        %v2453 = vadd.f32 %v2419, %v2451
        %s2454 = sld [smem:[#allocation9 + $0x187]]
        %v2455 = vstv %s2454
        %v2456 = vmul.f32 %v2455, %v2030
        %v2458 = vrot.slane %v2456, 2
        %2459 = vrot.lane.b32.xlu0 %v2458, 127
        %v2460 = vpop.permute.xlu0 %2459
        %v2462 = vadd.f32 %v2426, %v2460
        %s2463 = sld [smem:[#allocation9 + $0x8]]
        %v2464 = vstv %s2463
        %v2465 = vmul.f32 %v2464, %v2030
        %v2467 = vrot.slane %v2465, 2
        %2468 = vrot.lane.b32.xlu0 %v2467, 126
        %v2469 = vpop.permute.xlu0 %2468
        %v2471 = vadd.f32 %v2435, %v2469
        %s2472 = sld [smem:[#allocation9 + $0x88]]
        %v2473 = vstv %s2472
        %v2474 = vmul.f32 %v2473, %v2030
        %v2476 = vrot.slane %v2474, 2
        %2477 = vrot.lane.b32.xlu0 %v2476, 126
        %v2478 = vpop.permute.xlu0 %2477
        %v2480 = vadd.f32 %v2444, %v2478
        %s2481 = sld [smem:[#allocation9 + $0x108]]
        %v2482 = vstv %s2481
        %v2483 = vmul.f32 %v2482, %v2030
        %v2485 = vrot.slane %v2483, 2
        %2486 = vrot.lane.b32.xlu0 %v2485, 126
        %v2487 = vpop.permute.xlu0 %2486
        %v2489 = vadd.f32 %v2453, %v2487
        %s2490 = sld [smem:[#allocation9 + $0x188]]
        %v2491 = vstv %s2490
        %v2492 = vmul.f32 %v2491, %v2030
        %v2494 = vrot.slane %v2492, 2
        %2495 = vrot.lane.b32.xlu0 %v2494, 126
        %v2496 = vpop.permute.xlu0 %2495
        %v2498 = vadd.f32 %v2462, %v2496
        %s2499 = sld [smem:[#allocation9 + $0x9]]
        %v2500 = vstv %s2499
        %v2501 = vmul.f32 %v2500, %v2090
        %v2502 = vadd.f32 %v2471, %v2501
        %s2503 = sld [smem:[#allocation9 + $0x89]]
        %v2504 = vstv %s2503
        %v2505 = vmul.f32 %v2504, %v2090
        %v2506 = vadd.f32 %v2480, %v2505
        %s2507 = sld [smem:[#allocation9 + $0x109]]
        %v2508 = vstv %s2507
        %v2509 = vmul.f32 %v2508, %v2090
        %v2510 = vadd.f32 %v2489, %v2509
        %s2511 = sld [smem:[#allocation9 + $0x189]]
        %v2512 = vstv %s2511
        %v2513 = vmul.f32 %v2512, %v2090
        %v2514 = vadd.f32 %v2498, %v2513
        %s2515 = sld [smem:[#allocation9 + $0xa]]
        %v2516 = vstv %s2515
        %v2517 = vmul.f32 %v2516, %v2090
        %2519 = vrot.lane.b32.xlu0 %v2517, 127
        %v2520 = vpop.permute.xlu0 %2519
        %v2522 = vadd.f32 %v2502, %v2520
        %s2523 = sld [smem:[#allocation9 + $0x8a]]
        %v2524 = vstv %s2523
        %v2525 = vmul.f32 %v2524, %v2090
        %2527 = vrot.lane.b32.xlu0 %v2525, 127
        %v2528 = vpop.permute.xlu0 %2527
        %v2530 = vadd.f32 %v2506, %v2528
        %s2531 = sld [smem:[#allocation9 + $0x10a]]
        %v2532 = vstv %s2531
        %v2533 = vmul.f32 %v2532, %v2090
        %2535 = vrot.lane.b32.xlu0 %v2533, 127
        %v2536 = vpop.permute.xlu0 %2535
        %v2538 = vadd.f32 %v2510, %v2536
        %s2539 = sld [smem:[#allocation9 + $0x18a]]
        %v2540 = vstv %s2539
        %v2541 = vmul.f32 %v2540, %v2090
        %2543 = vrot.lane.b32.xlu0 %v2541, 127
        %v2544 = vpop.permute.xlu0 %2543
        %v2546 = vadd.f32 %v2514, %v2544
        %s2547 = sld [smem:[#allocation9 + $0xb]]
        %v2548 = vstv %s2547
        %v2549 = vmul.f32 %v2548, %v2090
        %2551 = vrot.lane.b32.xlu0 %v2549, 126
        %v2552 = vpop.permute.xlu0 %2551
        %v2554 = vadd.f32 %v2522, %v2552
        %s2555 = sld [smem:[#allocation9 + $0x8b]]
        %v2556 = vstv %s2555
        %v2557 = vmul.f32 %v2556, %v2090
        %2559 = vrot.lane.b32.xlu0 %v2557, 126
        %v2560 = vpop.permute.xlu0 %2559
        %v2562 = vadd.f32 %v2530, %v2560
        %s2563 = sld [smem:[#allocation9 + $0x10b]]
        %v2564 = vstv %s2563
        %v2565 = vmul.f32 %v2564, %v2090
        %2567 = vrot.lane.b32.xlu0 %v2565, 126
        %v2568 = vpop.permute.xlu0 %2567
        %v2570 = vadd.f32 %v2538, %v2568
        %s2571 = sld [smem:[#allocation9 + $0x18b]]
        %v2572 = vstv %s2571
        %v2573 = vmul.f32 %v2572, %v2090
        %2575 = vrot.lane.b32.xlu0 %v2573, 126
        %v2576 = vpop.permute.xlu0 %2575
        %v2578 = vadd.f32 %v2546, %v2576
        %s2579 = sld [smem:[#allocation9 + $0xc]]
        %v2580 = vstv %s2579
        %v2581 = vmul.f32 %v2580, %v2090
        %v2583 = vrot.slane %v2581, 1
        %v2585 = vadd.f32 %v2554, %v2583
        %s2586 = sld [smem:[#allocation9 + $0x8c]]
        %v2587 = vstv %s2586
        %v2588 = vmul.f32 %v2587, %v2090
        %v2590 = vrot.slane %v2588, 1
        %v2592 = vadd.f32 %v2562, %v2590
        %s2593 = sld [smem:[#allocation9 + $0x10c]]
        %v2594 = vstv %s2593
        %v2595 = vmul.f32 %v2594, %v2090
        %v2597 = vrot.slane %v2595, 1
        %v2599 = vadd.f32 %v2570, %v2597
        %s2600 = sld [smem:[#allocation9 + $0x18c]]
        %v2601 = vstv %s2600
        %v2602 = vmul.f32 %v2601, %v2090
        %v2604 = vrot.slane %v2602, 1
        %v2606 = vadd.f32 %v2578, %v2604
        %s2607 = sld [smem:[#allocation9 + $0xd]]
        %v2608 = vstv %s2607
        %v2609 = vmul.f32 %v2608, %v2090
        %v2611 = vrot.slane %v2609, 1
        %2612 = vrot.lane.b32.xlu0 %v2611, 127
        %v2613 = vpop.permute.xlu0 %2612
        %v2615 = vadd.f32 %v2585, %v2613
        %s2616 = sld [smem:[#allocation9 + $0x8d]]
        %v2617 = vstv %s2616
        %v2618 = vmul.f32 %v2617, %v2090
        %v2620 = vrot.slane %v2618, 1
        %2621 = vrot.lane.b32.xlu0 %v2620, 127
        %v2622 = vpop.permute.xlu0 %2621
        %v2624 = vadd.f32 %v2592, %v2622
        %s2625 = sld [smem:[#allocation9 + $0x10d]]
        %v2626 = vstv %s2625
        %v2627 = vmul.f32 %v2626, %v2090
        %v2629 = vrot.slane %v2627, 1
        %2630 = vrot.lane.b32.xlu0 %v2629, 127
        %v2631 = vpop.permute.xlu0 %2630
        %v2633 = vadd.f32 %v2599, %v2631
        %s2634 = sld [smem:[#allocation9 + $0x18d]]
        %v2635 = vstv %s2634
        %v2636 = vmul.f32 %v2635, %v2090
        %v2638 = vrot.slane %v2636, 1
        %2639 = vrot.lane.b32.xlu0 %v2638, 127
        %v2640 = vpop.permute.xlu0 %2639
        %v2642 = vadd.f32 %v2606, %v2640
        %s2643 = sld [smem:[#allocation9 + $0xe]]
        %v2644 = vstv %s2643
        %v2645 = vmul.f32 %v2644, %v2090
        %v2647 = vrot.slane %v2645, 1
        %2648 = vrot.lane.b32.xlu0 %v2647, 126
        %v2649 = vpop.permute.xlu0 %2648
        %v2651 = vadd.f32 %v2615, %v2649
        %s2652 = sld [smem:[#allocation9 + $0x8e]]
        %v2653 = vstv %s2652
        %v2654 = vmul.f32 %v2653, %v2090
        %v2656 = vrot.slane %v2654, 1
        %2657 = vrot.lane.b32.xlu0 %v2656, 126
        %v2658 = vpop.permute.xlu0 %2657
        %v2660 = vadd.f32 %v2624, %v2658
        %s2661 = sld [smem:[#allocation9 + $0x10e]]
        %v2662 = vstv %s2661
        %v2663 = vmul.f32 %v2662, %v2090
        %v2665 = vrot.slane %v2663, 1
        %2666 = vrot.lane.b32.xlu0 %v2665, 126
        %v2667 = vpop.permute.xlu0 %2666
        %v2669 = vadd.f32 %v2633, %v2667
        %s2670 = sld [smem:[#allocation9 + $0x18e]]
        %v2671 = vstv %s2670
        %v2672 = vmul.f32 %v2671, %v2090
        %v2674 = vrot.slane %v2672, 1
        %2675 = vrot.lane.b32.xlu0 %v2674, 126
        %v2676 = vpop.permute.xlu0 %2675
        %v2678 = vadd.f32 %v2642, %v2676
        %s2679 = sld [smem:[#allocation9 + $0xf]]
        %v2680 = vstv %s2679
        %v2681 = vmul.f32 %v2680, %v2090
        %v2683 = vrot.slane %v2681, 2
        %v2685 = vadd.f32 %v2651, %v2683
        %s2686 = sld [smem:[#allocation9 + $0x8f]]
        %v2687 = vstv %s2686
        %v2688 = vmul.f32 %v2687, %v2090
        %v2690 = vrot.slane %v2688, 2
        %v2692 = vadd.f32 %v2660, %v2690
        %s2693 = sld [smem:[#allocation9 + $0x10f]]
        %v2694 = vstv %s2693
        %v2695 = vmul.f32 %v2694, %v2090
        %v2697 = vrot.slane %v2695, 2
        %v2699 = vadd.f32 %v2669, %v2697
        %s2700 = sld [smem:[#allocation9 + $0x18f]]
        %v2701 = vstv %s2700
        %v2702 = vmul.f32 %v2701, %v2090
        %v2704 = vrot.slane %v2702, 2
        %v2706 = vadd.f32 %v2678, %v2704
        %s2707 = sld [smem:[#allocation9 + $0x10]]
        %v2708 = vstv %s2707
        %v2709 = vmul.f32 %v2708, %v2090
        %v2711 = vrot.slane %v2709, 2
        %2712 = vrot.lane.b32.xlu0 %v2711, 127
        %v2713 = vpop.permute.xlu0 %2712
        %v2715 = vadd.f32 %v2685, %v2713
        %s2716 = sld [smem:[#allocation9 + $0x90]]
        %v2717 = vstv %s2716
        %v2718 = vmul.f32 %v2717, %v2090
        %v2720 = vrot.slane %v2718, 2
        %2721 = vrot.lane.b32.xlu0 %v2720, 127
        %v2722 = vpop.permute.xlu0 %2721
        %v2724 = vadd.f32 %v2692, %v2722
        %s2725 = sld [smem:[#allocation9 + $0x110]]
        %v2726 = vstv %s2725
        %v2727 = vmul.f32 %v2726, %v2090
        %v2729 = vrot.slane %v2727, 2
        %2730 = vrot.lane.b32.xlu0 %v2729, 127
        %v2731 = vpop.permute.xlu0 %2730
        %v2733 = vadd.f32 %v2699, %v2731
        %s2734 = sld [smem:[#allocation9 + $0x190]]
        %v2735 = vstv %s2734
        %v2736 = vmul.f32 %v2735, %v2090
        %v2738 = vrot.slane %v2736, 2
        %2739 = vrot.lane.b32.xlu0 %v2738, 127
        %v2740 = vpop.permute.xlu0 %2739
        %v2742 = vadd.f32 %v2706, %v2740
        %s2743 = sld [smem:[#allocation9 + $0x11]]
        %v2744 = vstv %s2743
        %v2745 = vmul.f32 %v2744, %v2090
        %v2747 = vrot.slane %v2745, 2
        %2748 = vrot.lane.b32.xlu0 %v2747, 126
        %v2749 = vpop.permute.xlu0 %2748
        %v2751 = vadd.f32 %v2715, %v2749
        %s2752 = sld [smem:[#allocation9 + $0x91]]
        %v2753 = vstv %s2752
        %v2754 = vmul.f32 %v2753, %v2090
        %v2756 = vrot.slane %v2754, 2
        %2757 = vrot.lane.b32.xlu0 %v2756, 126
        %v2758 = vpop.permute.xlu0 %2757
        %v2760 = vadd.f32 %v2724, %v2758
        %s2761 = sld [smem:[#allocation9 + $0x111]]
        %v2762 = vstv %s2761
        %v2763 = vmul.f32 %v2762, %v2090
        %v2765 = vrot.slane %v2763, 2
        %2766 = vrot.lane.b32.xlu0 %v2765, 126
        %v2767 = vpop.permute.xlu0 %2766
        %v2769 = vadd.f32 %v2733, %v2767
        %s2770 = sld [smem:[#allocation9 + $0x191]]
        %v2771 = vstv %s2770
        %v2772 = vmul.f32 %v2771, %v2090
        %v2774 = vrot.slane %v2772, 2
        %2775 = vrot.lane.b32.xlu0 %v2774, 126
        %v2776 = vpop.permute.xlu0 %2775
        %v2778 = vadd.f32 %v2742, %v2776
        %s2779 = sld [smem:[#allocation9 + $0x12]]
        %v2780 = vstv %s2779
        %v2781 = vmul.f32 %v2780, %v2150
        %v2782 = vadd.f32 %v2751, %v2781
        %s2783 = sld [smem:[#allocation9 + $0x92]]
        %v2784 = vstv %s2783
        %v2785 = vmul.f32 %v2784, %v2150
        %v2786 = vadd.f32 %v2760, %v2785
        %s2787 = sld [smem:[#allocation9 + $0x112]]
        %v2788 = vstv %s2787
        %v2789 = vmul.f32 %v2788, %v2150
        %v2790 = vadd.f32 %v2769, %v2789
        %s2791 = sld [smem:[#allocation9 + $0x192]]
        %v2792 = vstv %s2791
        %v2793 = vmul.f32 %v2792, %v2150
        %v2794 = vadd.f32 %v2778, %v2793
        %s2795 = sld [smem:[#allocation9 + $0x13]]
        %v2796 = vstv %s2795
        %v2797 = vmul.f32 %v2796, %v2150
        %2799 = vrot.lane.b32.xlu0 %v2797, 127
        %v2800 = vpop.permute.xlu0 %2799
        %v2802 = vadd.f32 %v2782, %v2800
        %s2803 = sld [smem:[#allocation9 + $0x93]]
        %v2804 = vstv %s2803
        %v2805 = vmul.f32 %v2804, %v2150
        %2807 = vrot.lane.b32.xlu0 %v2805, 127
        %v2808 = vpop.permute.xlu0 %2807
        %v2810 = vadd.f32 %v2786, %v2808
        %s2811 = sld [smem:[#allocation9 + $0x113]]
        %v2812 = vstv %s2811
        %v2813 = vmul.f32 %v2812, %v2150
        %2815 = vrot.lane.b32.xlu0 %v2813, 127
        %v2816 = vpop.permute.xlu0 %2815
        %v2818 = vadd.f32 %v2790, %v2816
        %s2819 = sld [smem:[#allocation9 + $0x193]]
        %v2820 = vstv %s2819
        %v2821 = vmul.f32 %v2820, %v2150
        %2823 = vrot.lane.b32.xlu0 %v2821, 127
        %v2824 = vpop.permute.xlu0 %2823
        %v2826 = vadd.f32 %v2794, %v2824
        %s2827 = sld [smem:[#allocation9 + $0x14]]
        %v2828 = vstv %s2827
        %v2829 = vmul.f32 %v2828, %v2150
        %2831 = vrot.lane.b32.xlu0 %v2829, 126
        %v2832 = vpop.permute.xlu0 %2831
        %v2834 = vadd.f32 %v2802, %v2832
        %s2835 = sld [smem:[#allocation9 + $0x94]]
        %v2836 = vstv %s2835
        %v2837 = vmul.f32 %v2836, %v2150
        %2839 = vrot.lane.b32.xlu0 %v2837, 126
        %v2840 = vpop.permute.xlu0 %2839
        %v2842 = vadd.f32 %v2810, %v2840
        %s2843 = sld [smem:[#allocation9 + $0x114]]
        %v2844 = vstv %s2843
        %v2845 = vmul.f32 %v2844, %v2150
        %2847 = vrot.lane.b32.xlu0 %v2845, 126
        %v2848 = vpop.permute.xlu0 %2847
        %v2850 = vadd.f32 %v2818, %v2848
        %s2851 = sld [smem:[#allocation9 + $0x194]]
        %v2852 = vstv %s2851
        %v2853 = vmul.f32 %v2852, %v2150
        %2855 = vrot.lane.b32.xlu0 %v2853, 126
        %v2856 = vpop.permute.xlu0 %2855
        %v2858 = vadd.f32 %v2826, %v2856
        %s2859 = sld [smem:[#allocation9 + $0x15]]
        %v2860 = vstv %s2859
        %v2861 = vmul.f32 %v2860, %v2150
        %v2863 = vrot.slane %v2861, 1
        %v2865 = vadd.f32 %v2834, %v2863
        %s2866 = sld [smem:[#allocation9 + $0x95]]
        %v2867 = vstv %s2866
        %v2868 = vmul.f32 %v2867, %v2150
        %v2870 = vrot.slane %v2868, 1
        %v2872 = vadd.f32 %v2842, %v2870
        %s2873 = sld [smem:[#allocation9 + $0x115]]
        %v2874 = vstv %s2873
        %v2875 = vmul.f32 %v2874, %v2150
        %v2877 = vrot.slane %v2875, 1
        %v2879 = vadd.f32 %v2850, %v2877
        %s2880 = sld [smem:[#allocation9 + $0x195]]
        %v2881 = vstv %s2880
        %v2882 = vmul.f32 %v2881, %v2150
        %v2884 = vrot.slane %v2882, 1
        %v2886 = vadd.f32 %v2858, %v2884
        %s2887 = sld [smem:[#allocation9 + $0x16]]
        %v2888 = vstv %s2887
        %v2889 = vmul.f32 %v2888, %v2150
        %v2891 = vrot.slane %v2889, 1
        %2892 = vrot.lane.b32.xlu0 %v2891, 127
        %v2893 = vpop.permute.xlu0 %2892
        %v2895 = vadd.f32 %v2865, %v2893
        %s2896 = sld [smem:[#allocation9 + $0x96]]
        %v2897 = vstv %s2896
        %v2898 = vmul.f32 %v2897, %v2150
        %v2900 = vrot.slane %v2898, 1
        %2901 = vrot.lane.b32.xlu0 %v2900, 127
        %v2902 = vpop.permute.xlu0 %2901
        %v2904 = vadd.f32 %v2872, %v2902
        %s2905 = sld [smem:[#allocation9 + $0x116]]
        %v2906 = vstv %s2905
        %v2907 = vmul.f32 %v2906, %v2150
        %v2909 = vrot.slane %v2907, 1
        %2910 = vrot.lane.b32.xlu0 %v2909, 127
        %v2911 = vpop.permute.xlu0 %2910
        %v2913 = vadd.f32 %v2879, %v2911
        %s2914 = sld [smem:[#allocation9 + $0x196]]
        %v2915 = vstv %s2914
        %v2916 = vmul.f32 %v2915, %v2150
        %v2918 = vrot.slane %v2916, 1
        %2919 = vrot.lane.b32.xlu0 %v2918, 127
        %v2920 = vpop.permute.xlu0 %2919
        %v2922 = vadd.f32 %v2886, %v2920
        %s2923 = sld [smem:[#allocation9 + $0x17]]
        %v2924 = vstv %s2923
        %v2925 = vmul.f32 %v2924, %v2150
        %v2927 = vrot.slane %v2925, 1
        %2928 = vrot.lane.b32.xlu0 %v2927, 126
        %v2929 = vpop.permute.xlu0 %2928
        %v2931 = vadd.f32 %v2895, %v2929
        %s2932 = sld [smem:[#allocation9 + $0x97]]
        %v2933 = vstv %s2932
        %v2934 = vmul.f32 %v2933, %v2150
        %v2936 = vrot.slane %v2934, 1
        %2937 = vrot.lane.b32.xlu0 %v2936, 126
        %v2938 = vpop.permute.xlu0 %2937
        %v2940 = vadd.f32 %v2904, %v2938
        %s2941 = sld [smem:[#allocation9 + $0x117]]
        %v2942 = vstv %s2941
        %v2943 = vmul.f32 %v2942, %v2150
        %v2945 = vrot.slane %v2943, 1
        %2946 = vrot.lane.b32.xlu0 %v2945, 126
        %v2947 = vpop.permute.xlu0 %2946
        %v2949 = vadd.f32 %v2913, %v2947
        %s2950 = sld [smem:[#allocation9 + $0x197]]
        %v2951 = vstv %s2950
        %v2952 = vmul.f32 %v2951, %v2150
        %v2954 = vrot.slane %v2952, 1
        %2955 = vrot.lane.b32.xlu0 %v2954, 126
        %v2956 = vpop.permute.xlu0 %2955
        %v2958 = vadd.f32 %v2922, %v2956
        %s2959 = sld [smem:[#allocation9 + $0x18]]
        %v2960 = vstv %s2959
        %v2961 = vmul.f32 %v2960, %v2150
        %v2963 = vrot.slane %v2961, 2
        %v2965 = vadd.f32 %v2931, %v2963
        %s2966 = sld [smem:[#allocation9 + $0x98]]
        %v2967 = vstv %s2966
        %v2968 = vmul.f32 %v2967, %v2150
        %v2970 = vrot.slane %v2968, 2
        %v2972 = vadd.f32 %v2940, %v2970
        %s2973 = sld [smem:[#allocation9 + $0x118]]
        %v2974 = vstv %s2973
        %v2975 = vmul.f32 %v2974, %v2150
        %v2977 = vrot.slane %v2975, 2
        %v2979 = vadd.f32 %v2949, %v2977
        %s2980 = sld [smem:[#allocation9 + $0x198]]
        %v2981 = vstv %s2980
        %v2982 = vmul.f32 %v2981, %v2150
        %v2984 = vrot.slane %v2982, 2
        %v2986 = vadd.f32 %v2958, %v2984
        %s2987 = sld [smem:[#allocation9 + $0x19]]
        %v2988 = vstv %s2987
        %v2989 = vmul.f32 %v2988, %v2150
        %v2991 = vrot.slane %v2989, 2
        %2992 = vrot.lane.b32.xlu0 %v2991, 127
        %v2993 = vpop.permute.xlu0 %2992
        %v2995 = vadd.f32 %v2965, %v2993
        %s2996 = sld [smem:[#allocation9 + $0x99]]
        %v2997 = vstv %s2996
        %v2998 = vmul.f32 %v2997, %v2150
        %v3000 = vrot.slane %v2998, 2
        %3001 = vrot.lane.b32.xlu0 %v3000, 127
        %v3002 = vpop.permute.xlu0 %3001
        %v3004 = vadd.f32 %v2972, %v3002
        %s3005 = sld [smem:[#allocation9 + $0x119]]
        %v3006 = vstv %s3005
        %v3007 = vmul.f32 %v3006, %v2150
        %v3009 = vrot.slane %v3007, 2
        %3010 = vrot.lane.b32.xlu0 %v3009, 127
        %v3011 = vpop.permute.xlu0 %3010
        %v3013 = vadd.f32 %v2979, %v3011
        %s3014 = sld [smem:[#allocation9 + $0x199]]
        %v3015 = vstv %s3014
        %v3016 = vmul.f32 %v3015, %v2150
        %v3018 = vrot.slane %v3016, 2
        %3019 = vrot.lane.b32.xlu0 %v3018, 127
        %v3020 = vpop.permute.xlu0 %3019
        %v3022 = vadd.f32 %v2986, %v3020
        %s3023 = sld [smem:[#allocation9 + $0x1a]]
        %v3024 = vstv %s3023
        %v3025 = vmul.f32 %v3024, %v2150
        %v3027 = vrot.slane %v3025, 2
        %3028 = vrot.lane.b32.xlu0 %v3027, 126
        %v3029 = vpop.permute.xlu0 %3028
        %v3031 = vadd.f32 %v2995, %v3029
        %s3032 = sld [smem:[#allocation9 + $0x9a]]
        %v3033 = vstv %s3032
        %v3034 = vmul.f32 %v3033, %v2150
        %v3036 = vrot.slane %v3034, 2
        %3037 = vrot.lane.b32.xlu0 %v3036, 126
        %v3038 = vpop.permute.xlu0 %3037
        %v3040 = vadd.f32 %v3004, %v3038
        %s3041 = sld [smem:[#allocation9 + $0x11a]]
        %v3042 = vstv %s3041
        %v3043 = vmul.f32 %v3042, %v2150
        %v3045 = vrot.slane %v3043, 2
        %3046 = vrot.lane.b32.xlu0 %v3045, 126
        %v3047 = vpop.permute.xlu0 %3046
        %v3049 = vadd.f32 %v3013, %v3047
        %s3050 = sld [smem:[#allocation9 + $0x19a]]
        %v3051 = vstv %s3050
        %v3052 = vmul.f32 %v3051, %v2150
        %v3054 = vrot.slane %v3052, 2
        %3055 = vrot.lane.b32.xlu0 %v3054, 126
        %v3056 = vpop.permute.xlu0 %3055
        %v3058 = vadd.f32 %v3022, %v3056
        %s3059 = sld [smem:[#allocation9 + $0x1b]]
        %v3060 = vstv %s3059
        %v3061 = vmul.f32 %v3060, %v2210
        %v3062 = vadd.f32 %v3031, %v3061
        %s3063 = sld [smem:[#allocation9 + $0x9b]]
        %v3064 = vstv %s3063
        %v3065 = vmul.f32 %v3064, %v2210
        %v3066 = vadd.f32 %v3040, %v3065
        %s3067 = sld [smem:[#allocation9 + $0x11b]]
        %v3068 = vstv %s3067
        %v3069 = vmul.f32 %v3068, %v2210
        %v3070 = vadd.f32 %v3049, %v3069
        %s3071 = sld [smem:[#allocation9 + $0x19b]]
        %v3072 = vstv %s3071
        %v3073 = vmul.f32 %v3072, %v2210
        %v3074 = vadd.f32 %v3058, %v3073
        %s3075 = sld [smem:[#allocation9 + $0x1c]]
        %v3076 = vstv %s3075
        %v3077 = vmul.f32 %v3076, %v2210
        %3079 = vrot.lane.b32.xlu0 %v3077, 127
        %v3080 = vpop.permute.xlu0 %3079
        %v3082 = vadd.f32 %v3062, %v3080
        %s3083 = sld [smem:[#allocation9 + $0x9c]]
        %v3084 = vstv %s3083
        %v3085 = vmul.f32 %v3084, %v2210
        %3087 = vrot.lane.b32.xlu0 %v3085, 127
        %v3088 = vpop.permute.xlu0 %3087
        %v3090 = vadd.f32 %v3066, %v3088
        %s3091 = sld [smem:[#allocation9 + $0x11c]]
        %v3092 = vstv %s3091
        %v3093 = vmul.f32 %v3092, %v2210
        %3095 = vrot.lane.b32.xlu0 %v3093, 127
        %v3096 = vpop.permute.xlu0 %3095
        %v3098 = vadd.f32 %v3070, %v3096
        %s3099 = sld [smem:[#allocation9 + $0x19c]]
        %v3100 = vstv %s3099
        %v3101 = vmul.f32 %v3100, %v2210
        %3103 = vrot.lane.b32.xlu0 %v3101, 127
        %v3104 = vpop.permute.xlu0 %3103
        %v3106 = vadd.f32 %v3074, %v3104
        %s3107 = sld [smem:[#allocation9 + $0x1d]]
        %v3108 = vstv %s3107
        %v3109 = vmul.f32 %v3108, %v2210
        %3111 = vrot.lane.b32.xlu0 %v3109, 126
        %v3112 = vpop.permute.xlu0 %3111
        %v3114 = vadd.f32 %v3082, %v3112
        %s3115 = sld [smem:[#allocation9 + $0x9d]]
        %v3116 = vstv %s3115
        %v3117 = vmul.f32 %v3116, %v2210
        %3119 = vrot.lane.b32.xlu0 %v3117, 126
        %v3120 = vpop.permute.xlu0 %3119
        %v3122 = vadd.f32 %v3090, %v3120
        %s3123 = sld [smem:[#allocation9 + $0x11d]]
        %v3124 = vstv %s3123
        %v3125 = vmul.f32 %v3124, %v2210
        %3127 = vrot.lane.b32.xlu0 %v3125, 126
        %v3128 = vpop.permute.xlu0 %3127
        %v3130 = vadd.f32 %v3098, %v3128
        %s3131 = sld [smem:[#allocation9 + $0x19d]]
        %v3132 = vstv %s3131
        %v3133 = vmul.f32 %v3132, %v2210
        %3135 = vrot.lane.b32.xlu0 %v3133, 126
        %v3136 = vpop.permute.xlu0 %3135
        %v3138 = vadd.f32 %v3106, %v3136
        %s3139 = sld [smem:[#allocation9 + $0x1e]]
        %v3140 = vstv %s3139
        %v3141 = vmul.f32 %v3140, %v2210
        %v3143 = vrot.slane %v3141, 1
        %v3145 = vadd.f32 %v3114, %v3143
        %s3146 = sld [smem:[#allocation9 + $0x9e]]
        %v3147 = vstv %s3146
        %v3148 = vmul.f32 %v3147, %v2210
        %v3150 = vrot.slane %v3148, 1
        %v3152 = vadd.f32 %v3122, %v3150
        %s3153 = sld [smem:[#allocation9 + $0x11e]]
        %v3154 = vstv %s3153
        %v3155 = vmul.f32 %v3154, %v2210
        %v3157 = vrot.slane %v3155, 1
        %v3159 = vadd.f32 %v3130, %v3157
        %s3160 = sld [smem:[#allocation9 + $0x19e]]
        %v3161 = vstv %s3160
        %v3162 = vmul.f32 %v3161, %v2210
        %v3164 = vrot.slane %v3162, 1
        %v3166 = vadd.f32 %v3138, %v3164
        %s3167 = sld [smem:[#allocation9 + $0x1f]]
        %v3168 = vstv %s3167
        %v3169 = vmul.f32 %v3168, %v2210
        %v3171 = vrot.slane %v3169, 1
        %3172 = vrot.lane.b32.xlu0 %v3171, 127
        %v3173 = vpop.permute.xlu0 %3172
        %v3175 = vadd.f32 %v3145, %v3173
        %s3176 = sld [smem:[#allocation9 + $0x9f]]
        %v3177 = vstv %s3176
        %v3178 = vmul.f32 %v3177, %v2210
        %v3180 = vrot.slane %v3178, 1
        %3181 = vrot.lane.b32.xlu0 %v3180, 127
        %v3182 = vpop.permute.xlu0 %3181
        %v3184 = vadd.f32 %v3152, %v3182
        %s3185 = sld [smem:[#allocation9 + $0x11f]]
        %v3186 = vstv %s3185
        %v3187 = vmul.f32 %v3186, %v2210
        %v3189 = vrot.slane %v3187, 1
        %3190 = vrot.lane.b32.xlu0 %v3189, 127
        %v3191 = vpop.permute.xlu0 %3190
        %v3193 = vadd.f32 %v3159, %v3191
        %s3194 = sld [smem:[#allocation9 + $0x19f]]
        %v3195 = vstv %s3194
        %v3196 = vmul.f32 %v3195, %v2210
        %v3198 = vrot.slane %v3196, 1
        %3199 = vrot.lane.b32.xlu0 %v3198, 127
        %v3200 = vpop.permute.xlu0 %3199
        %v3202 = vadd.f32 %v3166, %v3200
        %s3203 = sld [smem:[#allocation9 + $0x20]]
        %v3204 = vstv %s3203
        %v3205 = vmul.f32 %v3204, %v2210
        %v3207 = vrot.slane %v3205, 1
        %3208 = vrot.lane.b32.xlu0 %v3207, 126
        %v3209 = vpop.permute.xlu0 %3208
        %v3211 = vadd.f32 %v3175, %v3209
        %s3212 = sld [smem:[#allocation9 + $0xa0]]
        %v3213 = vstv %s3212
        %v3214 = vmul.f32 %v3213, %v2210
        %v3216 = vrot.slane %v3214, 1
        %3217 = vrot.lane.b32.xlu0 %v3216, 126
        %v3218 = vpop.permute.xlu0 %3217
        %v3220 = vadd.f32 %v3184, %v3218
        %s3221 = sld [smem:[#allocation9 + $0x120]]
        %v3222 = vstv %s3221
        %v3223 = vmul.f32 %v3222, %v2210
        %v3225 = vrot.slane %v3223, 1
        %3226 = vrot.lane.b32.xlu0 %v3225, 126
        %v3227 = vpop.permute.xlu0 %3226
        %v3229 = vadd.f32 %v3193, %v3227
        %s3230 = sld [smem:[#allocation9 + $0x1a0]]
        %v3231 = vstv %s3230
        %v3232 = vmul.f32 %v3231, %v2210
        %v3234 = vrot.slane %v3232, 1
        %3235 = vrot.lane.b32.xlu0 %v3234, 126
        %v3236 = vpop.permute.xlu0 %3235
        %v3238 = vadd.f32 %v3202, %v3236
        %s3239 = sld [smem:[#allocation9 + $0x21]]
        %v3240 = vstv %s3239
        %v3241 = vmul.f32 %v3240, %v2210
        %v3243 = vrot.slane %v3241, 2
        %v3245 = vadd.f32 %v3211, %v3243
        %s3246 = sld [smem:[#allocation9 + $0xa1]]
        %v3247 = vstv %s3246
        %v3248 = vmul.f32 %v3247, %v2210
        %v3250 = vrot.slane %v3248, 2
        %v3252 = vadd.f32 %v3220, %v3250
        %s3253 = sld [smem:[#allocation9 + $0x121]]
        %v3254 = vstv %s3253
        %v3255 = vmul.f32 %v3254, %v2210
        %v3257 = vrot.slane %v3255, 2
        %v3259 = vadd.f32 %v3229, %v3257
        %s3260 = sld [smem:[#allocation9 + $0x1a1]]
        %v3261 = vstv %s3260
        %v3262 = vmul.f32 %v3261, %v2210
        %v3264 = vrot.slane %v3262, 2
        %v3266 = vadd.f32 %v3238, %v3264
        %s3267 = sld [smem:[#allocation9 + $0x22]]
        %v3268 = vstv %s3267
        %v3269 = vmul.f32 %v3268, %v2210
        %v3271 = vrot.slane %v3269, 2
        %3272 = vrot.lane.b32.xlu0 %v3271, 127
        %v3273 = vpop.permute.xlu0 %3272
        %v3275 = vadd.f32 %v3245, %v3273
        %s3276 = sld [smem:[#allocation9 + $0xa2]]
        %v3277 = vstv %s3276
        %v3278 = vmul.f32 %v3277, %v2210
        %v3280 = vrot.slane %v3278, 2
        %3281 = vrot.lane.b32.xlu0 %v3280, 127
        %v3282 = vpop.permute.xlu0 %3281
        %v3284 = vadd.f32 %v3252, %v3282
        %s3285 = sld [smem:[#allocation9 + $0x122]]
        %v3286 = vstv %s3285
        %v3287 = vmul.f32 %v3286, %v2210
        %v3289 = vrot.slane %v3287, 2
        %3290 = vrot.lane.b32.xlu0 %v3289, 127
        %v3291 = vpop.permute.xlu0 %3290
        %v3293 = vadd.f32 %v3259, %v3291
        %s3294 = sld [smem:[#allocation9 + $0x1a2]]
        %v3295 = vstv %s3294
        %v3296 = vmul.f32 %v3295, %v2210
        %v3298 = vrot.slane %v3296, 2
        %3299 = vrot.lane.b32.xlu0 %v3298, 127
        %v3300 = vpop.permute.xlu0 %3299
        %v3302 = vadd.f32 %v3266, %v3300
        %s3303 = sld [smem:[#allocation9 + $0x23]]
        %v3304 = vstv %s3303
        %v3305 = vmul.f32 %v3304, %v2210
        %v3307 = vrot.slane %v3305, 2
        %3308 = vrot.lane.b32.xlu0 %v3307, 126
        %v3309 = vpop.permute.xlu0 %3308
        %v3311 = vadd.f32 %v3275, %v3309
        %s3312 = sld [smem:[#allocation9 + $0xa3]]
        %v3313 = vstv %s3312
        %v3314 = vmul.f32 %v3313, %v2210
        %v3316 = vrot.slane %v3314, 2
        %3317 = vrot.lane.b32.xlu0 %v3316, 126
        %v3318 = vpop.permute.xlu0 %3317
        %v3320 = vadd.f32 %v3284, %v3318
        %s3321 = sld [smem:[#allocation9 + $0x123]]
        %v3322 = vstv %s3321
        %v3323 = vmul.f32 %v3322, %v2210
        %v3325 = vrot.slane %v3323, 2
        %3326 = vrot.lane.b32.xlu0 %v3325, 126
        %v3327 = vpop.permute.xlu0 %3326
        %v3329 = vadd.f32 %v3293, %v3327
        %s3330 = sld [smem:[#allocation9 + $0x1a3]]
        %v3331 = vstv %s3330
        %v3332 = vmul.f32 %v3331, %v2210
        %v3334 = vrot.slane %v3332, 2
        %3335 = vrot.lane.b32.xlu0 %v3334, 126
        %v3336 = vpop.permute.xlu0 %3335
        %v3338 = vadd.f32 %v3302, %v3336
        %v3339 = vmax.f32 %v3311, 0.0
        %v3341 = vrot.slane %v3339, 1
        %v3343 = vmax.f32 %v3339, %v3341
        %v3344 = vrot.slane %v3339, 2
        %v3346 = vmax.f32 %v3343, %v3344
        %v3347 = vrot.slane %v3339, 3
        %v3349 = vmax.f32 %v3346, %v3347
        %v3350 = vrot.slane %v3339, 4
        %v3352 = vmax.f32 %v3349, %v3350
        %v3353 = vmax.f32 %v3320, 0.0
        %v3355 = vrot.slane %v3353, 1
        %v3357 = vmax.f32 %v3353, %v3355
        %v3358 = vrot.slane %v3353, 2
        %v3360 = vmax.f32 %v3357, %v3358
        %v3361 = vrot.slane %v3353, 3
        %v3363 = vmax.f32 %v3360, %v3361
        %v3364 = vrot.slane %v3353, 4
        %v3366 = vmax.f32 %v3363, %v3364
        %v3367 = vmax.f32 %v3352, %v3366
        %v3368 = vmax.f32 %v3329, 0.0
        %v3370 = vrot.slane %v3368, 1
        %v3372 = vmax.f32 %v3368, %v3370
        %v3373 = vrot.slane %v3368, 2
        %v3375 = vmax.f32 %v3372, %v3373
        %v3376 = vrot.slane %v3368, 3
        %v3378 = vmax.f32 %v3375, %v3376
        %v3379 = vrot.slane %v3368, 4
        %v3381 = vmax.f32 %v3378, %v3379
        %v3382 = vmax.f32 %v3367, %v3381
        %v3383 = vmax.f32 %v3338, 0.0
        %v3385 = vrot.slane %v3383, 1
        %v3387 = vmax.f32 %v3383, %v3385
        %v3388 = vrot.slane %v3383, 2
        %v3390 = vmax.f32 %v3387, %v3388
        %v3391 = vrot.slane %v3383, 3
        %v3393 = vmax.f32 %v3390, %v3391
        %v3394 = vrot.slane %v3383, 4
        %v3396 = vmax.f32 %v3393, %v3394
        %v3397 = vmax.f32 %v3382, %v3396
        %3399 = vrot.lane.b32.xlu0 %v3397, 127
        %v3400 = vpop.permute.xlu0 %3399
        %v3402 = vmax.f32 %v3397, %v3400
        %v3403 = vsel %vm2021, %v3402, %v3402
        %v3404 = vsel %vm2023, %v3403, %v3402
        %vm3405 = vcmask 24576
        %3406 = vst.msk [vmem:[%s291] sm:$0x1] %vm3405, %v3404
        %s3407 = sand.u32 %s143, 1
        %s3408 = scalar_lea.sflag [#allocation4], %s3407
        %s3409 = sand.u32 %s143, 1
        %s3410 = scalar_lea.vmem [#allocation12], %s3409
        // Predicated region
        $region61: #{tpu_custom_call.1} parent=39 // pred_check
          %p3411 = pneg %p153
        $region62: #{tpu_custom_call.1} parent=39 // pred_check_branch
          %3413 = sbr.rel (%p3411) target = $region64
        $region63: #{tpu_custom_call.1} parent=39 // pred_region
          %s3415 = ssub.s32 16, 16
          %3416 = vsyncadd %s3408, %s3415
          %s3417 = smul.addr %s25, 16
          %s3418 = scalar_lea.hbm %s5, %s3417
          %s3420 = sshll.u32 %s3410, 4
          %s3421 = int_to_ptr.vmem [resolvable:$true] %s3420
          %3423 = dma.vmem_to_hbm [thread:$0]  %s3421, 16, %s3418, %s3408
        $region64: #{tpu_custom_call.1} parent=39 // pred_fallthru
          _
      $region40: #{tpu_custom_call.1} parent=5 // pred_fallthru
        _
      %p3424 = scmp.le.s32.totalorder 2, %s20
      // Predicated region
      $region65: #{tpu_custom_call.1} parent=5 // pred_check
        %p3425 = pneg %p3424
      $region66: #{tpu_custom_call.1} parent=5 // pred_check_branch
        %3427 = sbr.rel (%p3425) target = $region68
      $region67: #{tpu_custom_call.1} parent=5 // pred_region
        %s3428 = ssub.s32 %s20, 2
        // Predicated region
        $region69: #{tpu_custom_call.1} parent=67 // pred_check
          %p3429 = pneg %p159
        $region70: #{tpu_custom_call.1} parent=67 // pred_check_branch
          %3431 = sbr.rel (%p3429) target = $region72
        $region71: #{tpu_custom_call.1} parent=67 // pred_region
          %s3432 = sand.u32 %s144, 1
          %s3433 = scalar_lea.sflag [#allocation4], %s3432
          %s3434 = sand.u32 %s144, 1
          %s3435 = scalar_lea.vmem [#allocation12], %s3434
          %3436 = dma.done %s3433, 16
        $region72: #{tpu_custom_call.1} parent=67 // pred_fallthru
          _
      $region68: #{tpu_custom_call.1} parent=5 // pred_fallthru
        _
    $region6: #{tpu_custom_call.1} parent=1 // loop_footer
      %s24 = sadd.s32 1, %s20
    $region7: #{tpu_custom_call.1} parent=1 // loop_footer_branch
      %19 = sbr.rel target = $region3
    $region8: #{tpu_custom_call.1} parent=1 // loop_exit
      _
    %3437 = vsyncpa [#allocation3], 1
    %s3438 = scalar_lea.sflag [#allocation3], 1
    %3439 = vsyncpa %s3438, 1
    %3440 = vsyncpa [#allocation4], 1
    %s3441 = scalar_lea.sflag [#allocation4], 1
    %3442 = vsyncpa %s3441, 1
    %3443 = vsyncpa [#allocation5], 1
    %s3444 = scalar_lea.sflag [#allocation5], 1
    %3445 = vsyncpa %s3444, 1
    %3446 = vsyncpa [#allocation6], 1
    %s3447 = scalar_lea.sflag [#allocation6], 1
    %3448 = vsyncpa %s3447, 1
    %3449 = vsyncpa [#allocation10], 1

</llo_original>
